<compile_context>
chip_gen: v7x
topology: tpu7x:2x2x1
jax: 0.10.0
libtpu: 0.0.40
codegen_flags: <defaults>
</compile_context>

<pallas_src>
import jax
import jax.numpy as jnp
from jax.experimental import pallas as pl
from jax.experimental.pallas import tpu as pltpu

D_IN, D_IN_PAD = 1000, 1024          # lane-pad 1000 -> 1024 (multiple of 128)
D_HID, D_FC1, D_FC2 = 512, 72, 6
D_OUT, D_OUT_PAD = 2, 128            # lane-dense logits slab, slice [:, :2]
TB = 256                             # batch tile: 256 for v6e/v7x MXU height
                                     # (128 would also fully fill v5e's MXU)


def _head_kernel(x_ref, wre_ref, bre_ref, w1_ref, b1_ref, w2_ref, b2_ref,
                 w3_ref, b3_ref, feat_ref, gate_ref, logits_ref):
    # `reshape` module: Linear(1000 -> 512).  bf16 operands, f32 MXU accumulate.
    h = jnp.dot(x_ref[...], wre_ref[...],
                preferred_element_type=jnp.float32) + bre_ref[...]
    feat_ref[...] = h                                     # (TB, 512) f32
    # `sigmoid` module (EUP transcendental).
    gate_ref[...] = jax.nn.sigmoid(h)                     # (TB, 512) f32
    # `fc` module: Dropout(eval=identity) -> Linear(512,72) -> ReLU
    #              -> Dropout(eval=identity) -> Linear(72,6) -> ReLU
    #              -> Linear(6,2)  (final weight lane-padded to 128 wide).
    # TODO(synk): Classifier.forward never wires re*/sig*/fc together, so
    # whether fc consumes h or sigmoid(h) is unspecified; h is used here.
    a = jnp.maximum(
        jnp.dot(h, w1_ref[...], preferred_element_type=jnp.float32)
        + b1_ref[...], 0.0)
    b = jnp.maximum(
        jnp.dot(a, w2_ref[...], preferred_element_type=jnp.float32)
        + b2_ref[...], 0.0)
    logits_ref[...] = (
        jnp.dot(b, w3_ref[...], preferred_element_type=jnp.float32)
        + b3_ref[...])                                    # (TB, 128), cols 0..1 valid


def classifier_head(x, params, *, tb=TB):
    """x: (B, 1000) f32 -> (feat (B,512), sigmoid(feat) (B,512), logits (B,2))."""
    B = x.shape[0]
    wre, bre, w1, b1, w2, b2, w3, b3 = params

    num_tiles = pl.cdiv(B, tb)
    bp = num_tiles * tb

    # One-time host-side layout prep: batch-pad to tb, lane-pad D_IN -> 1024
    # and logits 2 -> 128, cast HBM-dominant tensors to bf16.
    xp = jnp.pad(x.astype(jnp.bfloat16),
                 ((0, bp - B), (0, D_IN_PAD - D_IN)))
    wre_p = jnp.pad(wre.astype(jnp.bfloat16),
                    ((0, D_IN_PAD - D_IN), (0, 0)))
    w3_p = jnp.pad(w3, ((0, 0), (0, D_OUT_PAD - D_OUT)))
    b3_p = jnp.pad(b3, ((0, 0), (0, D_OUT_PAD - D_OUT)))

    def wspec(shape):
        # whole-array weight block, constant index across the batch grid
        return pl.BlockSpec(shape, lambda i: (0, 0))

    flops = 2 * bp * (D_IN_PAD * D_HID + D_HID * D_FC1
                      + D_FC1 * D_FC2 + D_FC2 * D_OUT_PAD)
    bytes_accessed = (
        xp.size * 2 + wre_p.size * 2                       # bf16 inputs
        + (bre.size + w1.size + b1.size + w2.size + b2.size
           + w3_p.size + b3_p.size) * 4                    # f32 weights/biases
        + bp * D_HID * 4 * 2 + bp * D_OUT_PAD * 4)         # f32 outputs

    feat, gate, logits = pl.pallas_call(
        _head_kernel,
        out_shape=(
            jax.ShapeDtypeStruct((bp, D_HID), jnp.float32),
            jax.ShapeDtypeStruct((bp, D_HID), jnp.float32),
            jax.ShapeDtypeStruct((bp, D_OUT_PAD), jnp.float32),
        ),
        grid_spec=pltpu.PrefetchScalarGridSpec(
            num_scalar_prefetch=0,
            grid=(num_tiles,),
            in_specs=[
                pl.BlockSpec((tb, D_IN_PAD), lambda i: (i, 0)),  # x, batch-tiled
                wspec((D_IN_PAD, D_HID)), wspec((1, D_HID)),     # reshape W, b
                wspec((D_HID, D_FC1)), wspec((1, D_FC1)),        # fc Linear(512,72)
                wspec((D_FC1, D_FC2)), wspec((1, D_FC2)),        # fc Linear(72,6)
                wspec((D_FC2, D_OUT_PAD)), wspec((1, D_OUT_PAD)),  # fc Linear(6,2) padded
            ],
            out_specs=[
                pl.BlockSpec((tb, D_HID), lambda i: (i, 0)),
                pl.BlockSpec((tb, D_HID), lambda i: (i, 0)),
                pl.BlockSpec((tb, D_OUT_PAD), lambda i: (i, 0)),
            ],
        ),
        compiler_params=pltpu.CompilerParams(
            dimension_semantics=("parallel",)),   # independent batch tiles;
                                                  # lets v7x megacore split them
        cost_estimate=pl.CostEstimate(
            flops=int(flops),
            transcendentals=int(bp * D_HID),
            bytes_accessed=int(bytes_accessed)),
    )(xp, wre_p, bre, w1, b1, w2, b2, w3_p, b3_p)

    return feat[:B], gate[:B], logits[:B, :D_OUT]


def head_reference(x, params):
    """Pure-JAX reference with the same bf16 cast on the dominant matmul."""
    wre, bre, w1, b1, w2, b2, w3, b3 = params
    h = jnp.dot(x.astype(jnp.bfloat16), wre.astype(jnp.bfloat16),
                preferred_element_type=jnp.float32) + bre
    gate = jax.nn.sigmoid(h)
    a = jnp.maximum(jnp.dot(h, w1) + b1, 0.0)
    b = jnp.maximum(jnp.dot(a, w2) + b2, 0.0)
    logits = jnp.dot(b, w3) + b3
    return h, gate, logits


def init_linear(key, fan_in, fan_out):
    """PyTorch nn.Linear default init, weight pre-transposed to (in, out)."""
    kw, kb = jax.random.split(key)
    bound = 1.0 / float(fan_in) ** 0.5
    w = jax.random.uniform(kw, (fan_in, fan_out), jnp.float32, -bound, bound)
    b = jax.random.uniform(kb, (1, fan_out), jnp.float32, -bound, bound)
    return w, b


if __name__ == "__main__":
    key = jax.random.PRNGKey(0)
    k_img, k_x, k_re, k1, k2, k3 = jax.random.split(key, 6)

    B = 8
    # Images the full Classifier forward consumes (NCHW, as in PyTorch).
    # TODO(synk): resnet34 (encoder_img) and FusionTransformer (fusion) bodies
    # are not provided in the source, so only the defined submodules
    # (reshape -> sigmoid -> fc) are implemented in Pallas.
    img1 = jax.random.normal(k_img, (2, 3, 16, 16), jnp.float32)
    img2 = img1 + 1.0
    img3 = img1 - 1.0
    del img1, img2, img3  # shape documentation only; encoder is undefined

    # 1000-d per-sample vector (the input the `reshape` Linear(1000,512) expects).
    x = jax.random.normal(k_x, (B, D_IN), jnp.float32)

    params = (*init_linear(k_re, D_IN, D_HID),    # reshape (re1)
              *init_linear(k1, D_HID, D_FC1),     # fc.Linear(512, 72)
              *init_linear(k2, D_FC1, D_FC2),     # fc.Linear(72, 6)
              *init_linear(k3, D_FC2, D_OUT))     # fc.Linear(6, 2)

    feat, gate, logits = classifier_head(x, params)
    jax.block_until_ready((feat, gate, logits))

    assert feat.shape == (B, D_HID)
    assert gate.shape == (B, D_HID)
    assert logits.shape == (B, D_OUT)

    feat_r, gate_r, logits_r = head_reference(x, params)
    assert jnp.allclose(feat, feat_r, rtol=1e-2, atol=1e-2)
    assert jnp.allclose(gate, gate_r, rtol=1e-2, atol=1e-2)
    assert jnp.allclose(logits, logits_r, rtol=1e-2, atol=1e-2)

    print("KERNEL_OK")
</pallas_src>

<mosaic_0001>
module attributes {stable_mosaic.version = 11 : i64} {
  func.func @_head_kernel(%arg0: i32, %arg1: memref<256x1024xbf16, #tpu.memory_space<vmem>>, %arg2: memref<1024x512xbf16, #tpu.memory_space<vmem>>, %arg3: memref<1x512xf32, #tpu.memory_space<vmem>>, %arg4: memref<512x72xf32, #tpu.memory_space<vmem>>, %arg5: memref<1x72xf32, #tpu.memory_space<vmem>>, %arg6: memref<72x6xf32, #tpu.memory_space<vmem>>, %arg7: memref<1x6xf32, #tpu.memory_space<vmem>>, %arg8: memref<6x128xf32, #tpu.memory_space<vmem>>, %arg9: memref<1x128xf32, #tpu.memory_space<vmem>>, %arg10: memref<256x512xf32, #tpu.memory_space<vmem>>, %arg11: memref<256x512xf32, #tpu.memory_space<vmem>>, %arg12: memref<256x128xf32, #tpu.memory_space<vmem>>) attributes {dimension_semantics = [#tpu.dimension_semantics<parallel>], iteration_bounds = array<i64: 1>, scalar_prefetch = 0 : i64, scratch_operands = 0 : i64, tpu.core_type = #tpu.core_type<tc>, window_params = [{transform_indices = @transform_0, window_bounds = array<i64: 256, 1024>}, {pipeline_mode = #tpu.pipeline_mode<synchronous>, transform_indices = @transform_1, window_bounds = array<i64: 1024, 512>}, {pipeline_mode = #tpu.pipeline_mode<synchronous>, transform_indices = @transform_2, window_bounds = array<i64: 1, 512>}, {pipeline_mode = #tpu.pipeline_mode<synchronous>, transform_indices = @transform_3, window_bounds = array<i64: 512, 72>}, {pipeline_mode = #tpu.pipeline_mode<synchronous>, transform_indices = @transform_4, window_bounds = array<i64: 1, 72>}, {pipeline_mode = #tpu.pipeline_mode<synchronous>, transform_indices = @transform_5, window_bounds = array<i64: 72, 6>}, {pipeline_mode = #tpu.pipeline_mode<synchronous>, transform_indices = @transform_6, window_bounds = array<i64: 1, 6>}, {pipeline_mode = #tpu.pipeline_mode<synchronous>, transform_indices = @transform_7, window_bounds = array<i64: 6, 128>}, {pipeline_mode = #tpu.pipeline_mode<synchronous>, transform_indices = @transform_8, window_bounds = array<i64: 1, 128>}, {transform_indices = @transform_9, window_bounds = array<i64: 256, 512>}, {transform_indices = @transform_10, window_bounds = array<i64: 256, 512>}, {transform_indices = @transform_11, window_bounds = array<i64: 256, 128>}]} {
    %c0 = arith.constant 0 : index
    %c0_0 = arith.constant 0 : index
    %0 = vector.load %arg1[%c0, %c0_0] : memref<256x1024xbf16, #tpu.memory_space<vmem>>, vector<256x1024xbf16>
    %c0_1 = arith.constant 0 : index
    %c0_2 = arith.constant 0 : index
    %1 = vector.load %arg2[%c0_1, %c0_2] : memref<1024x512xbf16, #tpu.memory_space<vmem>>, vector<1024x512xbf16>
    %cst = arith.constant dense<0.000000e+00> : vector<256x512xf32>
    %2 = tpu.matmul %0, %1, %cst {dimension_numbers = #tpu.dot_dimension_numbers<[1], [0], [0], [1], [0, 0, 1, 1], [], []>} : vector<256x1024xbf16>, vector<1024x512xbf16>, vector<256x512xf32> -> vector<256x512xf32>
    %c0_3 = arith.constant 0 : index
    %c0_4 = arith.constant 0 : index
    %3 = vector.load %arg3[%c0_3, %c0_4] : memref<1x512xf32, #tpu.memory_space<vmem>>, vector<1x512xf32>
    %4 = vector.broadcast %3 : vector<1x512xf32> to vector<256x512xf32>
    %5 = arith.addf %2, %4 : vector<256x512xf32>
    %c0_5 = arith.constant 0 : index
    %c0_6 = arith.constant 0 : index
    %6 = vector.load %arg10[%c0_5, %c0_6] : memref<256x512xf32, #tpu.memory_space<vmem>>, vector<256x512xf32>
    tpu.vector_store %arg10[%c0_5, %c0_6], %5 {strides = array<i32>} : memref<256x512xf32, #tpu.memory_space<vmem>>, vector<256x512xf32>,
    %7 = arith.negf %5 : vector<256x512xf32>
    %8 = math.exp %7 : vector<256x512xf32>
    %cst_7 = arith.constant 1.000000e+00 : f32
    %9 = vector.broadcast %cst_7 : f32 to vector<256x512xf32>
    %10 = arith.addf %9, %8 : vector<256x512xf32>
    %11 = arith.divf %9, %10 : vector<256x512xf32>
    %c0_8 = arith.constant 0 : index
    %c0_9 = arith.constant 0 : index
    %12 = vector.load %arg11[%c0_8, %c0_9] : memref<256x512xf32, #tpu.memory_space<vmem>>, vector<256x512xf32>
    tpu.vector_store %arg11[%c0_8, %c0_9], %11 {strides = array<i32>} : memref<256x512xf32, #tpu.memory_space<vmem>>, vector<256x512xf32>,
    %c0_10 = arith.constant 0 : index
    %c0_11 = arith.constant 0 : index
    %13 = vector.load %arg4[%c0_10, %c0_11] : memref<512x72xf32, #tpu.memory_space<vmem>>, vector<512x72xf32>
    %cst_12 = arith.constant dense<0.000000e+00> : vector<256x72xf32>
    %14 = tpu.matmul %5, %13, %cst_12 {dimension_numbers = #tpu.dot_dimension_numbers<[1], [0], [0], [1], [0, 0, 1, 1], [], []>} : vector<256x512xf32>, vector<512x72xf32>, vector<256x72xf32> -> vector<256x72xf32>
    %c0_13 = arith.constant 0 : index
    %c0_14 = arith.constant 0 : index
    %15 = vector.load %arg5[%c0_13, %c0_14] : memref<1x72xf32, #tpu.memory_space<vmem>>, vector<1x72xf32>
    %16 = vector.broadcast %15 : vector<1x72xf32> to vector<256x72xf32>
    %17 = arith.addf %14, %16 : vector<256x72xf32>
    %cst_15 = arith.constant 0.000000e+00 : f32
    %18 = vector.broadcast %cst_15 : f32 to vector<256x72xf32>
    %19 = arith.maximumf %17, %18 : vector<256x72xf32>
    %c0_16 = arith.constant 0 : index
    %c0_17 = arith.constant 0 : index
    %20 = vector.load %arg6[%c0_16, %c0_17] : memref<72x6xf32, #tpu.memory_space<vmem>>, vector<72x6xf32>
    %cst_18 = arith.constant dense<0.000000e+00> : vector<256x6xf32>
    %21 = tpu.matmul %19, %20, %cst_18 {dimension_numbers = #tpu.dot_dimension_numbers<[1], [0], [0], [1], [0, 0, 1, 1], [], []>} : vector<256x72xf32>, vector<72x6xf32>, vector<256x6xf32> -> vector<256x6xf32>
    %c0_19 = arith.constant 0 : index
    %c0_20 = arith.constant 0 : index
    %22 = vector.load %arg7[%c0_19, %c0_20] : memref<1x6xf32, #tpu.memory_space<vmem>>, vector<1x6xf32>
    %23 = vector.broadcast %22 : vector<1x6xf32> to vector<256x6xf32>
    %24 = arith.addf %21, %23 : vector<256x6xf32>
    %cst_21 = arith.constant 0.000000e+00 : f32
    %25 = vector.broadcast %cst_21 : f32 to vector<256x6xf32>
    %26 = arith.maximumf %24, %25 : vector<256x6xf32>
    %c0_22 = arith.constant 0 : index
    %c0_23 = arith.constant 0 : index
    %27 = vector.load %arg8[%c0_22, %c0_23] : memref<6x128xf32, #tpu.memory_space<vmem>>, vector<6x128xf32>
    %cst_24 = arith.constant dense<0.000000e+00> : vector<256x128xf32>
    %28 = tpu.matmul %26, %27, %cst_24 {dimension_numbers = #tpu.dot_dimension_numbers<[1], [0], [0], [1], [0, 0, 1, 1], [], []>} : vector<256x6xf32>, vector<6x128xf32>, vector<256x128xf32> -> vector<256x128xf32>
    %c0_25 = arith.constant 0 : index
    %c0_26 = arith.constant 0 : index
    %29 = vector.load %arg9[%c0_25, %c0_26] : memref<1x128xf32, #tpu.memory_space<vmem>>, vector<1x128xf32>
    %30 = vector.broadcast %29 : vector<1x128xf32> to vector<256x128xf32>
    %31 = arith.addf %28, %30 : vector<256x128xf32>
    %c0_27 = arith.constant 0 : index
    %c0_28 = arith.constant 0 : index
    %32 = vector.load %arg12[%c0_27, %c0_28] : memref<256x128xf32, #tpu.memory_space<vmem>>, vector<256x128xf32>
    tpu.vector_store %arg12[%c0_27, %c0_28], %31 {strides = array<i32>} : memref<256x128xf32, #tpu.memory_space<vmem>>, vector<256x128xf32>,
    return
  }
  func.func @transform_0(%arg0: i32) -> (i32, i32) {
    %c0_i32 = arith.constant 0 : i32
    %c0_i32_0 = arith.constant 0 : i32
    return %arg0, %c0_i32 : i32, i32
  }
  func.func @transform_1(%arg0: i32) -> (i32, i32) {
    %c0_i32 = arith.constant 0 : i32
    %c0_i32_0 = arith.constant 0 : i32
    %c0_i32_1 = arith.constant 0 : i32
    return %c0_i32, %c0_i32_0 : i32, i32
  }
  func.func @transform_2(%arg0: i32) -> (i32, i32) {
    %c0_i32 = arith.constant 0 : i32
    %c0_i32_0 = arith.constant 0 : i32
    %c0_i32_1 = arith.constant 0 : i32
    return %c0_i32, %c0_i32_0 : i32, i32
  }
  func.func @transform_3(%arg0: i32) -> (i32, i32) {
    %c0_i32 = arith.constant 0 : i32
    %c0_i32_0 = arith.constant 0 : i32
    %c0_i32_1 = arith.constant 0 : i32
    return %c0_i32, %c0_i32_0 : i32, i32
  }
  func.func @transform_4(%arg0: i32) -> (i32, i32) {
    %c0_i32 = arith.constant 0 : i32
    %c0_i32_0 = arith.constant 0 : i32
    %c0_i32_1 = arith.constant 0 : i32
    return %c0_i32, %c0_i32_0 : i32, i32
  }
  func.func @transform_5(%arg0: i32) -> (i32, i32) {
    %c0_i32 = arith.constant 0 : i32
    %c0_i32_0 = arith.constant 0 : i32
    %c0_i32_1 = arith.constant 0 : i32
    return %c0_i32, %c0_i32_0 : i32, i32
  }
  func.func @transform_6(%arg0: i32) -> (i32, i32) {
    %c0_i32 = arith.constant 0 : i32
    %c0_i32_0 = arith.constant 0 : i32
    %c0_i32_1 = arith.constant 0 : i32
    return %c0_i32, %c0_i32_0 : i32, i32
  }
  func.func @transform_7(%arg0: i32) -> (i32, i32) {
    %c0_i32 = arith.constant 0 : i32
    %c0_i32_0 = arith.constant 0 : i32
    %c0_i32_1 = arith.constant 0 : i32
    return %c0_i32, %c0_i32_0 : i32, i32
  }
  func.func @transform_8(%arg0: i32) -> (i32, i32) {
    %c0_i32 = arith.constant 0 : i32
    %c0_i32_0 = arith.constant 0 : i32
    %c0_i32_1 = arith.constant 0 : i32
    return %c0_i32, %c0_i32_0 : i32, i32
  }
  func.func @transform_9(%arg0: i32) -> (i32, i32) {
    %c0_i32 = arith.constant 0 : i32
    %c0_i32_0 = arith.constant 0 : i32
    return %arg0, %c0_i32 : i32, i32
  }
  func.func @transform_10(%arg0: i32) -> (i32, i32) {
    %c0_i32 = arith.constant 0 : i32
    %c0_i32_0 = arith.constant 0 : i32
    return %arg0, %c0_i32 : i32, i32
  }
  func.func @transform_11(%arg0: i32) -> (i32, i32) {
    %c0_i32 = arith.constant 0 : i32
    %c0_i32_0 = arith.constant 0 : i32
    return %arg0, %c0_i32 : i32, i32
  }
}

</mosaic_0001>

<llo_original>
// kernel: tpu_custom_call.1
$region0: #{tpu_custom_call.1}
  #allocation0 [shape = 'u32[]', space=smem, size = 0x4, offset = 0x4, fixed_abs, tag = 'smem constant byte address 0x4 - core index']
  #allocation1 [shape = 'u32[144,128]{1,0:T(1,128)}', space=vmem, size = 0x12000, scoped, tag = 'internal scratch']
  %s0 = inlined_call_operand.hbm [shape: bf16[256,1024], index: 0, kind: input, shape index: {}]
  %s1 = inlined_call_operand.hbm [shape: bf16[1024,512], index: 1, kind: input, shape index: {}]
  %s2 = inlined_call_operand.vmem [shape: f32[1,512], index: 2, kind: input, shape index: {}]
  %s3 = inlined_call_operand.vmem [shape: f32[512,72], index: 3, kind: input, shape index: {}]
  %s4 = inlined_call_operand.vmem [shape: f32[1,72], index: 4, kind: input, shape index: {}]
  %s5 = inlined_call_operand.vmem [shape: f32[72,6], index: 5, kind: input, shape index: {}]
  %s6 = inlined_call_operand.vmem [shape: f32[1,6], index: 6, kind: input, shape index: {}]
  %s7 = inlined_call_operand.vmem [shape: f32[6,128], index: 7, kind: input, shape index: {}]
  %s8 = inlined_call_operand.vmem [shape: f32[1,128], index: 8, kind: input, shape index: {}]
  %s9 = inlined_call_operand.hbm [shape: f32[256,512], index: 9, kind: output, shape index: {0}]
  %s10 = inlined_call_operand.hbm [shape: f32[256,512], index: 10, kind: output, shape index: {1}]
  %s11 = inlined_call_operand.hbm [shape: f32[256,128], index: 11, kind: output, shape index: {2}]
  %12 = xla_tuple %s9, %s10, %s11
  %s13 = sld [smem:[#allocation0]]
  $region70: #{tpu_custom_call.1} parent=0
    _
  %s15 = ssub.s32 1, %s13
  %s16 = scalar_select 0, %s15, %s13
  $region1: #{tpu_custom_call.1} parent=0
    #allocation2 [shape = 'u8[524288]{0}', space=vmem, size = 0x80000, scoped, tag = 'input window, operand 0, single buffered']
    #allocation3 [shape = 's32[1]{0}', space=sflag, size = 0x4, scoped, tag = 'scoped memory for tpu_custom_call.1']
    #allocation4 [shape = 's32[1]{0}', space=sflag, size = 0x4, scoped, tag = 'scoped memory for tpu_custom_call.1']
    #allocation5 [shape = 'u8[1048576]{0}', space=vmem, size = 0x100000, scoped, tag = 'input window, operand 1, single buffered']
    #allocation6 [shape = 's32[1]{0}', space=sflag, size = 0x4, scoped, tag = 'scoped memory for tpu_custom_call.1']
    #allocation7 [shape = 'u8[524288]{0}', space=vmem, size = 0x80000, scoped, tag = 'output window, operand 0, single buffered']
    #allocation8 [shape = 'u8[524288]{0}', space=vmem, size = 0x80000, scoped, tag = 'output window, operand 1, single buffered']
    #allocation9 [shape = 's32[1]{0}', space=sflag, size = 0x4, scoped, tag = 'scoped memory for tpu_custom_call.1']
    #allocation10 [shape = 'u8[131072]{0}', space=vmem, size = 0x20000, scoped, tag = 'output window, operand 2, single buffered']
    %17 = vsyncpa [#allocation3], 0
    %18 = vsyncpa [#allocation6], 0
    %19 = vsyncpa [#allocation4], 0
    %20 = vsyncpa [#allocation9], 0
    // Predicated region
    $region2: #{tpu_custom_call.1} parent=1 // pred_check
      _
    $region3: #{tpu_custom_call.1} parent=1 // pred_check_branch
      %22 = sbr.rel (0) target = $region5
    $region4: #{tpu_custom_call.1} parent=1 // pred_region
      %s24 = ssub.s32 16384, 16384
      %25 = vsyncadd [#allocation3], %s24
      %s26 = sshll.u32 [#allocation2], 4
      %s27 = int_to_ptr.vmem [resolvable:$true] %s26
      %32 = dma.hbm_to_vmem [thread:$0]  %s0, 16384, %s27, [#allocation3], 512, 512, 32
    $region5: #{tpu_custom_call.1} parent=1 // pred_fallthru
      _
    // Predicated region
    $region6: #{tpu_custom_call.1} parent=1 // pred_check
      _
    $region7: #{tpu_custom_call.1} parent=1 // pred_check_branch
      %34 = sbr.rel (0) target = $region9
    $region8: #{tpu_custom_call.1} parent=1 // pred_region
      %s36 = ssub.s32 32768, 32768
      %37 = vsyncadd [#allocation6], %s36
      %s38 = sshll.u32 [#allocation5], 4
      %s39 = int_to_ptr.vmem [resolvable:$true] %s38
      %44 = dma.hbm_to_vmem [thread:$0]  %s1, 32768, %s39, [#allocation6], 256, 256, 16
    $region9: #{tpu_custom_call.1} parent=1 // pred_fallthru
      _
    // Predicated region
    $region10: #{tpu_custom_call.1} parent=1 // pred_check
      _
    $region11: #{tpu_custom_call.1} parent=1 // pred_check_branch
      %46 = sbr.rel (0) target = $region13
    $region12: #{tpu_custom_call.1} parent=1 // pred_region
      _
    $region13: #{tpu_custom_call.1} parent=1 // pred_fallthru
      _
    // Predicated region
    $region14: #{tpu_custom_call.1} parent=1 // pred_check
      _
    $region15: #{tpu_custom_call.1} parent=1 // pred_check_branch
      %48 = sbr.rel (0) target = $region17
    $region16: #{tpu_custom_call.1} parent=1 // pred_region
      _
    $region17: #{tpu_custom_call.1} parent=1 // pred_fallthru
      _
    // Predicated region
    $region18: #{tpu_custom_call.1} parent=1 // pred_check
      _
    $region19: #{tpu_custom_call.1} parent=1 // pred_check_branch
      %50 = sbr.rel (0) target = $region21
    $region20: #{tpu_custom_call.1} parent=1 // pred_region
      _
    $region21: #{tpu_custom_call.1} parent=1 // pred_fallthru
      _
    // Predicated region
    $region22: #{tpu_custom_call.1} parent=1 // pred_check
      _
    $region23: #{tpu_custom_call.1} parent=1 // pred_check_branch
      %52 = sbr.rel (0) target = $region25
    $region24: #{tpu_custom_call.1} parent=1 // pred_region
      _
    $region25: #{tpu_custom_call.1} parent=1 // pred_fallthru
      _
    // Predicated region
    $region26: #{tpu_custom_call.1} parent=1 // pred_check
      _
    $region27: #{tpu_custom_call.1} parent=1 // pred_check_branch
      %54 = sbr.rel (0) target = $region29
    $region28: #{tpu_custom_call.1} parent=1 // pred_region
      _
    $region29: #{tpu_custom_call.1} parent=1 // pred_fallthru
      _
    // Predicated region
    $region30: #{tpu_custom_call.1} parent=1 // pred_check
      _
    $region31: #{tpu_custom_call.1} parent=1 // pred_check_branch
      %56 = sbr.rel (0) target = $region33
    $region32: #{tpu_custom_call.1} parent=1 // pred_region
      _
    $region33: #{tpu_custom_call.1} parent=1 // pred_fallthru
      _
    // Predicated region
    $region34: #{tpu_custom_call.1} parent=1 // pred_check
      _
    $region35: #{tpu_custom_call.1} parent=1 // pred_check_branch
      %58 = sbr.rel (0) target = $region37
    $region36: #{tpu_custom_call.1} parent=1 // pred_region
      _
    $region37: #{tpu_custom_call.1} parent=1 // pred_fallthru
      _
    // Predicated region
    $region38: #{tpu_custom_call.1} parent=1 // pred_check
      _
    $region39: #{tpu_custom_call.1} parent=1 // pred_check_branch
      %60 = sbr.rel (0) target = $region41
    $region40: #{tpu_custom_call.1} parent=1 // pred_region
      %61 = dma.done [#allocation3], 16384
    $region41: #{tpu_custom_call.1} parent=1 // pred_fallthru
      _
    // Predicated region
    $region42: #{tpu_custom_call.1} parent=1 // pred_check
      _
    $region43: #{tpu_custom_call.1} parent=1 // pred_check_branch
      %63 = sbr.rel (0) target = $region45
    $region44: #{tpu_custom_call.1} parent=1 // pred_region
      %64 = dma.done [#allocation6], 32768
    $region45: #{tpu_custom_call.1} parent=1 // pred_fallthru
      _
    %v65 = vld [vmem:[#allocation2] sm:$0xff]
    %v66 = vld [vmem:[#allocation2 + $0x8] sm:$0xff]
    %v67 = vld [vmem:[#allocation2 + $0x10] sm:$0xff]
    %v68 = vld [vmem:[#allocation2 + $0x18] sm:$0xff]
    %v69 = vld [vmem:[#allocation2 + $0x20] sm:$0xff]
    %v70 = vld [vmem:[#allocation2 + $0x28] sm:$0xff]
    %v71 = vld [vmem:[#allocation2 + $0x30] sm:$0xff]
    %v72 = vld [vmem:[#allocation2 + $0x38] sm:$0xff]
    %v73 = vld [vmem:[#allocation2 + $0x40] sm:$0xff]
    %v74 = vld [vmem:[#allocation2 + $0x48] sm:$0xff]
    %v75 = vld [vmem:[#allocation2 + $0x50] sm:$0xff]
    %v76 = vld [vmem:[#allocation2 + $0x58] sm:$0xff]
    %v77 = vld [vmem:[#allocation2 + $0x60] sm:$0xff]
    %v78 = vld [vmem:[#allocation2 + $0x68] sm:$0xff]
    %v79 = vld [vmem:[#allocation2 + $0x70] sm:$0xff]
    %v80 = vld [vmem:[#allocation2 + $0x78] sm:$0xff]
    %v81 = vld [vmem:[#allocation2 + $0x80] sm:$0xff]
    %v82 = vld [vmem:[#allocation2 + $0x88] sm:$0xff]
    %v83 = vld [vmem:[#allocation2 + $0x90] sm:$0xff]
    %v84 = vld [vmem:[#allocation2 + $0x98] sm:$0xff]
    %v85 = vld [vmem:[#allocation2 + $0xa0] sm:$0xff]
    %v86 = vld [vmem:[#allocation2 + $0xa8] sm:$0xff]
    %v87 = vld [vmem:[#allocation2 + $0xb0] sm:$0xff]
    %v88 = vld [vmem:[#allocation2 + $0xb8] sm:$0xff]
    %v89 = vld [vmem:[#allocation2 + $0xc0] sm:$0xff]
    %v90 = vld [vmem:[#allocation2 + $0xc8] sm:$0xff]
    %v91 = vld [vmem:[#allocation2 + $0xd0] sm:$0xff]
    %v92 = vld [vmem:[#allocation2 + $0xd8] sm:$0xff]
    %v93 = vld [vmem:[#allocation2 + $0xe0] sm:$0xff]
    %v94 = vld [vmem:[#allocation2 + $0xe8] sm:$0xff]
    %v95 = vld [vmem:[#allocation2 + $0xf0] sm:$0xff]
    %v96 = vld [vmem:[#allocation2 + $0xf8] sm:$0xff]
    %v97 = vld [vmem:[#allocation2 + $0x100] sm:$0xff]
    %v98 = vld [vmem:[#allocation2 + $0x108] sm:$0xff]
    %v99 = vld [vmem:[#allocation2 + $0x110] sm:$0xff]
    %v100 = vld [vmem:[#allocation2 + $0x118] sm:$0xff]
    %v101 = vld [vmem:[#allocation2 + $0x120] sm:$0xff]
    %v102 = vld [vmem:[#allocation2 + $0x128] sm:$0xff]
    %v103 = vld [vmem:[#allocation2 + $0x130] sm:$0xff]
    %v104 = vld [vmem:[#allocation2 + $0x138] sm:$0xff]
    %v105 = vld [vmem:[#allocation2 + $0x140] sm:$0xff]
    %v106 = vld [vmem:[#allocation2 + $0x148] sm:$0xff]
    %v107 = vld [vmem:[#allocation2 + $0x150] sm:$0xff]
    %v108 = vld [vmem:[#allocation2 + $0x158] sm:$0xff]
    %v109 = vld [vmem:[#allocation2 + $0x160] sm:$0xff]
    %v110 = vld [vmem:[#allocation2 + $0x168] sm:$0xff]
    %v111 = vld [vmem:[#allocation2 + $0x170] sm:$0xff]
    %v112 = vld [vmem:[#allocation2 + $0x178] sm:$0xff]
    %v113 = vld [vmem:[#allocation2 + $0x180] sm:$0xff]
    %v114 = vld [vmem:[#allocation2 + $0x188] sm:$0xff]
    %v115 = vld [vmem:[#allocation2 + $0x190] sm:$0xff]
    %v116 = vld [vmem:[#allocation2 + $0x198] sm:$0xff]
    %v117 = vld [vmem:[#allocation2 + $0x1a0] sm:$0xff]
    %v118 = vld [vmem:[#allocation2 + $0x1a8] sm:$0xff]
    %v119 = vld [vmem:[#allocation2 + $0x1b0] sm:$0xff]
    %v120 = vld [vmem:[#allocation2 + $0x1b8] sm:$0xff]
    %v121 = vld [vmem:[#allocation2 + $0x1c0] sm:$0xff]
    %v122 = vld [vmem:[#allocation2 + $0x1c8] sm:$0xff]
    %v123 = vld [vmem:[#allocation2 + $0x1d0] sm:$0xff]
    %v124 = vld [vmem:[#allocation2 + $0x1d8] sm:$0xff]
    %v125 = vld [vmem:[#allocation2 + $0x1e0] sm:$0xff]
    %v126 = vld [vmem:[#allocation2 + $0x1e8] sm:$0xff]
    %v127 = vld [vmem:[#allocation2 + $0x1f0] sm:$0xff]
    %v128 = vld [vmem:[#allocation2 + $0x1f8] sm:$0xff]
    %v129 = vld [vmem:[#allocation2 + $0x200] sm:$0xff]
    %v130 = vld [vmem:[#allocation2 + $0x208] sm:$0xff]
    %v131 = vld [vmem:[#allocation2 + $0x210] sm:$0xff]
    %v132 = vld [vmem:[#allocation2 + $0x218] sm:$0xff]
    %v133 = vld [vmem:[#allocation2 + $0x220] sm:$0xff]
    %v134 = vld [vmem:[#allocation2 + $0x228] sm:$0xff]
    %v135 = vld [vmem:[#allocation2 + $0x230] sm:$0xff]
    %v136 = vld [vmem:[#allocation2 + $0x238] sm:$0xff]
    %v137 = vld [vmem:[#allocation2 + $0x240] sm:$0xff]
    %v138 = vld [vmem:[#allocation2 + $0x248] sm:$0xff]
    %v139 = vld [vmem:[#allocation2 + $0x250] sm:$0xff]
    %v140 = vld [vmem:[#allocation2 + $0x258] sm:$0xff]
    %v141 = vld [vmem:[#allocation2 + $0x260] sm:$0xff]
    %v142 = vld [vmem:[#allocation2 + $0x268] sm:$0xff]
    %v143 = vld [vmem:[#allocation2 + $0x270] sm:$0xff]
    %v144 = vld [vmem:[#allocation2 + $0x278] sm:$0xff]
    %v145 = vld [vmem:[#allocation2 + $0x280] sm:$0xff]
    %v146 = vld [vmem:[#allocation2 + $0x288] sm:$0xff]
    %v147 = vld [vmem:[#allocation2 + $0x290] sm:$0xff]
    %v148 = vld [vmem:[#allocation2 + $0x298] sm:$0xff]
    %v149 = vld [vmem:[#allocation2 + $0x2a0] sm:$0xff]
    %v150 = vld [vmem:[#allocation2 + $0x2a8] sm:$0xff]
    %v151 = vld [vmem:[#allocation2 + $0x2b0] sm:$0xff]
    %v152 = vld [vmem:[#allocation2 + $0x2b8] sm:$0xff]
    %v153 = vld [vmem:[#allocation2 + $0x2c0] sm:$0xff]
    %v154 = vld [vmem:[#allocation2 + $0x2c8] sm:$0xff]
    %v155 = vld [vmem:[#allocation2 + $0x2d0] sm:$0xff]
    %v156 = vld [vmem:[#allocation2 + $0x2d8] sm:$0xff]
    %v157 = vld [vmem:[#allocation2 + $0x2e0] sm:$0xff]
    %v158 = vld [vmem:[#allocation2 + $0x2e8] sm:$0xff]
    %v159 = vld [vmem:[#allocation2 + $0x2f0] sm:$0xff]
    %v160 = vld [vmem:[#allocation2 + $0x2f8] sm:$0xff]
    %v161 = vld [vmem:[#allocation2 + $0x300] sm:$0xff]
    %v162 = vld [vmem:[#allocation2 + $0x308] sm:$0xff]
    %v163 = vld [vmem:[#allocation2 + $0x310] sm:$0xff]
    %v164 = vld [vmem:[#allocation2 + $0x318] sm:$0xff]
    %v165 = vld [vmem:[#allocation2 + $0x320] sm:$0xff]
    %v166 = vld [vmem:[#allocation2 + $0x328] sm:$0xff]
    %v167 = vld [vmem:[#allocation2 + $0x330] sm:$0xff]
    %v168 = vld [vmem:[#allocation2 + $0x338] sm:$0xff]
    %v169 = vld [vmem:[#allocation2 + $0x340] sm:$0xff]
    %v170 = vld [vmem:[#allocation2 + $0x348] sm:$0xff]
    %v171 = vld [vmem:[#allocation2 + $0x350] sm:$0xff]
    %v172 = vld [vmem:[#allocation2 + $0x358] sm:$0xff]
    %v173 = vld [vmem:[#allocation2 + $0x360] sm:$0xff]
    %v174 = vld [vmem:[#allocation2 + $0x368] sm:$0xff]
    %v175 = vld [vmem:[#allocation2 + $0x370] sm:$0xff]
    %v176 = vld [vmem:[#allocation2 + $0x378] sm:$0xff]
    %v177 = vld [vmem:[#allocation2 + $0x380] sm:$0xff]
    %v178 = vld [vmem:[#allocation2 + $0x388] sm:$0xff]
    %v179 = vld [vmem:[#allocation2 + $0x390] sm:$0xff]
    %v180 = vld [vmem:[#allocation2 + $0x398] sm:$0xff]
    %v181 = vld [vmem:[#allocation2 + $0x3a0] sm:$0xff]
    %v182 = vld [vmem:[#allocation2 + $0x3a8] sm:$0xff]
    %v183 = vld [vmem:[#allocation2 + $0x3b0] sm:$0xff]
    %v184 = vld [vmem:[#allocation2 + $0x3b8] sm:$0xff]
    %v185 = vld [vmem:[#allocation2 + $0x3c0] sm:$0xff]
    %v186 = vld [vmem:[#allocation2 + $0x3c8] sm:$0xff]
    %v187 = vld [vmem:[#allocation2 + $0x3d0] sm:$0xff]
    %v188 = vld [vmem:[#allocation2 + $0x3d8] sm:$0xff]
    %v189 = vld [vmem:[#allocation2 + $0x3e0] sm:$0xff]
    %v190 = vld [vmem:[#allocation2 + $0x3e8] sm:$0xff]
    %v191 = vld [vmem:[#allocation2 + $0x3f0] sm:$0xff]
    %v192 = vld [vmem:[#allocation2 + $0x3f8] sm:$0xff]
    %v193 = vld [vmem:[#allocation5] sm:$0xff]
    %v194 = vld [vmem:[#allocation5 + $0x8] sm:$0xff]
    %v195 = vld [vmem:[#allocation5 + $0x10] sm:$0xff]
    %v196 = vld [vmem:[#allocation5 + $0x18] sm:$0xff]
    %v197 = vld [vmem:[#allocation5 + $0x20] sm:$0xff]
    %v198 = vld [vmem:[#allocation5 + $0x28] sm:$0xff]
    %v199 = vld [vmem:[#allocation5 + $0x30] sm:$0xff]
    %v200 = vld [vmem:[#allocation5 + $0x38] sm:$0xff]
    %v201 = vld [vmem:[#allocation5 + $0x40] sm:$0xff]
    %v202 = vld [vmem:[#allocation5 + $0x48] sm:$0xff]
    %v203 = vld [vmem:[#allocation5 + $0x50] sm:$0xff]
    %v204 = vld [vmem:[#allocation5 + $0x58] sm:$0xff]
    %v205 = vld [vmem:[#allocation5 + $0x60] sm:$0xff]
    %v206 = vld [vmem:[#allocation5 + $0x68] sm:$0xff]
    %v207 = vld [vmem:[#allocation5 + $0x70] sm:$0xff]
    %v208 = vld [vmem:[#allocation5 + $0x78] sm:$0xff]
    %v209 = vld [vmem:[#allocation5 + $0x80] sm:$0xff]
    %v210 = vld [vmem:[#allocation5 + $0x88] sm:$0xff]
    %v211 = vld [vmem:[#allocation5 + $0x90] sm:$0xff]
    %v212 = vld [vmem:[#allocation5 + $0x98] sm:$0xff]
    %v213 = vld [vmem:[#allocation5 + $0xa0] sm:$0xff]
    %v214 = vld [vmem:[#allocation5 + $0xa8] sm:$0xff]
    %v215 = vld [vmem:[#allocation5 + $0xb0] sm:$0xff]
    %v216 = vld [vmem:[#allocation5 + $0xb8] sm:$0xff]
    %v217 = vld [vmem:[#allocation5 + $0xc0] sm:$0xff]
    %v218 = vld [vmem:[#allocation5 + $0xc8] sm:$0xff]
    %v219 = vld [vmem:[#allocation5 + $0xd0] sm:$0xff]
    %v220 = vld [vmem:[#allocation5 + $0xd8] sm:$0xff]
    %v221 = vld [vmem:[#allocation5 + $0xe0] sm:$0xff]
    %v222 = vld [vmem:[#allocation5 + $0xe8] sm:$0xff]
    %v223 = vld [vmem:[#allocation5 + $0xf0] sm:$0xff]
    %v224 = vld [vmem:[#allocation5 + $0xf8] sm:$0xff]
    %v225 = vld [vmem:[#allocation5 + $0x100] sm:$0xff]
    %v226 = vld [vmem:[#allocation5 + $0x108] sm:$0xff]
    %v227 = vld [vmem:[#allocation5 + $0x110] sm:$0xff]
    %v228 = vld [vmem:[#allocation5 + $0x118] sm:$0xff]
    %v229 = vld [vmem:[#allocation5 + $0x120] sm:$0xff]
    %v230 = vld [vmem:[#allocation5 + $0x128] sm:$0xff]
    %v231 = vld [vmem:[#allocation5 + $0x130] sm:$0xff]
    %v232 = vld [vmem:[#allocation5 + $0x138] sm:$0xff]
    %v233 = vld [vmem:[#allocation5 + $0x140] sm:$0xff]
    %v234 = vld [vmem:[#allocation5 + $0x148] sm:$0xff]
    %v235 = vld [vmem:[#allocation5 + $0x150] sm:$0xff]
    %v236 = vld [vmem:[#allocation5 + $0x158] sm:$0xff]
    %v237 = vld [vmem:[#allocation5 + $0x160] sm:$0xff]
    %v238 = vld [vmem:[#allocation5 + $0x168] sm:$0xff]
    %v239 = vld [vmem:[#allocation5 + $0x170] sm:$0xff]
    %v240 = vld [vmem:[#allocation5 + $0x178] sm:$0xff]
    %v241 = vld [vmem:[#allocation5 + $0x180] sm:$0xff]
    %v242 = vld [vmem:[#allocation5 + $0x188] sm:$0xff]
    %v243 = vld [vmem:[#allocation5 + $0x190] sm:$0xff]
    %v244 = vld [vmem:[#allocation5 + $0x198] sm:$0xff]
    %v245 = vld [vmem:[#allocation5 + $0x1a0] sm:$0xff]
    %v246 = vld [vmem:[#allocation5 + $0x1a8] sm:$0xff]
    %v247 = vld [vmem:[#allocation5 + $0x1b0] sm:$0xff]
    %v248 = vld [vmem:[#allocation5 + $0x1b8] sm:$0xff]
    %v249 = vld [vmem:[#allocation5 + $0x1c0] sm:$0xff]
    %v250 = vld [vmem:[#allocation5 + $0x1c8] sm:$0xff]
    %v251 = vld [vmem:[#allocation5 + $0x1d0] sm:$0xff]
    %v252 = vld [vmem:[#allocation5 + $0x1d8] sm:$0xff]
    %v253 = vld [vmem:[#allocation5 + $0x1e0] sm:$0xff]
    %v254 = vld [vmem:[#allocation5 + $0x1e8] sm:$0xff]
    %v255 = vld [vmem:[#allocation5 + $0x1f0] sm:$0xff]
    %v256 = vld [vmem:[#allocation5 + $0x1f8] sm:$0xff]
    %v257 = vld [vmem:[#allocation5 + $0x200] sm:$0xff]
    %v258 = vld [vmem:[#allocation5 + $0x208] sm:$0xff]
    %v259 = vld [vmem:[#allocation5 + $0x210] sm:$0xff]
    %v260 = vld [vmem:[#allocation5 + $0x218] sm:$0xff]
    %v261 = vld [vmem:[#allocation5 + $0x220] sm:$0xff]
    %v262 = vld [vmem:[#allocation5 + $0x228] sm:$0xff]
    %v263 = vld [vmem:[#allocation5 + $0x230] sm:$0xff]
    %v264 = vld [vmem:[#allocation5 + $0x238] sm:$0xff]
    %v265 = vld [vmem:[#allocation5 + $0x240] sm:$0xff]
    %v266 = vld [vmem:[#allocation5 + $0x248] sm:$0xff]
    %v267 = vld [vmem:[#allocation5 + $0x250] sm:$0xff]
    %v268 = vld [vmem:[#allocation5 + $0x258] sm:$0xff]
    %v269 = vld [vmem:[#allocation5 + $0x260] sm:$0xff]
    %v270 = vld [vmem:[#allocation5 + $0x268] sm:$0xff]
    %v271 = vld [vmem:[#allocation5 + $0x270] sm:$0xff]
    %v272 = vld [vmem:[#allocation5 + $0x278] sm:$0xff]
    %v273 = vld [vmem:[#allocation5 + $0x280] sm:$0xff]
    %v274 = vld [vmem:[#allocation5 + $0x288] sm:$0xff]
    %v275 = vld [vmem:[#allocation5 + $0x290] sm:$0xff]
    %v276 = vld [vmem:[#allocation5 + $0x298] sm:$0xff]
    %v277 = vld [vmem:[#allocation5 + $0x2a0] sm:$0xff]
    %v278 = vld [vmem:[#allocation5 + $0x2a8] sm:$0xff]
    %v279 = vld [vmem:[#allocation5 + $0x2b0] sm:$0xff]
    %v280 = vld [vmem:[#allocation5 + $0x2b8] sm:$0xff]
    %v281 = vld [vmem:[#allocation5 + $0x2c0] sm:$0xff]
    %v282 = vld [vmem:[#allocation5 + $0x2c8] sm:$0xff]
    %v283 = vld [vmem:[#allocation5 + $0x2d0] sm:$0xff]
    %v284 = vld [vmem:[#allocation5 + $0x2d8] sm:$0xff]
    %v285 = vld [vmem:[#allocation5 + $0x2e0] sm:$0xff]
    %v286 = vld [vmem:[#allocation5 + $0x2e8] sm:$0xff]
    %v287 = vld [vmem:[#allocation5 + $0x2f0] sm:$0xff]
    %v288 = vld [vmem:[#allocation5 + $0x2f8] sm:$0xff]
    %v289 = vld [vmem:[#allocation5 + $0x300] sm:$0xff]
    %v290 = vld [vmem:[#allocation5 + $0x308] sm:$0xff]
    %v291 = vld [vmem:[#allocation5 + $0x310] sm:$0xff]
    %v292 = vld [vmem:[#allocation5 + $0x318] sm:$0xff]
    %v293 = vld [vmem:[#allocation5 + $0x320] sm:$0xff]
    %v294 = vld [vmem:[#allocation5 + $0x328] sm:$0xff]
    %v295 = vld [vmem:[#allocation5 + $0x330] sm:$0xff]
    %v296 = vld [vmem:[#allocation5 + $0x338] sm:$0xff]
    %v297 = vld [vmem:[#allocation5 + $0x340] sm:$0xff]
    %v298 = vld [vmem:[#allocation5 + $0x348] sm:$0xff]
    %v299 = vld [vmem:[#allocation5 + $0x350] sm:$0xff]
    %v300 = vld [vmem:[#allocation5 + $0x358] sm:$0xff]
    %v301 = vld [vmem:[#allocation5 + $0x360] sm:$0xff]
    %v302 = vld [vmem:[#allocation5 + $0x368] sm:$0xff]
    %v303 = vld [vmem:[#allocation5 + $0x370] sm:$0xff]
    %v304 = vld [vmem:[#allocation5 + $0x378] sm:$0xff]
    %v305 = vld [vmem:[#allocation5 + $0x380] sm:$0xff]
    %v306 = vld [vmem:[#allocation5 + $0x388] sm:$0xff]
    %v307 = vld [vmem:[#allocation5 + $0x390] sm:$0xff]
    %v308 = vld [vmem:[#allocation5 + $0x398] sm:$0xff]
    %v309 = vld [vmem:[#allocation5 + $0x3a0] sm:$0xff]
    %v310 = vld [vmem:[#allocation5 + $0x3a8] sm:$0xff]
    %v311 = vld [vmem:[#allocation5 + $0x3b0] sm:$0xff]
    %v312 = vld [vmem:[#allocation5 + $0x3b8] sm:$0xff]
    %v313 = vld [vmem:[#allocation5 + $0x3c0] sm:$0xff]
    %v314 = vld [vmem:[#allocation5 + $0x3c8] sm:$0xff]
    %v315 = vld [vmem:[#allocation5 + $0x3d0] sm:$0xff]
    %v316 = vld [vmem:[#allocation5 + $0x3d8] sm:$0xff]
    %v317 = vld [vmem:[#allocation5 + $0x3e0] sm:$0xff]
    %v318 = vld [vmem:[#allocation5 + $0x3e8] sm:$0xff]
    %v319 = vld [vmem:[#allocation5 + $0x3f0] sm:$0xff]
    %v320 = vld [vmem:[#allocation5 + $0x3f8] sm:$0xff]
    %v321 = vld [vmem:[#allocation5 + $0x400] sm:$0xff]
    %v322 = vld [vmem:[#allocation5 + $0x408] sm:$0xff]
    %v323 = vld [vmem:[#allocation5 + $0x410] sm:$0xff]
    %v324 = vld [vmem:[#allocation5 + $0x418] sm:$0xff]
    %v325 = vld [vmem:[#allocation5 + $0x420] sm:$0xff]
    %v326 = vld [vmem:[#allocation5 + $0x428] sm:$0xff]
    %v327 = vld [vmem:[#allocation5 + $0x430] sm:$0xff]
    %v328 = vld [vmem:[#allocation5 + $0x438] sm:$0xff]
    %v329 = vld [vmem:[#allocation5 + $0x440] sm:$0xff]
    %v330 = vld [vmem:[#allocation5 + $0x448] sm:$0xff]
    %v331 = vld [vmem:[#allocation5 + $0x450] sm:$0xff]
    %v332 = vld [vmem:[#allocation5 + $0x458] sm:$0xff]
    %v333 = vld [vmem:[#allocation5 + $0x460] sm:$0xff]
    %v334 = vld [vmem:[#allocation5 + $0x468] sm:$0xff]
    %v335 = vld [vmem:[#allocation5 + $0x470] sm:$0xff]
    %v336 = vld [vmem:[#allocation5 + $0x478] sm:$0xff]
    %v337 = vld [vmem:[#allocation5 + $0x480] sm:$0xff]
    %v338 = vld [vmem:[#allocation5 + $0x488] sm:$0xff]
    %v339 = vld [vmem:[#allocation5 + $0x490] sm:$0xff]
    %v340 = vld [vmem:[#allocation5 + $0x498] sm:$0xff]
    %v341 = vld [vmem:[#allocation5 + $0x4a0] sm:$0xff]
    %v342 = vld [vmem:[#allocation5 + $0x4a8] sm:$0xff]
    %v343 = vld [vmem:[#allocation5 + $0x4b0] sm:$0xff]
    %v344 = vld [vmem:[#allocation5 + $0x4b8] sm:$0xff]
    %v345 = vld [vmem:[#allocation5 + $0x4c0] sm:$0xff]
    %v346 = vld [vmem:[#allocation5 + $0x4c8] sm:$0xff]
    %v347 = vld [vmem:[#allocation5 + $0x4d0] sm:$0xff]
    %v348 = vld [vmem:[#allocation5 + $0x4d8] sm:$0xff]
    %v349 = vld [vmem:[#allocation5 + $0x4e0] sm:$0xff]
    %v350 = vld [vmem:[#allocation5 + $0x4e8] sm:$0xff]
    %v351 = vld [vmem:[#allocation5 + $0x4f0] sm:$0xff]
    %v352 = vld [vmem:[#allocation5 + $0x4f8] sm:$0xff]
    %v353 = vld [vmem:[#allocation5 + $0x500] sm:$0xff]
    %v354 = vld [vmem:[#allocation5 + $0x508] sm:$0xff]
    %v355 = vld [vmem:[#allocation5 + $0x510] sm:$0xff]
    %v356 = vld [vmem:[#allocation5 + $0x518] sm:$0xff]
    %v357 = vld [vmem:[#allocation5 + $0x520] sm:$0xff]
    %v358 = vld [vmem:[#allocation5 + $0x528] sm:$0xff]
    %v359 = vld [vmem:[#allocation5 + $0x530] sm:$0xff]
    %v360 = vld [vmem:[#allocation5 + $0x538] sm:$0xff]
    %v361 = vld [vmem:[#allocation5 + $0x540] sm:$0xff]
    %v362 = vld [vmem:[#allocation5 + $0x548] sm:$0xff]
    %v363 = vld [vmem:[#allocation5 + $0x550] sm:$0xff]
    %v364 = vld [vmem:[#allocation5 + $0x558] sm:$0xff]
    %v365 = vld [vmem:[#allocation5 + $0x560] sm:$0xff]
    %v366 = vld [vmem:[#allocation5 + $0x568] sm:$0xff]
    %v367 = vld [vmem:[#allocation5 + $0x570] sm:$0xff]
    %v368 = vld [vmem:[#allocation5 + $0x578] sm:$0xff]
    %v369 = vld [vmem:[#allocation5 + $0x580] sm:$0xff]
    %v370 = vld [vmem:[#allocation5 + $0x588] sm:$0xff]
    %v371 = vld [vmem:[#allocation5 + $0x590] sm:$0xff]
    %v372 = vld [vmem:[#allocation5 + $0x598] sm:$0xff]
    %v373 = vld [vmem:[#allocation5 + $0x5a0] sm:$0xff]
    %v374 = vld [vmem:[#allocation5 + $0x5a8] sm:$0xff]
    %v375 = vld [vmem:[#allocation5 + $0x5b0] sm:$0xff]
    %v376 = vld [vmem:[#allocation5 + $0x5b8] sm:$0xff]
    %v377 = vld [vmem:[#allocation5 + $0x5c0] sm:$0xff]
    %v378 = vld [vmem:[#allocation5 + $0x5c8] sm:$0xff]
    %v379 = vld [vmem:[#allocation5 + $0x5d0] sm:$0xff]
    %v380 = vld [vmem:[#allocation5 + $0x5d8] sm:$0xff]
    %v381 = vld [vmem:[#allocation5 + $0x5e0] sm:$0xff]
    %v382 = vld [vmem:[#allocation5 + $0x5e8] sm:$0xff]
    %v383 = vld [vmem:[#allocation5 + $0x5f0] sm:$0xff]
    %v384 = vld [vmem:[#allocation5 + $0x5f8] sm:$0xff]
    %v385 = vld [vmem:[#allocation5 + $0x600] sm:$0xff]
    %v386 = vld [vmem:[#allocation5 + $0x608] sm:$0xff]
    %v387 = vld [vmem:[#allocation5 + $0x610] sm:$0xff]
    %v388 = vld [vmem:[#allocation5 + $0x618] sm:$0xff]
    %v389 = vld [vmem:[#allocation5 + $0x620] sm:$0xff]
    %v390 = vld [vmem:[#allocation5 + $0x628] sm:$0xff]
    %v391 = vld [vmem:[#allocation5 + $0x630] sm:$0xff]
    %v392 = vld [vmem:[#allocation5 + $0x638] sm:$0xff]
    %v393 = vld [vmem:[#allocation5 + $0x640] sm:$0xff]
    %v394 = vld [vmem:[#allocation5 + $0x648] sm:$0xff]
    %v395 = vld [vmem:[#allocation5 + $0x650] sm:$0xff]
    %v396 = vld [vmem:[#allocation5 + $0x658] sm:$0xff]
    %v397 = vld [vmem:[#allocation5 + $0x660] sm:$0xff]
    %v398 = vld [vmem:[#allocation5 + $0x668] sm:$0xff]
    %v399 = vld [vmem:[#allocation5 + $0x670] sm:$0xff]
    %v400 = vld [vmem:[#allocation5 + $0x678] sm:$0xff]
    %v401 = vld [vmem:[#allocation5 + $0x680] sm:$0xff]
    %v402 = vld [vmem:[#allocation5 + $0x688] sm:$0xff]
    %v403 = vld [vmem:[#allocation5 + $0x690] sm:$0xff]
    %v404 = vld [vmem:[#allocation5 + $0x698] sm:$0xff]
    %v405 = vld [vmem:[#allocation5 + $0x6a0] sm:$0xff]
    %v406 = vld [vmem:[#allocation5 + $0x6a8] sm:$0xff]
    %v407 = vld [vmem:[#allocation5 + $0x6b0] sm:$0xff]
    %v408 = vld [vmem:[#allocation5 + $0x6b8] sm:$0xff]
    %v409 = vld [vmem:[#allocation5 + $0x6c0] sm:$0xff]
    %v410 = vld [vmem:[#allocation5 + $0x6c8] sm:$0xff]
    %v411 = vld [vmem:[#allocation5 + $0x6d0] sm:$0xff]
    %v412 = vld [vmem:[#allocation5 + $0x6d8] sm:$0xff]
    %v413 = vld [vmem:[#allocation5 + $0x6e0] sm:$0xff]
    %v414 = vld [vmem:[#allocation5 + $0x6e8] sm:$0xff]
    %v415 = vld [vmem:[#allocation5 + $0x6f0] sm:$0xff]
    %v416 = vld [vmem:[#allocation5 + $0x6f8] sm:$0xff]
    %v417 = vld [vmem:[#allocation5 + $0x700] sm:$0xff]
    %v418 = vld [vmem:[#allocation5 + $0x708] sm:$0xff]
    %v419 = vld [vmem:[#allocation5 + $0x710] sm:$0xff]
    %v420 = vld [vmem:[#allocation5 + $0x718] sm:$0xff]
    %v421 = vld [vmem:[#allocation5 + $0x720] sm:$0xff]
    %v422 = vld [vmem:[#allocation5 + $0x728] sm:$0xff]
    %v423 = vld [vmem:[#allocation5 + $0x730] sm:$0xff]
    %v424 = vld [vmem:[#allocation5 + $0x738] sm:$0xff]
    %v425 = vld [vmem:[#allocation5 + $0x740] sm:$0xff]
    %v426 = vld [vmem:[#allocation5 + $0x748] sm:$0xff]
    %v427 = vld [vmem:[#allocation5 + $0x750] sm:$0xff]
    %v428 = vld [vmem:[#allocation5 + $0x758] sm:$0xff]
    %v429 = vld [vmem:[#allocation5 + $0x760] sm:$0xff]
    %v430 = vld [vmem:[#allocation5 + $0x768] sm:$0xff]
    %v431 = vld [vmem:[#allocation5 + $0x770] sm:$0xff]
    %v432 = vld [vmem:[#allocation5 + $0x778] sm:$0xff]
    %v433 = vld [vmem:[#allocation5 + $0x780] sm:$0xff]
    %v434 = vld [vmem:[#allocation5 + $0x788] sm:$0xff]
    %v435 = vld [vmem:[#allocation5 + $0x790] sm:$0xff]
    %v436 = vld [vmem:[#allocation5 + $0x798] sm:$0xff]
    %v437 = vld [vmem:[#allocation5 + $0x7a0] sm:$0xff]
    %v438 = vld [vmem:[#allocation5 + $0x7a8] sm:$0xff]
    %v439 = vld [vmem:[#allocation5 + $0x7b0] sm:$0xff]
    %v440 = vld [vmem:[#allocation5 + $0x7b8] sm:$0xff]
    %v441 = vld [vmem:[#allocation5 + $0x7c0] sm:$0xff]
    %v442 = vld [vmem:[#allocation5 + $0x7c8] sm:$0xff]
    %v443 = vld [vmem:[#allocation5 + $0x7d0] sm:$0xff]
    %v444 = vld [vmem:[#allocation5 + $0x7d8] sm:$0xff]
    %v445 = vld [vmem:[#allocation5 + $0x7e0] sm:$0xff]
    %v446 = vld [vmem:[#allocation5 + $0x7e8] sm:$0xff]
    %v447 = vld [vmem:[#allocation5 + $0x7f0] sm:$0xff]
    %v448 = vld [vmem:[#allocation5 + $0x7f8] sm:$0xff]
    %v449 = vld [vmem:[%s2] sm:$0xf]
    %v451 = vlaneseq
    %v452 = vshrl.u32 %v451, 7
    %v453 = vsub.s32 0, %v452
    %v454 = vrot.slane %v449, %v453
    %v455 = vlaneseq
    %v456 = vshrl.u32 %v455, 7
    %v457 = vsub.s32 1, %v456
    %v458 = vrot.slane %v449, %v457
    %v459 = vlaneseq
    %v460 = vshrl.u32 %v459, 7
    %v461 = vsub.s32 2, %v460
    %v462 = vrot.slane %v449, %v461
    %v463 = vlaneseq
    %v464 = vshrl.u32 %v463, 7
    %v465 = vsub.s32 3, %v464
    %v466 = vrot.slane %v449, %v465
    %v599 = vunpack.c.l.b16 %v65
    %v600 = vunpack.c.h.b16 %v65
    %v601 = vunpack.c.l.b16 %v66
    %v602 = vunpack.c.h.b16 %v66
    %v603 = vunpack.c.l.b16 %v67
    %v604 = vunpack.c.h.b16 %v67
    %v605 = vunpack.c.l.b16 %v68
    %v606 = vunpack.c.h.b16 %v68
    %v607 = vunpack.c.l.b16 %v69
    %v608 = vunpack.c.h.b16 %v69
    %v609 = vunpack.c.l.b16 %v70
    %v610 = vunpack.c.h.b16 %v70
    %v611 = vunpack.c.l.b16 %v71
    %v612 = vunpack.c.h.b16 %v71
    %v613 = vunpack.c.l.b16 %v72
    %v614 = vunpack.c.h.b16 %v72
    %v615 = vunpack.c.l.b16 %v73
    %v616 = vunpack.c.h.b16 %v73
    %v617 = vunpack.c.l.b16 %v74
    %v618 = vunpack.c.h.b16 %v74
    %v619 = vunpack.c.l.b16 %v75
    %v620 = vunpack.c.h.b16 %v75
    %v621 = vunpack.c.l.b16 %v76
    %v622 = vunpack.c.h.b16 %v76
    %v623 = vunpack.c.l.b16 %v77
    %v624 = vunpack.c.h.b16 %v77
    %v625 = vunpack.c.l.b16 %v78
    %v626 = vunpack.c.h.b16 %v78
    %v627 = vunpack.c.l.b16 %v79
    %v628 = vunpack.c.h.b16 %v79
    %v629 = vunpack.c.l.b16 %v80
    %v630 = vunpack.c.h.b16 %v80
    %v631 = vunpack.c.l.b16 %v81
    %v632 = vunpack.c.h.b16 %v81
    %v633 = vunpack.c.l.b16 %v82
    %v634 = vunpack.c.h.b16 %v82
    %v635 = vunpack.c.l.b16 %v83
    %v636 = vunpack.c.h.b16 %v83
    %v637 = vunpack.c.l.b16 %v84
    %v638 = vunpack.c.h.b16 %v84
    %v639 = vunpack.c.l.b16 %v85
    %v640 = vunpack.c.h.b16 %v85
    %v641 = vunpack.c.l.b16 %v86
    %v642 = vunpack.c.h.b16 %v86
    %v643 = vunpack.c.l.b16 %v87
    %v644 = vunpack.c.h.b16 %v87
    %v645 = vunpack.c.l.b16 %v88
    %v646 = vunpack.c.h.b16 %v88
    %v647 = vunpack.c.l.b16 %v89
    %v648 = vunpack.c.h.b16 %v89
    %v649 = vunpack.c.l.b16 %v90
    %v650 = vunpack.c.h.b16 %v90
    %v651 = vunpack.c.l.b16 %v91
    %v652 = vunpack.c.h.b16 %v91
    %v653 = vunpack.c.l.b16 %v92
    %v654 = vunpack.c.h.b16 %v92
    %v655 = vunpack.c.l.b16 %v93
    %v656 = vunpack.c.h.b16 %v93
    %v657 = vunpack.c.l.b16 %v94
    %v658 = vunpack.c.h.b16 %v94
    %v659 = vunpack.c.l.b16 %v95
    %v660 = vunpack.c.h.b16 %v95
    %v661 = vunpack.c.l.b16 %v96
    %v662 = vunpack.c.h.b16 %v96
    %v663 = vunpack.c.l.b16 %v97
    %v664 = vunpack.c.h.b16 %v97
    %v665 = vunpack.c.l.b16 %v98
    %v666 = vunpack.c.h.b16 %v98
    %v667 = vunpack.c.l.b16 %v99
    %v668 = vunpack.c.h.b16 %v99
    %v669 = vunpack.c.l.b16 %v100
    %v670 = vunpack.c.h.b16 %v100
    %v671 = vunpack.c.l.b16 %v101
    %v672 = vunpack.c.h.b16 %v101
    %v673 = vunpack.c.l.b16 %v102
    %v674 = vunpack.c.h.b16 %v102
    %v675 = vunpack.c.l.b16 %v103
    %v676 = vunpack.c.h.b16 %v103
    %v677 = vunpack.c.l.b16 %v104
    %v678 = vunpack.c.h.b16 %v104
    %v679 = vunpack.c.l.b16 %v105
    %v680 = vunpack.c.h.b16 %v105
    %v681 = vunpack.c.l.b16 %v106
    %v682 = vunpack.c.h.b16 %v106
    %v683 = vunpack.c.l.b16 %v107
    %v684 = vunpack.c.h.b16 %v107
    %v685 = vunpack.c.l.b16 %v108
    %v686 = vunpack.c.h.b16 %v108
    %v687 = vunpack.c.l.b16 %v109
    %v688 = vunpack.c.h.b16 %v109
    %v689 = vunpack.c.l.b16 %v110
    %v690 = vunpack.c.h.b16 %v110
    %v691 = vunpack.c.l.b16 %v111
    %v692 = vunpack.c.h.b16 %v111
    %v693 = vunpack.c.l.b16 %v112
    %v694 = vunpack.c.h.b16 %v112
    %v695 = vunpack.c.l.b16 %v113
    %v696 = vunpack.c.h.b16 %v113
    %v697 = vunpack.c.l.b16 %v114
    %v698 = vunpack.c.h.b16 %v114
    %v699 = vunpack.c.l.b16 %v115
    %v700 = vunpack.c.h.b16 %v115
    %v701 = vunpack.c.l.b16 %v116
    %v702 = vunpack.c.h.b16 %v116
    %v703 = vunpack.c.l.b16 %v117
    %v704 = vunpack.c.h.b16 %v117
    %v705 = vunpack.c.l.b16 %v118
    %v706 = vunpack.c.h.b16 %v118
    %v707 = vunpack.c.l.b16 %v119
    %v708 = vunpack.c.h.b16 %v119
    %v709 = vunpack.c.l.b16 %v120
    %v710 = vunpack.c.h.b16 %v120
    %v711 = vunpack.c.l.b16 %v121
    %v712 = vunpack.c.h.b16 %v121
    %v713 = vunpack.c.l.b16 %v122
    %v714 = vunpack.c.h.b16 %v122
    %v715 = vunpack.c.l.b16 %v123
    %v716 = vunpack.c.h.b16 %v123
    %v717 = vunpack.c.l.b16 %v124
    %v718 = vunpack.c.h.b16 %v124
    %v719 = vunpack.c.l.b16 %v125
    %v720 = vunpack.c.h.b16 %v125
    %v721 = vunpack.c.l.b16 %v126
    %v722 = vunpack.c.h.b16 %v126
    %v723 = vunpack.c.l.b16 %v127
    %v724 = vunpack.c.h.b16 %v127
    %v725 = vunpack.c.l.b16 %v128
    %v726 = vunpack.c.h.b16 %v128
    %v727 = vunpack.c.l.b16 %v129
    %v728 = vunpack.c.h.b16 %v129
    %v729 = vunpack.c.l.b16 %v130
    %v730 = vunpack.c.h.b16 %v130
    %v731 = vunpack.c.l.b16 %v131
    %v732 = vunpack.c.h.b16 %v131
    %v733 = vunpack.c.l.b16 %v132
    %v734 = vunpack.c.h.b16 %v132
    %v735 = vunpack.c.l.b16 %v133
    %v736 = vunpack.c.h.b16 %v133
    %v737 = vunpack.c.l.b16 %v134
    %v738 = vunpack.c.h.b16 %v134
    %v739 = vunpack.c.l.b16 %v135
    %v740 = vunpack.c.h.b16 %v135
    %v741 = vunpack.c.l.b16 %v136
    %v742 = vunpack.c.h.b16 %v136
    %v743 = vunpack.c.l.b16 %v137
    %v744 = vunpack.c.h.b16 %v137
    %v745 = vunpack.c.l.b16 %v138
    %v746 = vunpack.c.h.b16 %v138
    %v747 = vunpack.c.l.b16 %v139
    %v748 = vunpack.c.h.b16 %v139
    %v749 = vunpack.c.l.b16 %v140
    %v750 = vunpack.c.h.b16 %v140
    %v751 = vunpack.c.l.b16 %v141
    %v752 = vunpack.c.h.b16 %v141
    %v753 = vunpack.c.l.b16 %v142
    %v754 = vunpack.c.h.b16 %v142
    %v755 = vunpack.c.l.b16 %v143
    %v756 = vunpack.c.h.b16 %v143
    %v757 = vunpack.c.l.b16 %v144
    %v758 = vunpack.c.h.b16 %v144
    %v759 = vunpack.c.l.b16 %v145
    %v760 = vunpack.c.h.b16 %v145
    %v761 = vunpack.c.l.b16 %v146
    %v762 = vunpack.c.h.b16 %v146
    %v763 = vunpack.c.l.b16 %v147
    %v764 = vunpack.c.h.b16 %v147
    %v765 = vunpack.c.l.b16 %v148
    %v766 = vunpack.c.h.b16 %v148
    %v767 = vunpack.c.l.b16 %v149
    %v768 = vunpack.c.h.b16 %v149
    %v769 = vunpack.c.l.b16 %v150
    %v770 = vunpack.c.h.b16 %v150
    %v771 = vunpack.c.l.b16 %v151
    %v772 = vunpack.c.h.b16 %v151
    %v773 = vunpack.c.l.b16 %v152
    %v774 = vunpack.c.h.b16 %v152
    %v775 = vunpack.c.l.b16 %v153
    %v776 = vunpack.c.h.b16 %v153
    %v777 = vunpack.c.l.b16 %v154
    %v778 = vunpack.c.h.b16 %v154
    %v779 = vunpack.c.l.b16 %v155
    %v780 = vunpack.c.h.b16 %v155
    %v781 = vunpack.c.l.b16 %v156
    %v782 = vunpack.c.h.b16 %v156
    %v783 = vunpack.c.l.b16 %v157
    %v784 = vunpack.c.h.b16 %v157
    %v785 = vunpack.c.l.b16 %v158
    %v786 = vunpack.c.h.b16 %v158
    %v787 = vunpack.c.l.b16 %v159
    %v788 = vunpack.c.h.b16 %v159
    %v789 = vunpack.c.l.b16 %v160
    %v790 = vunpack.c.h.b16 %v160
    %v791 = vunpack.c.l.b16 %v161
    %v792 = vunpack.c.h.b16 %v161
    %v793 = vunpack.c.l.b16 %v162
    %v794 = vunpack.c.h.b16 %v162
    %v795 = vunpack.c.l.b16 %v163
    %v796 = vunpack.c.h.b16 %v163
    %v797 = vunpack.c.l.b16 %v164
    %v798 = vunpack.c.h.b16 %v164
    %v799 = vunpack.c.l.b16 %v165
    %v800 = vunpack.c.h.b16 %v165
    %v801 = vunpack.c.l.b16 %v166
    %v802 = vunpack.c.h.b16 %v166
    %v803 = vunpack.c.l.b16 %v167
    %v804 = vunpack.c.h.b16 %v167
    %v805 = vunpack.c.l.b16 %v168
    %v806 = vunpack.c.h.b16 %v168
    %v807 = vunpack.c.l.b16 %v169
    %v808 = vunpack.c.h.b16 %v169
    %v809 = vunpack.c.l.b16 %v170
    %v810 = vunpack.c.h.b16 %v170
    %v811 = vunpack.c.l.b16 %v171
    %v812 = vunpack.c.h.b16 %v171
    %v813 = vunpack.c.l.b16 %v172
    %v814 = vunpack.c.h.b16 %v172
    %v815 = vunpack.c.l.b16 %v173
    %v816 = vunpack.c.h.b16 %v173
    %v817 = vunpack.c.l.b16 %v174
    %v818 = vunpack.c.h.b16 %v174
    %v819 = vunpack.c.l.b16 %v175
    %v820 = vunpack.c.h.b16 %v175
    %v821 = vunpack.c.l.b16 %v176
    %v822 = vunpack.c.h.b16 %v176
    %v823 = vunpack.c.l.b16 %v177
    %v824 = vunpack.c.h.b16 %v177
    %v825 = vunpack.c.l.b16 %v178
    %v826 = vunpack.c.h.b16 %v178
    %v827 = vunpack.c.l.b16 %v179
    %v828 = vunpack.c.h.b16 %v179
    %v829 = vunpack.c.l.b16 %v180
    %v830 = vunpack.c.h.b16 %v180
    %v831 = vunpack.c.l.b16 %v181
    %v832 = vunpack.c.h.b16 %v181
    %v833 = vunpack.c.l.b16 %v182
    %v834 = vunpack.c.h.b16 %v182
    %v835 = vunpack.c.l.b16 %v183
    %v836 = vunpack.c.h.b16 %v183
    %v837 = vunpack.c.l.b16 %v184
    %v838 = vunpack.c.h.b16 %v184
    %v839 = vunpack.c.l.b16 %v185
    %v840 = vunpack.c.h.b16 %v185
    %v841 = vunpack.c.l.b16 %v186
    %v842 = vunpack.c.h.b16 %v186
    %v843 = vunpack.c.l.b16 %v187
    %v844 = vunpack.c.h.b16 %v187
    %v845 = vunpack.c.l.b16 %v188
    %v846 = vunpack.c.h.b16 %v188
    %v847 = vunpack.c.l.b16 %v189
    %v848 = vunpack.c.h.b16 %v189
    %v849 = vunpack.c.l.b16 %v190
    %v850 = vunpack.c.h.b16 %v190
    %v851 = vunpack.c.l.b16 %v191
    %v852 = vunpack.c.h.b16 %v191
    %v853 = vunpack.c.l.b16 %v192
    %v854 = vunpack.c.h.b16 %v192
    %v855 = vpack.c.b16 %v607, %v599
    %v856 = vpack.c.b16 %v608, %v600
    %v857 = vpack.c.b16 %v609, %v601
    %v858 = vpack.c.b16 %v610, %v602
    %v859 = vpack.c.b16 %v611, %v603
    %v860 = vpack.c.b16 %v612, %v604
    %v861 = vpack.c.b16 %v613, %v605
    %v862 = vpack.c.b16 %v614, %v606
    %v863 = vpack.c.b16 %v623, %v615
    %v864 = vpack.c.b16 %v624, %v616
    %v865 = vpack.c.b16 %v625, %v617
    %v866 = vpack.c.b16 %v626, %v618
    %v867 = vpack.c.b16 %v627, %v619
    %v868 = vpack.c.b16 %v628, %v620
    %v869 = vpack.c.b16 %v629, %v621
    %v870 = vpack.c.b16 %v630, %v622
    %v871 = vpack.c.b16 %v639, %v631
    %v872 = vpack.c.b16 %v640, %v632
    %v873 = vpack.c.b16 %v641, %v633
    %v874 = vpack.c.b16 %v642, %v634
    %v875 = vpack.c.b16 %v643, %v635
    %v876 = vpack.c.b16 %v644, %v636
    %v877 = vpack.c.b16 %v645, %v637
    %v878 = vpack.c.b16 %v646, %v638
    %v879 = vpack.c.b16 %v655, %v647
    %v880 = vpack.c.b16 %v656, %v648
    %v881 = vpack.c.b16 %v657, %v649
    %v882 = vpack.c.b16 %v658, %v650
    %v883 = vpack.c.b16 %v659, %v651
    %v884 = vpack.c.b16 %v660, %v652
    %v885 = vpack.c.b16 %v661, %v653
    %v886 = vpack.c.b16 %v662, %v654
    %v887 = vpack.c.b16 %v671, %v663
    %v888 = vpack.c.b16 %v672, %v664
    %v889 = vpack.c.b16 %v673, %v665
    %v890 = vpack.c.b16 %v674, %v666
    %v891 = vpack.c.b16 %v675, %v667
    %v892 = vpack.c.b16 %v676, %v668
    %v893 = vpack.c.b16 %v677, %v669
    %v894 = vpack.c.b16 %v678, %v670
    %v895 = vpack.c.b16 %v687, %v679
    %v896 = vpack.c.b16 %v688, %v680
    %v897 = vpack.c.b16 %v689, %v681
    %v898 = vpack.c.b16 %v690, %v682
    %v899 = vpack.c.b16 %v691, %v683
    %v900 = vpack.c.b16 %v692, %v684
    %v901 = vpack.c.b16 %v693, %v685
    %v902 = vpack.c.b16 %v694, %v686
    %v903 = vpack.c.b16 %v703, %v695
    %v904 = vpack.c.b16 %v704, %v696
    %v905 = vpack.c.b16 %v705, %v697
    %v906 = vpack.c.b16 %v706, %v698
    %v907 = vpack.c.b16 %v707, %v699
    %v908 = vpack.c.b16 %v708, %v700
    %v909 = vpack.c.b16 %v709, %v701
    %v910 = vpack.c.b16 %v710, %v702
    %v911 = vpack.c.b16 %v719, %v711
    %v912 = vpack.c.b16 %v720, %v712
    %v913 = vpack.c.b16 %v721, %v713
    %v914 = vpack.c.b16 %v722, %v714
    %v915 = vpack.c.b16 %v723, %v715
    %v916 = vpack.c.b16 %v724, %v716
    %v917 = vpack.c.b16 %v725, %v717
    %v918 = vpack.c.b16 %v726, %v718
    %v919 = vpack.c.b16 %v735, %v727
    %v920 = vpack.c.b16 %v736, %v728
    %v921 = vpack.c.b16 %v737, %v729
    %v922 = vpack.c.b16 %v738, %v730
    %v923 = vpack.c.b16 %v739, %v731
    %v924 = vpack.c.b16 %v740, %v732
    %v925 = vpack.c.b16 %v741, %v733
    %v926 = vpack.c.b16 %v742, %v734
    %v927 = vpack.c.b16 %v751, %v743
    %v928 = vpack.c.b16 %v752, %v744
    %v929 = vpack.c.b16 %v753, %v745
    %v930 = vpack.c.b16 %v754, %v746
    %v931 = vpack.c.b16 %v755, %v747
    %v932 = vpack.c.b16 %v756, %v748
    %v933 = vpack.c.b16 %v757, %v749
    %v934 = vpack.c.b16 %v758, %v750
    %v935 = vpack.c.b16 %v767, %v759
    %v936 = vpack.c.b16 %v768, %v760
    %v937 = vpack.c.b16 %v769, %v761
    %v938 = vpack.c.b16 %v770, %v762
    %v939 = vpack.c.b16 %v771, %v763
    %v940 = vpack.c.b16 %v772, %v764
    %v941 = vpack.c.b16 %v773, %v765
    %v942 = vpack.c.b16 %v774, %v766
    %v943 = vpack.c.b16 %v783, %v775
    %v944 = vpack.c.b16 %v784, %v776
    %v945 = vpack.c.b16 %v785, %v777
    %v946 = vpack.c.b16 %v786, %v778
    %v947 = vpack.c.b16 %v787, %v779
    %v948 = vpack.c.b16 %v788, %v780
    %v949 = vpack.c.b16 %v789, %v781
    %v950 = vpack.c.b16 %v790, %v782
    %v951 = vpack.c.b16 %v799, %v791
    %v952 = vpack.c.b16 %v800, %v792
    %v953 = vpack.c.b16 %v801, %v793
    %v954 = vpack.c.b16 %v802, %v794
    %v955 = vpack.c.b16 %v803, %v795
    %v956 = vpack.c.b16 %v804, %v796
    %v957 = vpack.c.b16 %v805, %v797
    %v958 = vpack.c.b16 %v806, %v798
    %v959 = vpack.c.b16 %v815, %v807
    %v960 = vpack.c.b16 %v816, %v808
    %v961 = vpack.c.b16 %v817, %v809
    %v962 = vpack.c.b16 %v818, %v810
    %v963 = vpack.c.b16 %v819, %v811
    %v964 = vpack.c.b16 %v820, %v812
    %v965 = vpack.c.b16 %v821, %v813
    %v966 = vpack.c.b16 %v822, %v814
    %v967 = vpack.c.b16 %v831, %v823
    %v968 = vpack.c.b16 %v832, %v824
    %v969 = vpack.c.b16 %v833, %v825
    %v970 = vpack.c.b16 %v834, %v826
    %v971 = vpack.c.b16 %v835, %v827
    %v972 = vpack.c.b16 %v836, %v828
    %v973 = vpack.c.b16 %v837, %v829
    %v974 = vpack.c.b16 %v838, %v830
    %v975 = vpack.c.b16 %v847, %v839
    %v976 = vpack.c.b16 %v848, %v840
    %v977 = vpack.c.b16 %v849, %v841
    %v978 = vpack.c.b16 %v850, %v842
    %v979 = vpack.c.b16 %v851, %v843
    %v980 = vpack.c.b16 %v852, %v844
    %v981 = vpack.c.b16 %v853, %v845
    %v982 = vpack.c.b16 %v854, %v846
    %v1367 = vunpack.c.l.b16 %v193
    %v1368 = vunpack.c.h.b16 %v193
    %v1369 = vunpack.c.l.b16 %v194
    %v1370 = vunpack.c.h.b16 %v194
    %v1371 = vunpack.c.l.b16 %v195
    %v1372 = vunpack.c.h.b16 %v195
    %v1373 = vunpack.c.l.b16 %v196
    %v1374 = vunpack.c.h.b16 %v196
    %v1375 = vunpack.c.l.b16 %v197
    %v1376 = vunpack.c.h.b16 %v197
    %v1377 = vunpack.c.l.b16 %v198
    %v1378 = vunpack.c.h.b16 %v198
    %v1379 = vunpack.c.l.b16 %v199
    %v1380 = vunpack.c.h.b16 %v199
    %v1381 = vunpack.c.l.b16 %v200
    %v1382 = vunpack.c.h.b16 %v200
    %v1383 = vunpack.c.l.b16 %v201
    %v1384 = vunpack.c.h.b16 %v201
    %v1385 = vunpack.c.l.b16 %v202
    %v1386 = vunpack.c.h.b16 %v202
    %v1387 = vunpack.c.l.b16 %v203
    %v1388 = vunpack.c.h.b16 %v203
    %v1389 = vunpack.c.l.b16 %v204
    %v1390 = vunpack.c.h.b16 %v204
    %v1391 = vunpack.c.l.b16 %v205
    %v1392 = vunpack.c.h.b16 %v205
    %v1393 = vunpack.c.l.b16 %v206
    %v1394 = vunpack.c.h.b16 %v206
    %v1395 = vunpack.c.l.b16 %v207
    %v1396 = vunpack.c.h.b16 %v207
    %v1397 = vunpack.c.l.b16 %v208
    %v1398 = vunpack.c.h.b16 %v208
    %v1399 = vunpack.c.l.b16 %v209
    %v1400 = vunpack.c.h.b16 %v209
    %v1401 = vunpack.c.l.b16 %v210
    %v1402 = vunpack.c.h.b16 %v210
    %v1403 = vunpack.c.l.b16 %v211
    %v1404 = vunpack.c.h.b16 %v211
    %v1405 = vunpack.c.l.b16 %v212
    %v1406 = vunpack.c.h.b16 %v212
    %v1407 = vunpack.c.l.b16 %v213
    %v1408 = vunpack.c.h.b16 %v213
    %v1409 = vunpack.c.l.b16 %v214
    %v1410 = vunpack.c.h.b16 %v214
    %v1411 = vunpack.c.l.b16 %v215
    %v1412 = vunpack.c.h.b16 %v215
    %v1413 = vunpack.c.l.b16 %v216
    %v1414 = vunpack.c.h.b16 %v216
    %v1415 = vunpack.c.l.b16 %v217
    %v1416 = vunpack.c.h.b16 %v217
    %v1417 = vunpack.c.l.b16 %v218
    %v1418 = vunpack.c.h.b16 %v218
    %v1419 = vunpack.c.l.b16 %v219
    %v1420 = vunpack.c.h.b16 %v219
    %v1421 = vunpack.c.l.b16 %v220
    %v1422 = vunpack.c.h.b16 %v220
    %v1423 = vunpack.c.l.b16 %v221
    %v1424 = vunpack.c.h.b16 %v221
    %v1425 = vunpack.c.l.b16 %v222
    %v1426 = vunpack.c.h.b16 %v222
    %v1427 = vunpack.c.l.b16 %v223
    %v1428 = vunpack.c.h.b16 %v223
    %v1429 = vunpack.c.l.b16 %v224
    %v1430 = vunpack.c.h.b16 %v224
    %v1431 = vunpack.c.l.b16 %v225
    %v1432 = vunpack.c.h.b16 %v225
    %v1433 = vunpack.c.l.b16 %v226
    %v1434 = vunpack.c.h.b16 %v226
    %v1435 = vunpack.c.l.b16 %v227
    %v1436 = vunpack.c.h.b16 %v227
    %v1437 = vunpack.c.l.b16 %v228
    %v1438 = vunpack.c.h.b16 %v228
    %v1439 = vunpack.c.l.b16 %v229
    %v1440 = vunpack.c.h.b16 %v229
    %v1441 = vunpack.c.l.b16 %v230
    %v1442 = vunpack.c.h.b16 %v230
    %v1443 = vunpack.c.l.b16 %v231
    %v1444 = vunpack.c.h.b16 %v231
    %v1445 = vunpack.c.l.b16 %v232
    %v1446 = vunpack.c.h.b16 %v232
    %v1447 = vunpack.c.l.b16 %v233
    %v1448 = vunpack.c.h.b16 %v233
    %v1449 = vunpack.c.l.b16 %v234
    %v1450 = vunpack.c.h.b16 %v234
    %v1451 = vunpack.c.l.b16 %v235
    %v1452 = vunpack.c.h.b16 %v235
    %v1453 = vunpack.c.l.b16 %v236
    %v1454 = vunpack.c.h.b16 %v236
    %v1455 = vunpack.c.l.b16 %v237
    %v1456 = vunpack.c.h.b16 %v237
    %v1457 = vunpack.c.l.b16 %v238
    %v1458 = vunpack.c.h.b16 %v238
    %v1459 = vunpack.c.l.b16 %v239
    %v1460 = vunpack.c.h.b16 %v239
    %v1461 = vunpack.c.l.b16 %v240
    %v1462 = vunpack.c.h.b16 %v240
    %v1463 = vunpack.c.l.b16 %v241
    %v1464 = vunpack.c.h.b16 %v241
    %v1465 = vunpack.c.l.b16 %v242
    %v1466 = vunpack.c.h.b16 %v242
    %v1467 = vunpack.c.l.b16 %v243
    %v1468 = vunpack.c.h.b16 %v243
    %v1469 = vunpack.c.l.b16 %v244
    %v1470 = vunpack.c.h.b16 %v244
    %v1471 = vunpack.c.l.b16 %v245
    %v1472 = vunpack.c.h.b16 %v245
    %v1473 = vunpack.c.l.b16 %v246
    %v1474 = vunpack.c.h.b16 %v246
    %v1475 = vunpack.c.l.b16 %v247
    %v1476 = vunpack.c.h.b16 %v247
    %v1477 = vunpack.c.l.b16 %v248
    %v1478 = vunpack.c.h.b16 %v248
    %v1479 = vunpack.c.l.b16 %v249
    %v1480 = vunpack.c.h.b16 %v249
    %v1481 = vunpack.c.l.b16 %v250
    %v1482 = vunpack.c.h.b16 %v250
    %v1483 = vunpack.c.l.b16 %v251
    %v1484 = vunpack.c.h.b16 %v251
    %v1485 = vunpack.c.l.b16 %v252
    %v1486 = vunpack.c.h.b16 %v252
    %v1487 = vunpack.c.l.b16 %v253
    %v1488 = vunpack.c.h.b16 %v253
    %v1489 = vunpack.c.l.b16 %v254
    %v1490 = vunpack.c.h.b16 %v254
    %v1491 = vunpack.c.l.b16 %v255
    %v1492 = vunpack.c.h.b16 %v255
    %v1493 = vunpack.c.l.b16 %v256
    %v1494 = vunpack.c.h.b16 %v256
    %v1495 = vunpack.c.l.b16 %v257
    %v1496 = vunpack.c.h.b16 %v257
    %v1497 = vunpack.c.l.b16 %v258
    %v1498 = vunpack.c.h.b16 %v258
    %v1499 = vunpack.c.l.b16 %v259
    %v1500 = vunpack.c.h.b16 %v259
    %v1501 = vunpack.c.l.b16 %v260
    %v1502 = vunpack.c.h.b16 %v260
    %v1503 = vunpack.c.l.b16 %v261
    %v1504 = vunpack.c.h.b16 %v261
    %v1505 = vunpack.c.l.b16 %v262
    %v1506 = vunpack.c.h.b16 %v262
    %v1507 = vunpack.c.l.b16 %v263
    %v1508 = vunpack.c.h.b16 %v263
    %v1509 = vunpack.c.l.b16 %v264
    %v1510 = vunpack.c.h.b16 %v264
    %v1511 = vunpack.c.l.b16 %v265
    %v1512 = vunpack.c.h.b16 %v265
    %v1513 = vunpack.c.l.b16 %v266
    %v1514 = vunpack.c.h.b16 %v266
    %v1515 = vunpack.c.l.b16 %v267
    %v1516 = vunpack.c.h.b16 %v267
    %v1517 = vunpack.c.l.b16 %v268
    %v1518 = vunpack.c.h.b16 %v268
    %v1519 = vunpack.c.l.b16 %v269
    %v1520 = vunpack.c.h.b16 %v269
    %v1521 = vunpack.c.l.b16 %v270
    %v1522 = vunpack.c.h.b16 %v270
    %v1523 = vunpack.c.l.b16 %v271
    %v1524 = vunpack.c.h.b16 %v271
    %v1525 = vunpack.c.l.b16 %v272
    %v1526 = vunpack.c.h.b16 %v272
    %v1527 = vunpack.c.l.b16 %v273
    %v1528 = vunpack.c.h.b16 %v273
    %v1529 = vunpack.c.l.b16 %v274
    %v1530 = vunpack.c.h.b16 %v274
    %v1531 = vunpack.c.l.b16 %v275
    %v1532 = vunpack.c.h.b16 %v275
    %v1533 = vunpack.c.l.b16 %v276
    %v1534 = vunpack.c.h.b16 %v276
    %v1535 = vunpack.c.l.b16 %v277
    %v1536 = vunpack.c.h.b16 %v277
    %v1537 = vunpack.c.l.b16 %v278
    %v1538 = vunpack.c.h.b16 %v278
    %v1539 = vunpack.c.l.b16 %v279
    %v1540 = vunpack.c.h.b16 %v279
    %v1541 = vunpack.c.l.b16 %v280
    %v1542 = vunpack.c.h.b16 %v280
    %v1543 = vunpack.c.l.b16 %v281
    %v1544 = vunpack.c.h.b16 %v281
    %v1545 = vunpack.c.l.b16 %v282
    %v1546 = vunpack.c.h.b16 %v282
    %v1547 = vunpack.c.l.b16 %v283
    %v1548 = vunpack.c.h.b16 %v283
    %v1549 = vunpack.c.l.b16 %v284
    %v1550 = vunpack.c.h.b16 %v284
    %v1551 = vunpack.c.l.b16 %v285
    %v1552 = vunpack.c.h.b16 %v285
    %v1553 = vunpack.c.l.b16 %v286
    %v1554 = vunpack.c.h.b16 %v286
    %v1555 = vunpack.c.l.b16 %v287
    %v1556 = vunpack.c.h.b16 %v287
    %v1557 = vunpack.c.l.b16 %v288
    %v1558 = vunpack.c.h.b16 %v288
    %v1559 = vunpack.c.l.b16 %v289
    %v1560 = vunpack.c.h.b16 %v289
    %v1561 = vunpack.c.l.b16 %v290
    %v1562 = vunpack.c.h.b16 %v290
    %v1563 = vunpack.c.l.b16 %v291
    %v1564 = vunpack.c.h.b16 %v291
    %v1565 = vunpack.c.l.b16 %v292
    %v1566 = vunpack.c.h.b16 %v292
    %v1567 = vunpack.c.l.b16 %v293
    %v1568 = vunpack.c.h.b16 %v293
    %v1569 = vunpack.c.l.b16 %v294
    %v1570 = vunpack.c.h.b16 %v294
    %v1571 = vunpack.c.l.b16 %v295
    %v1572 = vunpack.c.h.b16 %v295
    %v1573 = vunpack.c.l.b16 %v296
    %v1574 = vunpack.c.h.b16 %v296
    %v1575 = vunpack.c.l.b16 %v297
    %v1576 = vunpack.c.h.b16 %v297
    %v1577 = vunpack.c.l.b16 %v298
    %v1578 = vunpack.c.h.b16 %v298
    %v1579 = vunpack.c.l.b16 %v299
    %v1580 = vunpack.c.h.b16 %v299
    %v1581 = vunpack.c.l.b16 %v300
    %v1582 = vunpack.c.h.b16 %v300
    %v1583 = vunpack.c.l.b16 %v301
    %v1584 = vunpack.c.h.b16 %v301
    %v1585 = vunpack.c.l.b16 %v302
    %v1586 = vunpack.c.h.b16 %v302
    %v1587 = vunpack.c.l.b16 %v303
    %v1588 = vunpack.c.h.b16 %v303
    %v1589 = vunpack.c.l.b16 %v304
    %v1590 = vunpack.c.h.b16 %v304
    %v1591 = vunpack.c.l.b16 %v305
    %v1592 = vunpack.c.h.b16 %v305
    %v1593 = vunpack.c.l.b16 %v306
    %v1594 = vunpack.c.h.b16 %v306
    %v1595 = vunpack.c.l.b16 %v307
    %v1596 = vunpack.c.h.b16 %v307
    %v1597 = vunpack.c.l.b16 %v308
    %v1598 = vunpack.c.h.b16 %v308
    %v1599 = vunpack.c.l.b16 %v309
    %v1600 = vunpack.c.h.b16 %v309
    %v1601 = vunpack.c.l.b16 %v310
    %v1602 = vunpack.c.h.b16 %v310
    %v1603 = vunpack.c.l.b16 %v311
    %v1604 = vunpack.c.h.b16 %v311
    %v1605 = vunpack.c.l.b16 %v312
    %v1606 = vunpack.c.h.b16 %v312
    %v1607 = vunpack.c.l.b16 %v313
    %v1608 = vunpack.c.h.b16 %v313
    %v1609 = vunpack.c.l.b16 %v314
    %v1610 = vunpack.c.h.b16 %v314
    %v1611 = vunpack.c.l.b16 %v315
    %v1612 = vunpack.c.h.b16 %v315
    %v1613 = vunpack.c.l.b16 %v316
    %v1614 = vunpack.c.h.b16 %v316
    %v1615 = vunpack.c.l.b16 %v317
    %v1616 = vunpack.c.h.b16 %v317
    %v1617 = vunpack.c.l.b16 %v318
    %v1618 = vunpack.c.h.b16 %v318
    %v1619 = vunpack.c.l.b16 %v319
    %v1620 = vunpack.c.h.b16 %v319
    %v1621 = vunpack.c.l.b16 %v320
    %v1622 = vunpack.c.h.b16 %v320
    %v1623 = vunpack.c.l.b16 %v321
    %v1624 = vunpack.c.h.b16 %v321
    %v1625 = vunpack.c.l.b16 %v322
    %v1626 = vunpack.c.h.b16 %v322
    %v1627 = vunpack.c.l.b16 %v323
    %v1628 = vunpack.c.h.b16 %v323
    %v1629 = vunpack.c.l.b16 %v324
    %v1630 = vunpack.c.h.b16 %v324
    %v1631 = vunpack.c.l.b16 %v325
    %v1632 = vunpack.c.h.b16 %v325
    %v1633 = vunpack.c.l.b16 %v326
    %v1634 = vunpack.c.h.b16 %v326
    %v1635 = vunpack.c.l.b16 %v327
    %v1636 = vunpack.c.h.b16 %v327
    %v1637 = vunpack.c.l.b16 %v328
    %v1638 = vunpack.c.h.b16 %v328
    %v1639 = vunpack.c.l.b16 %v329
    %v1640 = vunpack.c.h.b16 %v329
    %v1641 = vunpack.c.l.b16 %v330
    %v1642 = vunpack.c.h.b16 %v330
    %v1643 = vunpack.c.l.b16 %v331
    %v1644 = vunpack.c.h.b16 %v331
    %v1645 = vunpack.c.l.b16 %v332
    %v1646 = vunpack.c.h.b16 %v332
    %v1647 = vunpack.c.l.b16 %v333
    %v1648 = vunpack.c.h.b16 %v333
    %v1649 = vunpack.c.l.b16 %v334
    %v1650 = vunpack.c.h.b16 %v334
    %v1651 = vunpack.c.l.b16 %v335
    %v1652 = vunpack.c.h.b16 %v335
    %v1653 = vunpack.c.l.b16 %v336
    %v1654 = vunpack.c.h.b16 %v336
    %v1655 = vunpack.c.l.b16 %v337
    %v1656 = vunpack.c.h.b16 %v337
    %v1657 = vunpack.c.l.b16 %v338
    %v1658 = vunpack.c.h.b16 %v338
    %v1659 = vunpack.c.l.b16 %v339
    %v1660 = vunpack.c.h.b16 %v339
    %v1661 = vunpack.c.l.b16 %v340
    %v1662 = vunpack.c.h.b16 %v340
    %v1663 = vunpack.c.l.b16 %v341
    %v1664 = vunpack.c.h.b16 %v341
    %v1665 = vunpack.c.l.b16 %v342
    %v1666 = vunpack.c.h.b16 %v342
    %v1667 = vunpack.c.l.b16 %v343
    %v1668 = vunpack.c.h.b16 %v343
    %v1669 = vunpack.c.l.b16 %v344
    %v1670 = vunpack.c.h.b16 %v344
    %v1671 = vunpack.c.l.b16 %v345
    %v1672 = vunpack.c.h.b16 %v345
    %v1673 = vunpack.c.l.b16 %v346
    %v1674 = vunpack.c.h.b16 %v346
    %v1675 = vunpack.c.l.b16 %v347
    %v1676 = vunpack.c.h.b16 %v347
    %v1677 = vunpack.c.l.b16 %v348
    %v1678 = vunpack.c.h.b16 %v348
    %v1679 = vunpack.c.l.b16 %v349
    %v1680 = vunpack.c.h.b16 %v349
    %v1681 = vunpack.c.l.b16 %v350
    %v1682 = vunpack.c.h.b16 %v350
    %v1683 = vunpack.c.l.b16 %v351
    %v1684 = vunpack.c.h.b16 %v351
    %v1685 = vunpack.c.l.b16 %v352
    %v1686 = vunpack.c.h.b16 %v352
    %v1687 = vunpack.c.l.b16 %v353
    %v1688 = vunpack.c.h.b16 %v353
    %v1689 = vunpack.c.l.b16 %v354
    %v1690 = vunpack.c.h.b16 %v354
    %v1691 = vunpack.c.l.b16 %v355
    %v1692 = vunpack.c.h.b16 %v355
    %v1693 = vunpack.c.l.b16 %v356
    %v1694 = vunpack.c.h.b16 %v356
    %v1695 = vunpack.c.l.b16 %v357
    %v1696 = vunpack.c.h.b16 %v357
    %v1697 = vunpack.c.l.b16 %v358
    %v1698 = vunpack.c.h.b16 %v358
    %v1699 = vunpack.c.l.b16 %v359
    %v1700 = vunpack.c.h.b16 %v359
    %v1701 = vunpack.c.l.b16 %v360
    %v1702 = vunpack.c.h.b16 %v360
    %v1703 = vunpack.c.l.b16 %v361
    %v1704 = vunpack.c.h.b16 %v361
    %v1705 = vunpack.c.l.b16 %v362
    %v1706 = vunpack.c.h.b16 %v362
    %v1707 = vunpack.c.l.b16 %v363
    %v1708 = vunpack.c.h.b16 %v363
    %v1709 = vunpack.c.l.b16 %v364
    %v1710 = vunpack.c.h.b16 %v364
    %v1711 = vunpack.c.l.b16 %v365
    %v1712 = vunpack.c.h.b16 %v365
    %v1713 = vunpack.c.l.b16 %v366
    %v1714 = vunpack.c.h.b16 %v366
    %v1715 = vunpack.c.l.b16 %v367
    %v1716 = vunpack.c.h.b16 %v367
    %v1717 = vunpack.c.l.b16 %v368
    %v1718 = vunpack.c.h.b16 %v368
    %v1719 = vunpack.c.l.b16 %v369
    %v1720 = vunpack.c.h.b16 %v369
    %v1721 = vunpack.c.l.b16 %v370
    %v1722 = vunpack.c.h.b16 %v370
    %v1723 = vunpack.c.l.b16 %v371
    %v1724 = vunpack.c.h.b16 %v371
    %v1725 = vunpack.c.l.b16 %v372
    %v1726 = vunpack.c.h.b16 %v372
    %v1727 = vunpack.c.l.b16 %v373
    %v1728 = vunpack.c.h.b16 %v373
    %v1729 = vunpack.c.l.b16 %v374
    %v1730 = vunpack.c.h.b16 %v374
    %v1731 = vunpack.c.l.b16 %v375
    %v1732 = vunpack.c.h.b16 %v375
    %v1733 = vunpack.c.l.b16 %v376
    %v1734 = vunpack.c.h.b16 %v376
    %v1735 = vunpack.c.l.b16 %v377
    %v1736 = vunpack.c.h.b16 %v377
    %v1737 = vunpack.c.l.b16 %v378
    %v1738 = vunpack.c.h.b16 %v378
    %v1739 = vunpack.c.l.b16 %v379
    %v1740 = vunpack.c.h.b16 %v379
    %v1741 = vunpack.c.l.b16 %v380
    %v1742 = vunpack.c.h.b16 %v380
    %v1743 = vunpack.c.l.b16 %v381
    %v1744 = vunpack.c.h.b16 %v381
    %v1745 = vunpack.c.l.b16 %v382
    %v1746 = vunpack.c.h.b16 %v382
    %v1747 = vunpack.c.l.b16 %v383
    %v1748 = vunpack.c.h.b16 %v383
    %v1749 = vunpack.c.l.b16 %v384
    %v1750 = vunpack.c.h.b16 %v384
    %v1751 = vunpack.c.l.b16 %v385
    %v1752 = vunpack.c.h.b16 %v385
    %v1753 = vunpack.c.l.b16 %v386
    %v1754 = vunpack.c.h.b16 %v386
    %v1755 = vunpack.c.l.b16 %v387
    %v1756 = vunpack.c.h.b16 %v387
    %v1757 = vunpack.c.l.b16 %v388
    %v1758 = vunpack.c.h.b16 %v388
    %v1759 = vunpack.c.l.b16 %v389
    %v1760 = vunpack.c.h.b16 %v389
    %v1761 = vunpack.c.l.b16 %v390
    %v1762 = vunpack.c.h.b16 %v390
    %v1763 = vunpack.c.l.b16 %v391
    %v1764 = vunpack.c.h.b16 %v391
    %v1765 = vunpack.c.l.b16 %v392
    %v1766 = vunpack.c.h.b16 %v392
    %v1767 = vunpack.c.l.b16 %v393
    %v1768 = vunpack.c.h.b16 %v393
    %v1769 = vunpack.c.l.b16 %v394
    %v1770 = vunpack.c.h.b16 %v394
    %v1771 = vunpack.c.l.b16 %v395
    %v1772 = vunpack.c.h.b16 %v395
    %v1773 = vunpack.c.l.b16 %v396
    %v1774 = vunpack.c.h.b16 %v396
    %v1775 = vunpack.c.l.b16 %v397
    %v1776 = vunpack.c.h.b16 %v397
    %v1777 = vunpack.c.l.b16 %v398
    %v1778 = vunpack.c.h.b16 %v398
    %v1779 = vunpack.c.l.b16 %v399
    %v1780 = vunpack.c.h.b16 %v399
    %v1781 = vunpack.c.l.b16 %v400
    %v1782 = vunpack.c.h.b16 %v400
    %v1783 = vunpack.c.l.b16 %v401
    %v1784 = vunpack.c.h.b16 %v401
    %v1785 = vunpack.c.l.b16 %v402
    %v1786 = vunpack.c.h.b16 %v402
    %v1787 = vunpack.c.l.b16 %v403
    %v1788 = vunpack.c.h.b16 %v403
    %v1789 = vunpack.c.l.b16 %v404
    %v1790 = vunpack.c.h.b16 %v404
    %v1791 = vunpack.c.l.b16 %v405
    %v1792 = vunpack.c.h.b16 %v405
    %v1793 = vunpack.c.l.b16 %v406
    %v1794 = vunpack.c.h.b16 %v406
    %v1795 = vunpack.c.l.b16 %v407
    %v1796 = vunpack.c.h.b16 %v407
    %v1797 = vunpack.c.l.b16 %v408
    %v1798 = vunpack.c.h.b16 %v408
    %v1799 = vunpack.c.l.b16 %v409
    %v1800 = vunpack.c.h.b16 %v409
    %v1801 = vunpack.c.l.b16 %v410
    %v1802 = vunpack.c.h.b16 %v410
    %v1803 = vunpack.c.l.b16 %v411
    %v1804 = vunpack.c.h.b16 %v411
    %v1805 = vunpack.c.l.b16 %v412
    %v1806 = vunpack.c.h.b16 %v412
    %v1807 = vunpack.c.l.b16 %v413
    %v1808 = vunpack.c.h.b16 %v413
    %v1809 = vunpack.c.l.b16 %v414
    %v1810 = vunpack.c.h.b16 %v414
    %v1811 = vunpack.c.l.b16 %v415
    %v1812 = vunpack.c.h.b16 %v415
    %v1813 = vunpack.c.l.b16 %v416
    %v1814 = vunpack.c.h.b16 %v416
    %v1815 = vunpack.c.l.b16 %v417
    %v1816 = vunpack.c.h.b16 %v417
    %v1817 = vunpack.c.l.b16 %v418
    %v1818 = vunpack.c.h.b16 %v418
    %v1819 = vunpack.c.l.b16 %v419
    %v1820 = vunpack.c.h.b16 %v419
    %v1821 = vunpack.c.l.b16 %v420
    %v1822 = vunpack.c.h.b16 %v420
    %v1823 = vunpack.c.l.b16 %v421
    %v1824 = vunpack.c.h.b16 %v421
    %v1825 = vunpack.c.l.b16 %v422
    %v1826 = vunpack.c.h.b16 %v422
    %v1827 = vunpack.c.l.b16 %v423
    %v1828 = vunpack.c.h.b16 %v423
    %v1829 = vunpack.c.l.b16 %v424
    %v1830 = vunpack.c.h.b16 %v424
    %v1831 = vunpack.c.l.b16 %v425
    %v1832 = vunpack.c.h.b16 %v425
    %v1833 = vunpack.c.l.b16 %v426
    %v1834 = vunpack.c.h.b16 %v426
    %v1835 = vunpack.c.l.b16 %v427
    %v1836 = vunpack.c.h.b16 %v427
    %v1837 = vunpack.c.l.b16 %v428
    %v1838 = vunpack.c.h.b16 %v428
    %v1839 = vunpack.c.l.b16 %v429
    %v1840 = vunpack.c.h.b16 %v429
    %v1841 = vunpack.c.l.b16 %v430
    %v1842 = vunpack.c.h.b16 %v430
    %v1843 = vunpack.c.l.b16 %v431
    %v1844 = vunpack.c.h.b16 %v431
    %v1845 = vunpack.c.l.b16 %v432
    %v1846 = vunpack.c.h.b16 %v432
    %v1847 = vunpack.c.l.b16 %v433
    %v1848 = vunpack.c.h.b16 %v433
    %v1849 = vunpack.c.l.b16 %v434
    %v1850 = vunpack.c.h.b16 %v434
    %v1851 = vunpack.c.l.b16 %v435
    %v1852 = vunpack.c.h.b16 %v435
    %v1853 = vunpack.c.l.b16 %v436
    %v1854 = vunpack.c.h.b16 %v436
    %v1855 = vunpack.c.l.b16 %v437
    %v1856 = vunpack.c.h.b16 %v437
    %v1857 = vunpack.c.l.b16 %v438
    %v1858 = vunpack.c.h.b16 %v438
    %v1859 = vunpack.c.l.b16 %v439
    %v1860 = vunpack.c.h.b16 %v439
    %v1861 = vunpack.c.l.b16 %v440
    %v1862 = vunpack.c.h.b16 %v440
    %v1863 = vunpack.c.l.b16 %v441
    %v1864 = vunpack.c.h.b16 %v441
    %v1865 = vunpack.c.l.b16 %v442
    %v1866 = vunpack.c.h.b16 %v442
    %v1867 = vunpack.c.l.b16 %v443
    %v1868 = vunpack.c.h.b16 %v443
    %v1869 = vunpack.c.l.b16 %v444
    %v1870 = vunpack.c.h.b16 %v444
    %v1871 = vunpack.c.l.b16 %v445
    %v1872 = vunpack.c.h.b16 %v445
    %v1873 = vunpack.c.l.b16 %v446
    %v1874 = vunpack.c.h.b16 %v446
    %v1875 = vunpack.c.l.b16 %v447
    %v1876 = vunpack.c.h.b16 %v447
    %v1877 = vunpack.c.l.b16 %v448
    %v1878 = vunpack.c.h.b16 %v448
    %v1879 = vpack.c.b16 %v1371, %v1367
    %v1880 = vpack.c.b16 %v1372, %v1368
    %v1881 = vpack.c.b16 %v1373, %v1369
    %v1882 = vpack.c.b16 %v1374, %v1370
    %v1883 = vpack.c.b16 %v1379, %v1375
    %v1884 = vpack.c.b16 %v1380, %v1376
    %v1885 = vpack.c.b16 %v1381, %v1377
    %v1886 = vpack.c.b16 %v1382, %v1378
    %v1887 = vpack.c.b16 %v1387, %v1383
    %v1888 = vpack.c.b16 %v1388, %v1384
    %v1889 = vpack.c.b16 %v1389, %v1385
    %v1890 = vpack.c.b16 %v1390, %v1386
    %v1891 = vpack.c.b16 %v1395, %v1391
    %v1892 = vpack.c.b16 %v1396, %v1392
    %v1893 = vpack.c.b16 %v1397, %v1393
    %v1894 = vpack.c.b16 %v1398, %v1394
    %v1895 = vpack.c.b16 %v1403, %v1399
    %v1896 = vpack.c.b16 %v1404, %v1400
    %v1897 = vpack.c.b16 %v1405, %v1401
    %v1898 = vpack.c.b16 %v1406, %v1402
    %v1899 = vpack.c.b16 %v1411, %v1407
    %v1900 = vpack.c.b16 %v1412, %v1408
    %v1901 = vpack.c.b16 %v1413, %v1409
    %v1902 = vpack.c.b16 %v1414, %v1410
    %v1903 = vpack.c.b16 %v1419, %v1415
    %v1904 = vpack.c.b16 %v1420, %v1416
    %v1905 = vpack.c.b16 %v1421, %v1417
    %v1906 = vpack.c.b16 %v1422, %v1418
    %v1907 = vpack.c.b16 %v1427, %v1423
    %v1908 = vpack.c.b16 %v1428, %v1424
    %v1909 = vpack.c.b16 %v1429, %v1425
    %v1910 = vpack.c.b16 %v1430, %v1426
    %v1911 = vpack.c.b16 %v1435, %v1431
    %v1912 = vpack.c.b16 %v1436, %v1432
    %v1913 = vpack.c.b16 %v1437, %v1433
    %v1914 = vpack.c.b16 %v1438, %v1434
    %v1915 = vpack.c.b16 %v1443, %v1439
    %v1916 = vpack.c.b16 %v1444, %v1440
    %v1917 = vpack.c.b16 %v1445, %v1441
    %v1918 = vpack.c.b16 %v1446, %v1442
    %v1919 = vpack.c.b16 %v1451, %v1447
    %v1920 = vpack.c.b16 %v1452, %v1448
    %v1921 = vpack.c.b16 %v1453, %v1449
    %v1922 = vpack.c.b16 %v1454, %v1450
    %v1923 = vpack.c.b16 %v1459, %v1455
    %v1924 = vpack.c.b16 %v1460, %v1456
    %v1925 = vpack.c.b16 %v1461, %v1457
    %v1926 = vpack.c.b16 %v1462, %v1458
    %v1927 = vpack.c.b16 %v1467, %v1463
    %v1928 = vpack.c.b16 %v1468, %v1464
    %v1929 = vpack.c.b16 %v1469, %v1465
    %v1930 = vpack.c.b16 %v1470, %v1466
    %v1931 = vpack.c.b16 %v1475, %v1471
    %v1932 = vpack.c.b16 %v1476, %v1472
    %v1933 = vpack.c.b16 %v1477, %v1473
    %v1934 = vpack.c.b16 %v1478, %v1474
    %v1935 = vpack.c.b16 %v1483, %v1479
    %v1936 = vpack.c.b16 %v1484, %v1480
    %v1937 = vpack.c.b16 %v1485, %v1481
    %v1938 = vpack.c.b16 %v1486, %v1482
    %v1939 = vpack.c.b16 %v1491, %v1487
    %v1940 = vpack.c.b16 %v1492, %v1488
    %v1941 = vpack.c.b16 %v1493, %v1489
    %v1942 = vpack.c.b16 %v1494, %v1490
    %v1943 = vpack.c.b16 %v1499, %v1495
    %v1944 = vpack.c.b16 %v1500, %v1496
    %v1945 = vpack.c.b16 %v1501, %v1497
    %v1946 = vpack.c.b16 %v1502, %v1498
    %v1947 = vpack.c.b16 %v1507, %v1503
    %v1948 = vpack.c.b16 %v1508, %v1504
    %v1949 = vpack.c.b16 %v1509, %v1505
    %v1950 = vpack.c.b16 %v1510, %v1506
    %v1951 = vpack.c.b16 %v1515, %v1511
    %v1952 = vpack.c.b16 %v1516, %v1512
    %v1953 = vpack.c.b16 %v1517, %v1513
    %v1954 = vpack.c.b16 %v1518, %v1514
    %v1955 = vpack.c.b16 %v1523, %v1519
    %v1956 = vpack.c.b16 %v1524, %v1520
    %v1957 = vpack.c.b16 %v1525, %v1521
    %v1958 = vpack.c.b16 %v1526, %v1522
    %v1959 = vpack.c.b16 %v1531, %v1527
    %v1960 = vpack.c.b16 %v1532, %v1528
    %v1961 = vpack.c.b16 %v1533, %v1529
    %v1962 = vpack.c.b16 %v1534, %v1530
    %v1963 = vpack.c.b16 %v1539, %v1535
    %v1964 = vpack.c.b16 %v1540, %v1536
    %v1965 = vpack.c.b16 %v1541, %v1537
    %v1966 = vpack.c.b16 %v1542, %v1538
    %v1967 = vpack.c.b16 %v1547, %v1543
    %v1968 = vpack.c.b16 %v1548, %v1544
    %v1969 = vpack.c.b16 %v1549, %v1545
    %v1970 = vpack.c.b16 %v1550, %v1546
    %v1971 = vpack.c.b16 %v1555, %v1551
    %v1972 = vpack.c.b16 %v1556, %v1552
    %v1973 = vpack.c.b16 %v1557, %v1553
    %v1974 = vpack.c.b16 %v1558, %v1554
    %v1975 = vpack.c.b16 %v1563, %v1559
    %v1976 = vpack.c.b16 %v1564, %v1560
    %v1977 = vpack.c.b16 %v1565, %v1561
    %v1978 = vpack.c.b16 %v1566, %v1562
    %v1979 = vpack.c.b16 %v1571, %v1567
    %v1980 = vpack.c.b16 %v1572, %v1568
    %v1981 = vpack.c.b16 %v1573, %v1569
    %v1982 = vpack.c.b16 %v1574, %v1570
    %v1983 = vpack.c.b16 %v1579, %v1575
    %v1984 = vpack.c.b16 %v1580, %v1576
    %v1985 = vpack.c.b16 %v1581, %v1577
    %v1986 = vpack.c.b16 %v1582, %v1578
    %v1987 = vpack.c.b16 %v1587, %v1583
    %v1988 = vpack.c.b16 %v1588, %v1584
    %v1989 = vpack.c.b16 %v1589, %v1585
    %v1990 = vpack.c.b16 %v1590, %v1586
    %v1991 = vpack.c.b16 %v1595, %v1591
    %v1992 = vpack.c.b16 %v1596, %v1592
    %v1993 = vpack.c.b16 %v1597, %v1593
    %v1994 = vpack.c.b16 %v1598, %v1594
    %v1995 = vpack.c.b16 %v1603, %v1599
    %v1996 = vpack.c.b16 %v1604, %v1600
    %v1997 = vpack.c.b16 %v1605, %v1601
    %v1998 = vpack.c.b16 %v1606, %v1602
    %v1999 = vpack.c.b16 %v1611, %v1607
    %v2000 = vpack.c.b16 %v1612, %v1608
    %v2001 = vpack.c.b16 %v1613, %v1609
    %v2002 = vpack.c.b16 %v1614, %v1610
    %v2003 = vpack.c.b16 %v1619, %v1615
    %v2004 = vpack.c.b16 %v1620, %v1616
    %v2005 = vpack.c.b16 %v1621, %v1617
    %v2006 = vpack.c.b16 %v1622, %v1618
    %v2007 = vpack.c.b16 %v1627, %v1623
    %v2008 = vpack.c.b16 %v1628, %v1624
    %v2009 = vpack.c.b16 %v1629, %v1625
    %v2010 = vpack.c.b16 %v1630, %v1626
    %v2011 = vpack.c.b16 %v1635, %v1631
    %v2012 = vpack.c.b16 %v1636, %v1632
    %v2013 = vpack.c.b16 %v1637, %v1633
    %v2014 = vpack.c.b16 %v1638, %v1634
    %v2015 = vpack.c.b16 %v1643, %v1639
    %v2016 = vpack.c.b16 %v1644, %v1640
    %v2017 = vpack.c.b16 %v1645, %v1641
    %v2018 = vpack.c.b16 %v1646, %v1642
    %v2019 = vpack.c.b16 %v1651, %v1647
    %v2020 = vpack.c.b16 %v1652, %v1648
    %v2021 = vpack.c.b16 %v1653, %v1649
    %v2022 = vpack.c.b16 %v1654, %v1650
    %v2023 = vpack.c.b16 %v1659, %v1655
    %v2024 = vpack.c.b16 %v1660, %v1656
    %v2025 = vpack.c.b16 %v1661, %v1657
    %v2026 = vpack.c.b16 %v1662, %v1658
    %v2027 = vpack.c.b16 %v1667, %v1663
    %v2028 = vpack.c.b16 %v1668, %v1664
    %v2029 = vpack.c.b16 %v1669, %v1665
    %v2030 = vpack.c.b16 %v1670, %v1666
    %v2031 = vpack.c.b16 %v1675, %v1671
    %v2032 = vpack.c.b16 %v1676, %v1672
    %v2033 = vpack.c.b16 %v1677, %v1673
    %v2034 = vpack.c.b16 %v1678, %v1674
    %v2035 = vpack.c.b16 %v1683, %v1679
    %v2036 = vpack.c.b16 %v1684, %v1680
    %v2037 = vpack.c.b16 %v1685, %v1681
    %v2038 = vpack.c.b16 %v1686, %v1682
    %v2039 = vpack.c.b16 %v1691, %v1687
    %v2040 = vpack.c.b16 %v1692, %v1688
    %v2041 = vpack.c.b16 %v1693, %v1689
    %v2042 = vpack.c.b16 %v1694, %v1690
    %v2043 = vpack.c.b16 %v1699, %v1695
    %v2044 = vpack.c.b16 %v1700, %v1696
    %v2045 = vpack.c.b16 %v1701, %v1697
    %v2046 = vpack.c.b16 %v1702, %v1698
    %v2047 = vpack.c.b16 %v1707, %v1703
    %v2048 = vpack.c.b16 %v1708, %v1704
    %v2049 = vpack.c.b16 %v1709, %v1705
    %v2050 = vpack.c.b16 %v1710, %v1706
    %v2051 = vpack.c.b16 %v1715, %v1711
    %v2052 = vpack.c.b16 %v1716, %v1712
    %v2053 = vpack.c.b16 %v1717, %v1713
    %v2054 = vpack.c.b16 %v1718, %v1714
    %v2055 = vpack.c.b16 %v1723, %v1719
    %v2056 = vpack.c.b16 %v1724, %v1720
    %v2057 = vpack.c.b16 %v1725, %v1721
    %v2058 = vpack.c.b16 %v1726, %v1722
    %v2059 = vpack.c.b16 %v1731, %v1727
    %v2060 = vpack.c.b16 %v1732, %v1728
    %v2061 = vpack.c.b16 %v1733, %v1729
    %v2062 = vpack.c.b16 %v1734, %v1730
    %v2063 = vpack.c.b16 %v1739, %v1735
    %v2064 = vpack.c.b16 %v1740, %v1736
    %v2065 = vpack.c.b16 %v1741, %v1737
    %v2066 = vpack.c.b16 %v1742, %v1738
    %v2067 = vpack.c.b16 %v1747, %v1743
    %v2068 = vpack.c.b16 %v1748, %v1744
    %v2069 = vpack.c.b16 %v1749, %v1745
    %v2070 = vpack.c.b16 %v1750, %v1746
    %v2071 = vpack.c.b16 %v1755, %v1751
    %v2072 = vpack.c.b16 %v1756, %v1752
    %v2073 = vpack.c.b16 %v1757, %v1753
    %v2074 = vpack.c.b16 %v1758, %v1754
    %v2075 = vpack.c.b16 %v1763, %v1759
    %v2076 = vpack.c.b16 %v1764, %v1760
    %v2077 = vpack.c.b16 %v1765, %v1761
    %v2078 = vpack.c.b16 %v1766, %v1762
    %v2079 = vpack.c.b16 %v1771, %v1767
    %v2080 = vpack.c.b16 %v1772, %v1768
    %v2081 = vpack.c.b16 %v1773, %v1769
    %v2082 = vpack.c.b16 %v1774, %v1770
    %v2083 = vpack.c.b16 %v1779, %v1775
    %v2084 = vpack.c.b16 %v1780, %v1776
    %v2085 = vpack.c.b16 %v1781, %v1777
    %v2086 = vpack.c.b16 %v1782, %v1778
    %v2087 = vpack.c.b16 %v1787, %v1783
    %v2088 = vpack.c.b16 %v1788, %v1784
    %v2089 = vpack.c.b16 %v1789, %v1785
    %v2090 = vpack.c.b16 %v1790, %v1786
    %v2091 = vpack.c.b16 %v1795, %v1791
    %v2092 = vpack.c.b16 %v1796, %v1792
    %v2093 = vpack.c.b16 %v1797, %v1793
    %v2094 = vpack.c.b16 %v1798, %v1794
    %v2095 = vpack.c.b16 %v1803, %v1799
    %v2096 = vpack.c.b16 %v1804, %v1800
    %v2097 = vpack.c.b16 %v1805, %v1801
    %v2098 = vpack.c.b16 %v1806, %v1802
    %v2099 = vpack.c.b16 %v1811, %v1807
    %v2100 = vpack.c.b16 %v1812, %v1808
    %v2101 = vpack.c.b16 %v1813, %v1809
    %v2102 = vpack.c.b16 %v1814, %v1810
    %v2103 = vpack.c.b16 %v1819, %v1815
    %v2104 = vpack.c.b16 %v1820, %v1816
    %v2105 = vpack.c.b16 %v1821, %v1817
    %v2106 = vpack.c.b16 %v1822, %v1818
    %v2107 = vpack.c.b16 %v1827, %v1823
    %v2108 = vpack.c.b16 %v1828, %v1824
    %v2109 = vpack.c.b16 %v1829, %v1825
    %v2110 = vpack.c.b16 %v1830, %v1826
    %v2111 = vpack.c.b16 %v1835, %v1831
    %v2112 = vpack.c.b16 %v1836, %v1832
    %v2113 = vpack.c.b16 %v1837, %v1833
    %v2114 = vpack.c.b16 %v1838, %v1834
    %v2115 = vpack.c.b16 %v1843, %v1839
    %v2116 = vpack.c.b16 %v1844, %v1840
    %v2117 = vpack.c.b16 %v1845, %v1841
    %v2118 = vpack.c.b16 %v1846, %v1842
    %v2119 = vpack.c.b16 %v1851, %v1847
    %v2120 = vpack.c.b16 %v1852, %v1848
    %v2121 = vpack.c.b16 %v1853, %v1849
    %v2122 = vpack.c.b16 %v1854, %v1850
    %v2123 = vpack.c.b16 %v1859, %v1855
    %v2124 = vpack.c.b16 %v1860, %v1856
    %v2125 = vpack.c.b16 %v1861, %v1857
    %v2126 = vpack.c.b16 %v1862, %v1858
    %v2127 = vpack.c.b16 %v1867, %v1863
    %v2128 = vpack.c.b16 %v1868, %v1864
    %v2129 = vpack.c.b16 %v1869, %v1865
    %v2130 = vpack.c.b16 %v1870, %v1866
    %v2131 = vpack.c.b16 %v1875, %v1871
    %v2132 = vpack.c.b16 %v1876, %v1872
    %v2133 = vpack.c.b16 %v1877, %v1873
    %v2134 = vpack.c.b16 %v1878, %v1874
    %2391 = vmatprep.subr.bf16.mxu0 %v1880
    %2392 = vmatpush1.bf16.msra.mxu0 %v1879
    %2393 = vmatprep.subr.bf16.mxu0 %v1884
    %2394 = vmatpush1.bf16.msra.mxu0 %v1883
    %2395 = vmatprep.subr.bf16.mxu0 %v1888
    %2396 = vmatpush1.bf16.msra.mxu0 %v1887
    %2397 = vmatprep.subr.bf16.mxu0 %v1892
    %2398 = vmatpush1.bf16.msra.mxu0 %v1891
    %2399 = vmatprep.subr.bf16.mxu0 %v1896
    %2400 = vmatpush1.bf16.msra.mxu0 %v1895
    %2401 = vmatprep.subr.bf16.mxu0 %v1900
    %2402 = vmatpush1.bf16.msra.mxu0 %v1899
    %2403 = vmatprep.subr.bf16.mxu0 %v1904
    %2404 = vmatpush1.bf16.msra.mxu0 %v1903
    %2405 = vmatprep.subr.bf16.mxu0 %v1908
    %2406 = vmatpush1.bf16.msra.mxu0 %v1907
    %2407 = vmatprep.subr.bf16.mxu0 %v1912
    %2408 = vmatpush1.bf16.msra.mxu0 %v1911
    %2409 = vmatprep.subr.bf16.mxu0 %v1916
    %2410 = vmatpush1.bf16.msra.mxu0 %v1915
    %2411 = vmatprep.subr.bf16.mxu0 %v1920
    %2412 = vmatpush1.bf16.msra.mxu0 %v1919
    %2413 = vmatprep.subr.bf16.mxu0 %v1924
    %2414 = vmatpush1.bf16.msra.mxu0 %v1923
    %2415 = vmatprep.subr.bf16.mxu0 %v1928
    %2416 = vmatpush1.bf16.msra.mxu0 %v1927
    %2417 = vmatprep.subr.bf16.mxu0 %v1932
    %2418 = vmatpush1.bf16.msra.mxu0 %v1931
    %2419 = vmatprep.subr.bf16.mxu0 %v1936
    %2420 = vmatpush1.bf16.msra.mxu0 %v1935
    %2421 = vmatprep.subr.bf16.mxu0 %v1940
    %2422 = vmatpush1.bf16.msra.mxu0 %v1939
    %2423 = vmatprep.mubr.bf16.mxu0 %v856
    %2424 = vmatmul.mubr.bf16.gmra.mrb[0].mxu0 %v855
    %v2425 = vpop.f32.mrb[0].mxu0
    %v2426 = vadd.f32 %v454, %v2425
    %v2427 = vpop.f32.mrb[0].mxu0
    %v2428 = vadd.f32 %v458, %v2427
    %v2429 = vpop.f32.mrb[0].mxu0
    %v2430 = vadd.f32 %v454, %v2429
    %v2431 = vpop.f32.mrb[0].mxu0
    %v2432 = vadd.f32 %v458, %v2431
    %2433 = vmatprep.mubr.bf16.mxu0 %v864
    %2434 = vmatmul.mubr.bf16.gmra.mrb[0].mxu0 %v863
    %v2435 = vpop.f32.mrb[0].mxu0
    %v2436 = vadd.f32 %v454, %v2435
    %v2437 = vpop.f32.mrb[0].mxu0
    %v2438 = vadd.f32 %v458, %v2437
    %v2439 = vpop.f32.mrb[0].mxu0
    %v2440 = vadd.f32 %v454, %v2439
    %v2441 = vpop.f32.mrb[0].mxu0
    %v2442 = vadd.f32 %v458, %v2441
    %2443 = vmatprep.mubr.bf16.mxu0 %v872
    %2444 = vmatmul.mubr.bf16.gmra.mrb[0].mxu0 %v871
    %v2445 = vpop.f32.mrb[0].mxu0
    %v2446 = vadd.f32 %v454, %v2445
    %v2447 = vpop.f32.mrb[0].mxu0
    %v2448 = vadd.f32 %v458, %v2447
    %v2449 = vpop.f32.mrb[0].mxu0
    %v2450 = vadd.f32 %v454, %v2449
    %v2451 = vpop.f32.mrb[0].mxu0
    %v2452 = vadd.f32 %v458, %v2451
    %2453 = vmatprep.mubr.bf16.mxu0 %v880
    %2454 = vmatmul.mubr.bf16.gmra.mrb[0].mxu0 %v879
    %v2455 = vpop.f32.mrb[0].mxu0
    %v2456 = vadd.f32 %v454, %v2455
    %v2457 = vpop.f32.mrb[0].mxu0
    %v2458 = vadd.f32 %v458, %v2457
    %v2459 = vpop.f32.mrb[0].mxu0
    %v2460 = vadd.f32 %v454, %v2459
    %v2461 = vpop.f32.mrb[0].mxu0
    %v2462 = vadd.f32 %v458, %v2461
    %2463 = vmatprep.mubr.bf16.mxu0 %v888
    %2464 = vmatmul.mubr.bf16.gmra.mrb[0].mxu0 %v887
    %v2465 = vpop.f32.mrb[0].mxu0
    %v2466 = vadd.f32 %v454, %v2465
    %v2467 = vpop.f32.mrb[0].mxu0
    %v2468 = vadd.f32 %v458, %v2467
    %v2469 = vpop.f32.mrb[0].mxu0
    %v2470 = vadd.f32 %v454, %v2469
    %v2471 = vpop.f32.mrb[0].mxu0
    %v2472 = vadd.f32 %v458, %v2471
    %2473 = vmatprep.mubr.bf16.mxu0 %v896
    %2474 = vmatmul.mubr.bf16.gmra.mrb[0].mxu0 %v895
    %v2475 = vpop.f32.mrb[0].mxu0
    %v2476 = vadd.f32 %v454, %v2475
    %v2477 = vpop.f32.mrb[0].mxu0
    %v2478 = vadd.f32 %v458, %v2477
    %v2479 = vpop.f32.mrb[0].mxu0
    %v2480 = vadd.f32 %v454, %v2479
    %v2481 = vpop.f32.mrb[0].mxu0
    %v2482 = vadd.f32 %v458, %v2481
    %2483 = vmatprep.mubr.bf16.mxu0 %v904
    %2484 = vmatmul.mubr.bf16.gmra.mrb[0].mxu0 %v903
    %v2485 = vpop.f32.mrb[0].mxu0
    %v2486 = vadd.f32 %v454, %v2485
    %v2487 = vpop.f32.mrb[0].mxu0
    %v2488 = vadd.f32 %v458, %v2487
    %v2489 = vpop.f32.mrb[0].mxu0
    %v2490 = vadd.f32 %v454, %v2489
    %v2491 = vpop.f32.mrb[0].mxu0
    %v2492 = vadd.f32 %v458, %v2491
    %2493 = vmatprep.mubr.bf16.mxu0 %v912
    %2494 = vmatmul.mubr.bf16.gmra.mrb[0].mxu0 %v911
    %v2495 = vpop.f32.mrb[0].mxu0
    %v2496 = vadd.f32 %v454, %v2495
    %v2497 = vpop.f32.mrb[0].mxu0
    %v2498 = vadd.f32 %v458, %v2497
    %v2499 = vpop.f32.mrb[0].mxu0
    %v2500 = vadd.f32 %v454, %v2499
    %v2501 = vpop.f32.mrb[0].mxu0
    %v2502 = vadd.f32 %v458, %v2501
    %2503 = vmatprep.mubr.bf16.mxu0 %v920
    %2504 = vmatmul.mubr.bf16.gmra.mrb[0].mxu0 %v919
    %v2505 = vpop.f32.mrb[0].mxu0
    %v2506 = vadd.f32 %v454, %v2505
    %v2507 = vpop.f32.mrb[0].mxu0
    %v2508 = vadd.f32 %v458, %v2507
    %v2509 = vpop.f32.mrb[0].mxu0
    %v2510 = vadd.f32 %v454, %v2509
    %v2511 = vpop.f32.mrb[0].mxu0
    %v2512 = vadd.f32 %v458, %v2511
    %2513 = vmatprep.mubr.bf16.mxu0 %v928
    %2514 = vmatmul.mubr.bf16.gmra.mrb[0].mxu0 %v927
    %v2515 = vpop.f32.mrb[0].mxu0
    %v2516 = vadd.f32 %v454, %v2515
    %v2517 = vpop.f32.mrb[0].mxu0
    %v2518 = vadd.f32 %v458, %v2517
    %v2519 = vpop.f32.mrb[0].mxu0
    %v2520 = vadd.f32 %v454, %v2519
    %v2521 = vpop.f32.mrb[0].mxu0
    %v2522 = vadd.f32 %v458, %v2521
    %2523 = vmatprep.mubr.bf16.mxu0 %v936
    %2524 = vmatmul.mubr.bf16.gmra.mrb[0].mxu0 %v935
    %v2525 = vpop.f32.mrb[0].mxu0
    %v2526 = vadd.f32 %v454, %v2525
    %v2527 = vpop.f32.mrb[0].mxu0
    %v2528 = vadd.f32 %v458, %v2527
    %v2529 = vpop.f32.mrb[0].mxu0
    %v2530 = vadd.f32 %v454, %v2529
    %v2531 = vpop.f32.mrb[0].mxu0
    %v2532 = vadd.f32 %v458, %v2531
    %2533 = vmatprep.mubr.bf16.mxu0 %v944
    %2534 = vmatmul.mubr.bf16.gmra.mrb[0].mxu0 %v943
    %v2535 = vpop.f32.mrb[0].mxu0
    %v2536 = vadd.f32 %v454, %v2535
    %v2537 = vpop.f32.mrb[0].mxu0
    %v2538 = vadd.f32 %v458, %v2537
    %v2539 = vpop.f32.mrb[0].mxu0
    %v2540 = vadd.f32 %v454, %v2539
    %v2541 = vpop.f32.mrb[0].mxu0
    %v2542 = vadd.f32 %v458, %v2541
    %2543 = vmatprep.mubr.bf16.mxu0 %v952
    %2544 = vmatmul.mubr.bf16.gmra.mrb[0].mxu0 %v951
    %v2545 = vpop.f32.mrb[0].mxu0
    %v2546 = vadd.f32 %v454, %v2545
    %v2547 = vpop.f32.mrb[0].mxu0
    %v2548 = vadd.f32 %v458, %v2547
    %v2549 = vpop.f32.mrb[0].mxu0
    %v2550 = vadd.f32 %v454, %v2549
    %v2551 = vpop.f32.mrb[0].mxu0
    %v2552 = vadd.f32 %v458, %v2551
    %2553 = vmatprep.mubr.bf16.mxu0 %v960
    %2554 = vmatmul.mubr.bf16.gmra.mrb[0].mxu0 %v959
    %v2555 = vpop.f32.mrb[0].mxu0
    %v2556 = vadd.f32 %v454, %v2555
    %v2557 = vpop.f32.mrb[0].mxu0
    %v2558 = vadd.f32 %v458, %v2557
    %v2559 = vpop.f32.mrb[0].mxu0
    %v2560 = vadd.f32 %v454, %v2559
    %v2561 = vpop.f32.mrb[0].mxu0
    %v2562 = vadd.f32 %v458, %v2561
    %2563 = vmatprep.mubr.bf16.mxu0 %v968
    %2564 = vmatmul.mubr.bf16.gmra.mrb[0].mxu0 %v967
    %v2565 = vpop.f32.mrb[0].mxu0
    %v2566 = vadd.f32 %v454, %v2565
    %v2567 = vpop.f32.mrb[0].mxu0
    %v2568 = vadd.f32 %v458, %v2567
    %v2569 = vpop.f32.mrb[0].mxu0
    %v2570 = vadd.f32 %v454, %v2569
    %v2571 = vpop.f32.mrb[0].mxu0
    %v2572 = vadd.f32 %v458, %v2571
    %2573 = vmatprep.mubr.bf16.mxu0 %v976
    %2574 = vmatmul.mubr.bf16.gmra.mrb[0].mxu0 %v975
    %v2575 = vpop.f32.mrb[0].mxu0
    %v2576 = vadd.f32 %v454, %v2575
    %v2577 = vpop.f32.mrb[0].mxu0
    %v2578 = vadd.f32 %v458, %v2577
    %v2579 = vpop.f32.mrb[0].mxu0
    %v2580 = vadd.f32 %v454, %v2579
    %v2581 = vpop.f32.mrb[0].mxu0
    %v2582 = vadd.f32 %v458, %v2581
    %2583 = vdwg.mxu0
    %2584 = vmatprep.subr.bf16.mxu0 %v1944
    %2585 = vmatpush1.bf16.msra.mxu0 %v1943
    %2586 = vmatprep.subr.bf16.mxu0 %v1948
    %2587 = vmatpush1.bf16.msra.mxu0 %v1947
    %2588 = vmatprep.subr.bf16.mxu0 %v1952
    %2589 = vmatpush1.bf16.msra.mxu0 %v1951
    %2590 = vmatprep.subr.bf16.mxu0 %v1956
    %2591 = vmatpush1.bf16.msra.mxu0 %v1955
    %2592 = vmatprep.subr.bf16.mxu0 %v1960
    %2593 = vmatpush1.bf16.msra.mxu0 %v1959
    %2594 = vmatprep.subr.bf16.mxu0 %v1964
    %2595 = vmatpush1.bf16.msra.mxu0 %v1963
    %2596 = vmatprep.subr.bf16.mxu0 %v1968
    %2597 = vmatpush1.bf16.msra.mxu0 %v1967
    %2598 = vmatprep.subr.bf16.mxu0 %v1972
    %2599 = vmatpush1.bf16.msra.mxu0 %v1971
    %2600 = vmatprep.subr.bf16.mxu0 %v1976
    %2601 = vmatpush1.bf16.msra.mxu0 %v1975
    %2602 = vmatprep.subr.bf16.mxu0 %v1980
    %2603 = vmatpush1.bf16.msra.mxu0 %v1979
    %2604 = vmatprep.subr.bf16.mxu0 %v1984
    %2605 = vmatpush1.bf16.msra.mxu0 %v1983
    %2606 = vmatprep.subr.bf16.mxu0 %v1988
    %2607 = vmatpush1.bf16.msra.mxu0 %v1987
    %2608 = vmatprep.subr.bf16.mxu0 %v1992
    %2609 = vmatpush1.bf16.msra.mxu0 %v1991
    %2610 = vmatprep.subr.bf16.mxu0 %v1996
    %2611 = vmatpush1.bf16.msra.mxu0 %v1995
    %2612 = vmatprep.subr.bf16.mxu0 %v2000
    %2613 = vmatpush1.bf16.msra.mxu0 %v1999
    %2614 = vmatprep.subr.bf16.mxu0 %v2004
    %2615 = vmatpush1.bf16.msra.mxu0 %v2003
    %2616 = vmatprep.mubr.bf16.mxu0 %v858
    %2617 = vmatmul.mubr.bf16.gmra.mrb[0].mxu0 %v857
    %v2618 = vpop.f32.mrb[0].mxu0
    %v2619 = vadd.f32 %v2426, %v2618
    %v2620 = vpop.f32.mrb[0].mxu0
    %v2621 = vadd.f32 %v2428, %v2620
    %v2622 = vpop.f32.mrb[0].mxu0
    %v2623 = vadd.f32 %v2430, %v2622
    %v2624 = vpop.f32.mrb[0].mxu0
    %v2625 = vadd.f32 %v2432, %v2624
    %2626 = vmatprep.mubr.bf16.mxu0 %v866
    %2627 = vmatmul.mubr.bf16.gmra.mrb[0].mxu0 %v865
    %v2628 = vpop.f32.mrb[0].mxu0
    %v2629 = vadd.f32 %v2436, %v2628
    %v2630 = vpop.f32.mrb[0].mxu0
    %v2631 = vadd.f32 %v2438, %v2630
    %v2632 = vpop.f32.mrb[0].mxu0
    %v2633 = vadd.f32 %v2440, %v2632
    %v2634 = vpop.f32.mrb[0].mxu0
    %v2635 = vadd.f32 %v2442, %v2634
    %2636 = vmatprep.mubr.bf16.mxu0 %v874
    %2637 = vmatmul.mubr.bf16.gmra.mrb[0].mxu0 %v873
    %v2638 = vpop.f32.mrb[0].mxu0
    %v2639 = vadd.f32 %v2446, %v2638
    %v2640 = vpop.f32.mrb[0].mxu0
    %v2641 = vadd.f32 %v2448, %v2640
    %v2642 = vpop.f32.mrb[0].mxu0
    %v2643 = vadd.f32 %v2450, %v2642
    %v2644 = vpop.f32.mrb[0].mxu0
    %v2645 = vadd.f32 %v2452, %v2644
    %2646 = vmatprep.mubr.bf16.mxu0 %v882
    %2647 = vmatmul.mubr.bf16.gmra.mrb[0].mxu0 %v881
    %v2648 = vpop.f32.mrb[0].mxu0
    %v2649 = vadd.f32 %v2456, %v2648
    %v2650 = vpop.f32.mrb[0].mxu0
    %v2651 = vadd.f32 %v2458, %v2650
    %v2652 = vpop.f32.mrb[0].mxu0
    %v2653 = vadd.f32 %v2460, %v2652
    %v2654 = vpop.f32.mrb[0].mxu0
    %v2655 = vadd.f32 %v2462, %v2654
    %2656 = vmatprep.mubr.bf16.mxu0 %v890
    %2657 = vmatmul.mubr.bf16.gmra.mrb[0].mxu0 %v889
    %v2658 = vpop.f32.mrb[0].mxu0
    %v2659 = vadd.f32 %v2466, %v2658
    %v2660 = vpop.f32.mrb[0].mxu0
    %v2661 = vadd.f32 %v2468, %v2660
    %v2662 = vpop.f32.mrb[0].mxu0
    %v2663 = vadd.f32 %v2470, %v2662
    %v2664 = vpop.f32.mrb[0].mxu0
    %v2665 = vadd.f32 %v2472, %v2664
    %2666 = vmatprep.mubr.bf16.mxu0 %v898
    %2667 = vmatmul.mubr.bf16.gmra.mrb[0].mxu0 %v897
    %v2668 = vpop.f32.mrb[0].mxu0
    %v2669 = vadd.f32 %v2476, %v2668
    %v2670 = vpop.f32.mrb[0].mxu0
    %v2671 = vadd.f32 %v2478, %v2670
    %v2672 = vpop.f32.mrb[0].mxu0
    %v2673 = vadd.f32 %v2480, %v2672
    %v2674 = vpop.f32.mrb[0].mxu0
    %v2675 = vadd.f32 %v2482, %v2674
    %2676 = vmatprep.mubr.bf16.mxu0 %v906
    %2677 = vmatmul.mubr.bf16.gmra.mrb[0].mxu0 %v905
    %v2678 = vpop.f32.mrb[0].mxu0
    %v2679 = vadd.f32 %v2486, %v2678
    %v2680 = vpop.f32.mrb[0].mxu0
    %v2681 = vadd.f32 %v2488, %v2680
    %v2682 = vpop.f32.mrb[0].mxu0
    %v2683 = vadd.f32 %v2490, %v2682
    %v2684 = vpop.f32.mrb[0].mxu0
    %v2685 = vadd.f32 %v2492, %v2684
    %2686 = vmatprep.mubr.bf16.mxu0 %v914
    %2687 = vmatmul.mubr.bf16.gmra.mrb[0].mxu0 %v913
    %v2688 = vpop.f32.mrb[0].mxu0
    %v2689 = vadd.f32 %v2496, %v2688
    %v2690 = vpop.f32.mrb[0].mxu0
    %v2691 = vadd.f32 %v2498, %v2690
    %v2692 = vpop.f32.mrb[0].mxu0
    %v2693 = vadd.f32 %v2500, %v2692
    %v2694 = vpop.f32.mrb[0].mxu0
    %v2695 = vadd.f32 %v2502, %v2694
    %2696 = vmatprep.mubr.bf16.mxu0 %v922
    %2697 = vmatmul.mubr.bf16.gmra.mrb[0].mxu0 %v921
    %v2698 = vpop.f32.mrb[0].mxu0
    %v2699 = vadd.f32 %v2506, %v2698
    %v2700 = vpop.f32.mrb[0].mxu0
    %v2701 = vadd.f32 %v2508, %v2700
    %v2702 = vpop.f32.mrb[0].mxu0
    %v2703 = vadd.f32 %v2510, %v2702
    %v2704 = vpop.f32.mrb[0].mxu0
    %v2705 = vadd.f32 %v2512, %v2704
    %2706 = vmatprep.mubr.bf16.mxu0 %v930
    %2707 = vmatmul.mubr.bf16.gmra.mrb[0].mxu0 %v929
    %v2708 = vpop.f32.mrb[0].mxu0
    %v2709 = vadd.f32 %v2516, %v2708
    %v2710 = vpop.f32.mrb[0].mxu0
    %v2711 = vadd.f32 %v2518, %v2710
    %v2712 = vpop.f32.mrb[0].mxu0
    %v2713 = vadd.f32 %v2520, %v2712
    %v2714 = vpop.f32.mrb[0].mxu0
    %v2715 = vadd.f32 %v2522, %v2714
    %2716 = vmatprep.mubr.bf16.mxu0 %v938
    %2717 = vmatmul.mubr.bf16.gmra.mrb[0].mxu0 %v937
    %v2718 = vpop.f32.mrb[0].mxu0
    %v2719 = vadd.f32 %v2526, %v2718
    %v2720 = vpop.f32.mrb[0].mxu0
    %v2721 = vadd.f32 %v2528, %v2720
    %v2722 = vpop.f32.mrb[0].mxu0
    %v2723 = vadd.f32 %v2530, %v2722
    %v2724 = vpop.f32.mrb[0].mxu0
    %v2725 = vadd.f32 %v2532, %v2724
    %2726 = vmatprep.mubr.bf16.mxu0 %v946
    %2727 = vmatmul.mubr.bf16.gmra.mrb[0].mxu0 %v945
    %v2728 = vpop.f32.mrb[0].mxu0
    %v2729 = vadd.f32 %v2536, %v2728
    %v2730 = vpop.f32.mrb[0].mxu0
    %v2731 = vadd.f32 %v2538, %v2730
    %v2732 = vpop.f32.mrb[0].mxu0
    %v2733 = vadd.f32 %v2540, %v2732
    %v2734 = vpop.f32.mrb[0].mxu0
    %v2735 = vadd.f32 %v2542, %v2734
    %2736 = vmatprep.mubr.bf16.mxu0 %v954
    %2737 = vmatmul.mubr.bf16.gmra.mrb[0].mxu0 %v953
    %v2738 = vpop.f32.mrb[0].mxu0
    %v2739 = vadd.f32 %v2546, %v2738
    %v2740 = vpop.f32.mrb[0].mxu0
    %v2741 = vadd.f32 %v2548, %v2740
    %v2742 = vpop.f32.mrb[0].mxu0
    %v2743 = vadd.f32 %v2550, %v2742
    %v2744 = vpop.f32.mrb[0].mxu0
    %v2745 = vadd.f32 %v2552, %v2744
    %2746 = vmatprep.mubr.bf16.mxu0 %v962
    %2747 = vmatmul.mubr.bf16.gmra.mrb[0].mxu0 %v961
    %v2748 = vpop.f32.mrb[0].mxu0
    %v2749 = vadd.f32 %v2556, %v2748
    %v2750 = vpop.f32.mrb[0].mxu0
    %v2751 = vadd.f32 %v2558, %v2750
    %v2752 = vpop.f32.mrb[0].mxu0
    %v2753 = vadd.f32 %v2560, %v2752
    %v2754 = vpop.f32.mrb[0].mxu0
    %v2755 = vadd.f32 %v2562, %v2754
    %2756 = vmatprep.mubr.bf16.mxu0 %v970
    %2757 = vmatmul.mubr.bf16.gmra.mrb[0].mxu0 %v969
    %v2758 = vpop.f32.mrb[0].mxu0
    %v2759 = vadd.f32 %v2566, %v2758
    %v2760 = vpop.f32.mrb[0].mxu0
    %v2761 = vadd.f32 %v2568, %v2760
    %v2762 = vpop.f32.mrb[0].mxu0
    %v2763 = vadd.f32 %v2570, %v2762
    %v2764 = vpop.f32.mrb[0].mxu0
    %v2765 = vadd.f32 %v2572, %v2764
    %2766 = vmatprep.mubr.bf16.mxu0 %v978
    %2767 = vmatmul.mubr.bf16.gmra.mrb[0].mxu0 %v977
    %v2768 = vpop.f32.mrb[0].mxu0
    %v2769 = vadd.f32 %v2576, %v2768
    %v2770 = vpop.f32.mrb[0].mxu0
    %v2771 = vadd.f32 %v2578, %v2770
    %v2772 = vpop.f32.mrb[0].mxu0
    %v2773 = vadd.f32 %v2580, %v2772
    %v2774 = vpop.f32.mrb[0].mxu0
    %v2775 = vadd.f32 %v2582, %v2774
    %2776 = vdwg.mxu0
    %2777 = vmatprep.subr.bf16.mxu0 %v2008
    %2778 = vmatpush1.bf16.msra.mxu0 %v2007
    %2779 = vmatprep.subr.bf16.mxu0 %v2012
    %2780 = vmatpush1.bf16.msra.mxu0 %v2011
    %2781 = vmatprep.subr.bf16.mxu0 %v2016
    %2782 = vmatpush1.bf16.msra.mxu0 %v2015
    %2783 = vmatprep.subr.bf16.mxu0 %v2020
    %2784 = vmatpush1.bf16.msra.mxu0 %v2019
    %2785 = vmatprep.subr.bf16.mxu0 %v2024
    %2786 = vmatpush1.bf16.msra.mxu0 %v2023
    %2787 = vmatprep.subr.bf16.mxu0 %v2028
    %2788 = vmatpush1.bf16.msra.mxu0 %v2027
    %2789 = vmatprep.subr.bf16.mxu0 %v2032
    %2790 = vmatpush1.bf16.msra.mxu0 %v2031
    %2791 = vmatprep.subr.bf16.mxu0 %v2036
    %2792 = vmatpush1.bf16.msra.mxu0 %v2035
    %2793 = vmatprep.subr.bf16.mxu0 %v2040
    %2794 = vmatpush1.bf16.msra.mxu0 %v2039
    %2795 = vmatprep.subr.bf16.mxu0 %v2044
    %2796 = vmatpush1.bf16.msra.mxu0 %v2043
    %2797 = vmatprep.subr.bf16.mxu0 %v2048
    %2798 = vmatpush1.bf16.msra.mxu0 %v2047
    %2799 = vmatprep.subr.bf16.mxu0 %v2052
    %2800 = vmatpush1.bf16.msra.mxu0 %v2051
    %2801 = vmatprep.subr.bf16.mxu0 %v2056
    %2802 = vmatpush1.bf16.msra.mxu0 %v2055
    %2803 = vmatprep.subr.bf16.mxu0 %v2060
    %2804 = vmatpush1.bf16.msra.mxu0 %v2059
    %2805 = vmatprep.subr.bf16.mxu0 %v2064
    %2806 = vmatpush1.bf16.msra.mxu0 %v2063
    %2807 = vmatprep.subr.bf16.mxu0 %v2068
    %2808 = vmatpush1.bf16.msra.mxu0 %v2067
    %2809 = vmatprep.mubr.bf16.mxu0 %v860
    %2810 = vmatmul.mubr.bf16.gmra.mrb[0].mxu0 %v859
    %v2811 = vpop.f32.mrb[0].mxu0
    %v2812 = vadd.f32 %v2619, %v2811
    %v2813 = vpop.f32.mrb[0].mxu0
    %v2814 = vadd.f32 %v2621, %v2813
    %v2815 = vpop.f32.mrb[0].mxu0
    %v2816 = vadd.f32 %v2623, %v2815
    %v2817 = vpop.f32.mrb[0].mxu0
    %v2818 = vadd.f32 %v2625, %v2817
    %2819 = vmatprep.mubr.bf16.mxu0 %v868
    %2820 = vmatmul.mubr.bf16.gmra.mrb[0].mxu0 %v867
    %v2821 = vpop.f32.mrb[0].mxu0
    %v2822 = vadd.f32 %v2629, %v2821
    %v2823 = vpop.f32.mrb[0].mxu0
    %v2824 = vadd.f32 %v2631, %v2823
    %v2825 = vpop.f32.mrb[0].mxu0
    %v2826 = vadd.f32 %v2633, %v2825
    %v2827 = vpop.f32.mrb[0].mxu0
    %v2828 = vadd.f32 %v2635, %v2827
    %2829 = vmatprep.mubr.bf16.mxu0 %v876
    %2830 = vmatmul.mubr.bf16.gmra.mrb[0].mxu0 %v875
    %v2831 = vpop.f32.mrb[0].mxu0
    %v2832 = vadd.f32 %v2639, %v2831
    %v2833 = vpop.f32.mrb[0].mxu0
    %v2834 = vadd.f32 %v2641, %v2833
    %v2835 = vpop.f32.mrb[0].mxu0
    %v2836 = vadd.f32 %v2643, %v2835
    %v2837 = vpop.f32.mrb[0].mxu0
    %v2838 = vadd.f32 %v2645, %v2837
    %2839 = vmatprep.mubr.bf16.mxu0 %v884
    %2840 = vmatmul.mubr.bf16.gmra.mrb[0].mxu0 %v883
    %v2841 = vpop.f32.mrb[0].mxu0
    %v2842 = vadd.f32 %v2649, %v2841
    %v2843 = vpop.f32.mrb[0].mxu0
    %v2844 = vadd.f32 %v2651, %v2843
    %v2845 = vpop.f32.mrb[0].mxu0
    %v2846 = vadd.f32 %v2653, %v2845
    %v2847 = vpop.f32.mrb[0].mxu0
    %v2848 = vadd.f32 %v2655, %v2847
    %2849 = vmatprep.mubr.bf16.mxu0 %v892
    %2850 = vmatmul.mubr.bf16.gmra.mrb[0].mxu0 %v891
    %v2851 = vpop.f32.mrb[0].mxu0
    %v2852 = vadd.f32 %v2659, %v2851
    %v2853 = vpop.f32.mrb[0].mxu0
    %v2854 = vadd.f32 %v2661, %v2853
    %v2855 = vpop.f32.mrb[0].mxu0
    %v2856 = vadd.f32 %v2663, %v2855
    %v2857 = vpop.f32.mrb[0].mxu0
    %v2858 = vadd.f32 %v2665, %v2857
    %2859 = vmatprep.mubr.bf16.mxu0 %v900
    %2860 = vmatmul.mubr.bf16.gmra.mrb[0].mxu0 %v899
    %v2861 = vpop.f32.mrb[0].mxu0
    %v2862 = vadd.f32 %v2669, %v2861
    %v2863 = vpop.f32.mrb[0].mxu0
    %v2864 = vadd.f32 %v2671, %v2863
    %v2865 = vpop.f32.mrb[0].mxu0
    %v2866 = vadd.f32 %v2673, %v2865
    %v2867 = vpop.f32.mrb[0].mxu0
    %v2868 = vadd.f32 %v2675, %v2867
    %2869 = vmatprep.mubr.bf16.mxu0 %v908
    %2870 = vmatmul.mubr.bf16.gmra.mrb[0].mxu0 %v907
    %v2871 = vpop.f32.mrb[0].mxu0
    %v2872 = vadd.f32 %v2679, %v2871
    %v2873 = vpop.f32.mrb[0].mxu0
    %v2874 = vadd.f32 %v2681, %v2873
    %v2875 = vpop.f32.mrb[0].mxu0
    %v2876 = vadd.f32 %v2683, %v2875
    %v2877 = vpop.f32.mrb[0].mxu0
    %v2878 = vadd.f32 %v2685, %v2877
    %2879 = vmatprep.mubr.bf16.mxu0 %v916
    %2880 = vmatmul.mubr.bf16.gmra.mrb[0].mxu0 %v915
    %v2881 = vpop.f32.mrb[0].mxu0
    %v2882 = vadd.f32 %v2689, %v2881
    %v2883 = vpop.f32.mrb[0].mxu0
    %v2884 = vadd.f32 %v2691, %v2883
    %v2885 = vpop.f32.mrb[0].mxu0
    %v2886 = vadd.f32 %v2693, %v2885
    %v2887 = vpop.f32.mrb[0].mxu0
    %v2888 = vadd.f32 %v2695, %v2887
    %2889 = vmatprep.mubr.bf16.mxu0 %v924
    %2890 = vmatmul.mubr.bf16.gmra.mrb[0].mxu0 %v923
    %v2891 = vpop.f32.mrb[0].mxu0
    %v2892 = vadd.f32 %v2699, %v2891
    %v2893 = vpop.f32.mrb[0].mxu0
    %v2894 = vadd.f32 %v2701, %v2893
    %v2895 = vpop.f32.mrb[0].mxu0
    %v2896 = vadd.f32 %v2703, %v2895
    %v2897 = vpop.f32.mrb[0].mxu0
    %v2898 = vadd.f32 %v2705, %v2897
    %2899 = vmatprep.mubr.bf16.mxu0 %v932
    %2900 = vmatmul.mubr.bf16.gmra.mrb[0].mxu0 %v931
    %v2901 = vpop.f32.mrb[0].mxu0
    %v2902 = vadd.f32 %v2709, %v2901
    %v2903 = vpop.f32.mrb[0].mxu0
    %v2904 = vadd.f32 %v2711, %v2903
    %v2905 = vpop.f32.mrb[0].mxu0
    %v2906 = vadd.f32 %v2713, %v2905
    %v2907 = vpop.f32.mrb[0].mxu0
    %v2908 = vadd.f32 %v2715, %v2907
    %2909 = vmatprep.mubr.bf16.mxu0 %v940
    %2910 = vmatmul.mubr.bf16.gmra.mrb[0].mxu0 %v939
    %v2911 = vpop.f32.mrb[0].mxu0
    %v2912 = vadd.f32 %v2719, %v2911
    %v2913 = vpop.f32.mrb[0].mxu0
    %v2914 = vadd.f32 %v2721, %v2913
    %v2915 = vpop.f32.mrb[0].mxu0
    %v2916 = vadd.f32 %v2723, %v2915
    %v2917 = vpop.f32.mrb[0].mxu0
    %v2918 = vadd.f32 %v2725, %v2917
    %2919 = vmatprep.mubr.bf16.mxu0 %v948
    %2920 = vmatmul.mubr.bf16.gmra.mrb[0].mxu0 %v947
    %v2921 = vpop.f32.mrb[0].mxu0
    %v2922 = vadd.f32 %v2729, %v2921
    %v2923 = vpop.f32.mrb[0].mxu0
    %v2924 = vadd.f32 %v2731, %v2923
    %v2925 = vpop.f32.mrb[0].mxu0
    %v2926 = vadd.f32 %v2733, %v2925
    %v2927 = vpop.f32.mrb[0].mxu0
    %v2928 = vadd.f32 %v2735, %v2927
    %2929 = vmatprep.mubr.bf16.mxu0 %v956
    %2930 = vmatmul.mubr.bf16.gmra.mrb[0].mxu0 %v955
    %v2931 = vpop.f32.mrb[0].mxu0
    %v2932 = vadd.f32 %v2739, %v2931
    %v2933 = vpop.f32.mrb[0].mxu0
    %v2934 = vadd.f32 %v2741, %v2933
    %v2935 = vpop.f32.mrb[0].mxu0
    %v2936 = vadd.f32 %v2743, %v2935
    %v2937 = vpop.f32.mrb[0].mxu0
    %v2938 = vadd.f32 %v2745, %v2937
    %2939 = vmatprep.mubr.bf16.mxu0 %v964
    %2940 = vmatmul.mubr.bf16.gmra.mrb[0].mxu0 %v963
    %v2941 = vpop.f32.mrb[0].mxu0
    %v2942 = vadd.f32 %v2749, %v2941
    %v2943 = vpop.f32.mrb[0].mxu0
    %v2944 = vadd.f32 %v2751, %v2943
    %v2945 = vpop.f32.mrb[0].mxu0
    %v2946 = vadd.f32 %v2753, %v2945
    %v2947 = vpop.f32.mrb[0].mxu0
    %v2948 = vadd.f32 %v2755, %v2947
    %2949 = vmatprep.mubr.bf16.mxu0 %v972
    %2950 = vmatmul.mubr.bf16.gmra.mrb[0].mxu0 %v971
    %v2951 = vpop.f32.mrb[0].mxu0
    %v2952 = vadd.f32 %v2759, %v2951
    %v2953 = vpop.f32.mrb[0].mxu0
    %v2954 = vadd.f32 %v2761, %v2953
    %v2955 = vpop.f32.mrb[0].mxu0
    %v2956 = vadd.f32 %v2763, %v2955
    %v2957 = vpop.f32.mrb[0].mxu0
    %v2958 = vadd.f32 %v2765, %v2957
    %2959 = vmatprep.mubr.bf16.mxu0 %v980
    %2960 = vmatmul.mubr.bf16.gmra.mrb[0].mxu0 %v979
    %v2961 = vpop.f32.mrb[0].mxu0
    %v2962 = vadd.f32 %v2769, %v2961
    %v2963 = vpop.f32.mrb[0].mxu0
    %v2964 = vadd.f32 %v2771, %v2963
    %v2965 = vpop.f32.mrb[0].mxu0
    %v2966 = vadd.f32 %v2773, %v2965
    %v2967 = vpop.f32.mrb[0].mxu0
    %v2968 = vadd.f32 %v2775, %v2967
    %2969 = vdwg.mxu0
    %2970 = vmatprep.subr.bf16.mxu0 %v2072
    %2971 = vmatpush1.bf16.msra.mxu0 %v2071
    %2972 = vmatprep.subr.bf16.mxu0 %v2076
    %2973 = vmatpush1.bf16.msra.mxu0 %v2075
    %2974 = vmatprep.subr.bf16.mxu0 %v2080
    %2975 = vmatpush1.bf16.msra.mxu0 %v2079
    %2976 = vmatprep.subr.bf16.mxu0 %v2084
    %2977 = vmatpush1.bf16.msra.mxu0 %v2083
    %2978 = vmatprep.subr.bf16.mxu0 %v2088
    %2979 = vmatpush1.bf16.msra.mxu0 %v2087
    %2980 = vmatprep.subr.bf16.mxu0 %v2092
    %2981 = vmatpush1.bf16.msra.mxu0 %v2091
    %2982 = vmatprep.subr.bf16.mxu0 %v2096
    %2983 = vmatpush1.bf16.msra.mxu0 %v2095
    %2984 = vmatprep.subr.bf16.mxu0 %v2100
    %2985 = vmatpush1.bf16.msra.mxu0 %v2099
    %2986 = vmatprep.subr.bf16.mxu0 %v2104
    %2987 = vmatpush1.bf16.msra.mxu0 %v2103
    %2988 = vmatprep.subr.bf16.mxu0 %v2108
    %2989 = vmatpush1.bf16.msra.mxu0 %v2107
    %2990 = vmatprep.subr.bf16.mxu0 %v2112
    %2991 = vmatpush1.bf16.msra.mxu0 %v2111
    %2992 = vmatprep.subr.bf16.mxu0 %v2116
    %2993 = vmatpush1.bf16.msra.mxu0 %v2115
    %2994 = vmatprep.subr.bf16.mxu0 %v2120
    %2995 = vmatpush1.bf16.msra.mxu0 %v2119
    %2996 = vmatprep.subr.bf16.mxu0 %v2124
    %2997 = vmatpush1.bf16.msra.mxu0 %v2123
    %2998 = vmatprep.subr.bf16.mxu0 %v2128
    %2999 = vmatpush1.bf16.msra.mxu0 %v2127
    %3000 = vmatprep.subr.bf16.mxu0 %v2132
    %3001 = vmatpush1.bf16.msra.mxu0 %v2131
    %3002 = vmatprep.mubr.bf16.mxu0 %v862
    %3003 = vmatmul.mubr.bf16.gmra.mrb[0].mxu0 %v861
    %v3004 = vpop.f32.mrb[0].mxu0
    %v3005 = vadd.f32 %v2812, %v3004
    %v3006 = vpop.f32.mrb[0].mxu0
    %v3007 = vadd.f32 %v2814, %v3006
    %v3008 = vpop.f32.mrb[0].mxu0
    %v3009 = vadd.f32 %v2816, %v3008
    %v3010 = vpop.f32.mrb[0].mxu0
    %v3011 = vadd.f32 %v2818, %v3010
    %3012 = vmatprep.mubr.bf16.mxu0 %v870
    %3013 = vmatmul.mubr.bf16.gmra.mrb[0].mxu0 %v869
    %v3014 = vpop.f32.mrb[0].mxu0
    %v3015 = vadd.f32 %v2822, %v3014
    %v3016 = vpop.f32.mrb[0].mxu0
    %v3017 = vadd.f32 %v2824, %v3016
    %v3018 = vpop.f32.mrb[0].mxu0
    %v3019 = vadd.f32 %v2826, %v3018
    %v3020 = vpop.f32.mrb[0].mxu0
    %v3021 = vadd.f32 %v2828, %v3020
    %3022 = vmatprep.mubr.bf16.mxu0 %v878
    %3023 = vmatmul.mubr.bf16.gmra.mrb[0].mxu0 %v877
    %v3024 = vpop.f32.mrb[0].mxu0
    %v3025 = vadd.f32 %v2832, %v3024
    %v3026 = vpop.f32.mrb[0].mxu0
    %v3027 = vadd.f32 %v2834, %v3026
    %v3028 = vpop.f32.mrb[0].mxu0
    %v3029 = vadd.f32 %v2836, %v3028
    %v3030 = vpop.f32.mrb[0].mxu0
    %v3031 = vadd.f32 %v2838, %v3030
    %3032 = vmatprep.mubr.bf16.mxu0 %v886
    %3033 = vmatmul.mubr.bf16.gmra.mrb[0].mxu0 %v885
    %v3034 = vpop.f32.mrb[0].mxu0
    %v3035 = vadd.f32 %v2842, %v3034
    %v3036 = vpop.f32.mrb[0].mxu0
    %v3037 = vadd.f32 %v2844, %v3036
    %v3038 = vpop.f32.mrb[0].mxu0
    %v3039 = vadd.f32 %v2846, %v3038
    %v3040 = vpop.f32.mrb[0].mxu0
    %v3041 = vadd.f32 %v2848, %v3040
    %3042 = vmatprep.mubr.bf16.mxu0 %v894
    %3043 = vmatmul.mubr.bf16.gmra.mrb[0].mxu0 %v893
    %v3044 = vpop.f32.mrb[0].mxu0
    %v3045 = vadd.f32 %v2852, %v3044
    %v3046 = vpop.f32.mrb[0].mxu0
    %v3047 = vadd.f32 %v2854, %v3046
    %v3048 = vpop.f32.mrb[0].mxu0
    %v3049 = vadd.f32 %v2856, %v3048
    %v3050 = vpop.f32.mrb[0].mxu0
    %v3051 = vadd.f32 %v2858, %v3050
    %3052 = vmatprep.mubr.bf16.mxu0 %v902
    %3053 = vmatmul.mubr.bf16.gmra.mrb[0].mxu0 %v901
    %v3054 = vpop.f32.mrb[0].mxu0
    %v3055 = vadd.f32 %v2862, %v3054
    %v3056 = vpop.f32.mrb[0].mxu0
    %v3057 = vadd.f32 %v2864, %v3056
    %v3058 = vpop.f32.mrb[0].mxu0
    %v3059 = vadd.f32 %v2866, %v3058
    %v3060 = vpop.f32.mrb[0].mxu0
    %v3061 = vadd.f32 %v2868, %v3060
    %3062 = vmatprep.mubr.bf16.mxu0 %v910
    %3063 = vmatmul.mubr.bf16.gmra.mrb[0].mxu0 %v909
    %v3064 = vpop.f32.mrb[0].mxu0
    %v3065 = vadd.f32 %v2872, %v3064
    %v3066 = vpop.f32.mrb[0].mxu0
    %v3067 = vadd.f32 %v2874, %v3066
    %v3068 = vpop.f32.mrb[0].mxu0
    %v3069 = vadd.f32 %v2876, %v3068
    %v3070 = vpop.f32.mrb[0].mxu0
    %v3071 = vadd.f32 %v2878, %v3070
    %3072 = vmatprep.mubr.bf16.mxu0 %v918
    %3073 = vmatmul.mubr.bf16.gmra.mrb[0].mxu0 %v917
    %v3074 = vpop.f32.mrb[0].mxu0
    %v3075 = vadd.f32 %v2882, %v3074
    %v3076 = vpop.f32.mrb[0].mxu0
    %v3077 = vadd.f32 %v2884, %v3076
    %v3078 = vpop.f32.mrb[0].mxu0
    %v3079 = vadd.f32 %v2886, %v3078
    %v3080 = vpop.f32.mrb[0].mxu0
    %v3081 = vadd.f32 %v2888, %v3080
    %3082 = vmatprep.mubr.bf16.mxu0 %v926
    %3083 = vmatmul.mubr.bf16.gmra.mrb[0].mxu0 %v925
    %v3084 = vpop.f32.mrb[0].mxu0
    %v3085 = vadd.f32 %v2892, %v3084
    %v3086 = vpop.f32.mrb[0].mxu0
    %v3087 = vadd.f32 %v2894, %v3086
    %v3088 = vpop.f32.mrb[0].mxu0
    %v3089 = vadd.f32 %v2896, %v3088
    %v3090 = vpop.f32.mrb[0].mxu0
    %v3091 = vadd.f32 %v2898, %v3090
    %3092 = vmatprep.mubr.bf16.mxu0 %v934
    %3093 = vmatmul.mubr.bf16.gmra.mrb[0].mxu0 %v933
    %v3094 = vpop.f32.mrb[0].mxu0
    %v3095 = vadd.f32 %v2902, %v3094
    %v3096 = vpop.f32.mrb[0].mxu0
    %v3097 = vadd.f32 %v2904, %v3096
    %v3098 = vpop.f32.mrb[0].mxu0
    %v3099 = vadd.f32 %v2906, %v3098
    %v3100 = vpop.f32.mrb[0].mxu0
    %v3101 = vadd.f32 %v2908, %v3100
    %3102 = vmatprep.mubr.bf16.mxu0 %v942
    %3103 = vmatmul.mubr.bf16.gmra.mrb[0].mxu0 %v941
    %v3104 = vpop.f32.mrb[0].mxu0
    %v3105 = vadd.f32 %v2912, %v3104
    %v3106 = vpop.f32.mrb[0].mxu0
    %v3107 = vadd.f32 %v2914, %v3106
    %v3108 = vpop.f32.mrb[0].mxu0
    %v3109 = vadd.f32 %v2916, %v3108
    %v3110 = vpop.f32.mrb[0].mxu0
    %v3111 = vadd.f32 %v2918, %v3110
    %3112 = vmatprep.mubr.bf16.mxu0 %v950
    %3113 = vmatmul.mubr.bf16.gmra.mrb[0].mxu0 %v949
    %v3114 = vpop.f32.mrb[0].mxu0
    %v3115 = vadd.f32 %v2922, %v3114
    %v3116 = vpop.f32.mrb[0].mxu0
    %v3117 = vadd.f32 %v2924, %v3116
    %v3118 = vpop.f32.mrb[0].mxu0
    %v3119 = vadd.f32 %v2926, %v3118
    %v3120 = vpop.f32.mrb[0].mxu0
    %v3121 = vadd.f32 %v2928, %v3120
    %3122 = vmatprep.mubr.bf16.mxu0 %v958
    %3123 = vmatmul.mubr.bf16.gmra.mrb[0].mxu0 %v957
    %v3124 = vpop.f32.mrb[0].mxu0
    %v3125 = vadd.f32 %v2932, %v3124
    %v3126 = vpop.f32.mrb[0].mxu0
    %v3127 = vadd.f32 %v2934, %v3126
    %v3128 = vpop.f32.mrb[0].mxu0
    %v3129 = vadd.f32 %v2936, %v3128
    %v3130 = vpop.f32.mrb[0].mxu0
    %v3131 = vadd.f32 %v2938, %v3130
    %3132 = vmatprep.mubr.bf16.mxu0 %v966
    %3133 = vmatmul.mubr.bf16.gmra.mrb[0].mxu0 %v965
    %v3134 = vpop.f32.mrb[0].mxu0
    %v3135 = vadd.f32 %v2942, %v3134
    %v3136 = vpop.f32.mrb[0].mxu0
    %v3137 = vadd.f32 %v2944, %v3136
    %v3138 = vpop.f32.mrb[0].mxu0
    %v3139 = vadd.f32 %v2946, %v3138
    %v3140 = vpop.f32.mrb[0].mxu0
    %v3141 = vadd.f32 %v2948, %v3140
    %3142 = vmatprep.mubr.bf16.mxu0 %v974
    %3143 = vmatmul.mubr.bf16.gmra.mrb[0].mxu0 %v973
    %v3144 = vpop.f32.mrb[0].mxu0
    %v3145 = vadd.f32 %v2952, %v3144
    %v3146 = vpop.f32.mrb[0].mxu0
    %v3147 = vadd.f32 %v2954, %v3146
    %v3148 = vpop.f32.mrb[0].mxu0
    %v3149 = vadd.f32 %v2956, %v3148
    %v3150 = vpop.f32.mrb[0].mxu0
    %v3151 = vadd.f32 %v2958, %v3150
    %3152 = vmatprep.mubr.bf16.mxu0 %v982
    %3153 = vmatmul.mubr.bf16.gmra.mrb[0].mxu0 %v981
    %v3154 = vpop.f32.mrb[0].mxu0
    %v3155 = vadd.f32 %v2962, %v3154
    %v3156 = vpop.f32.mrb[0].mxu0
    %v3157 = vadd.f32 %v2964, %v3156
    %v3158 = vpop.f32.mrb[0].mxu0
    %v3159 = vadd.f32 %v2966, %v3158
    %v3160 = vpop.f32.mrb[0].mxu0
    %v3161 = vadd.f32 %v2968, %v3160
    %3162 = vdwg.mxu0
    %3163 = vmatprep.subr.bf16.mxu0 %v1882
    %3164 = vmatpush1.bf16.msra.mxu0 %v1881
    %3165 = vmatprep.subr.bf16.mxu0 %v1886
    %3166 = vmatpush1.bf16.msra.mxu0 %v1885
    %3167 = vmatprep.subr.bf16.mxu0 %v1890
    %3168 = vmatpush1.bf16.msra.mxu0 %v1889
    %3169 = vmatprep.subr.bf16.mxu0 %v1894
    %3170 = vmatpush1.bf16.msra.mxu0 %v1893
    %3171 = vmatprep.subr.bf16.mxu0 %v1898
    %3172 = vmatpush1.bf16.msra.mxu0 %v1897
    %3173 = vmatprep.subr.bf16.mxu0 %v1902
    %3174 = vmatpush1.bf16.msra.mxu0 %v1901
    %3175 = vmatprep.subr.bf16.mxu0 %v1906
    %3176 = vmatpush1.bf16.msra.mxu0 %v1905
    %3177 = vmatprep.subr.bf16.mxu0 %v1910
    %3178 = vmatpush1.bf16.msra.mxu0 %v1909
    %3179 = vmatprep.subr.bf16.mxu0 %v1914
    %3180 = vmatpush1.bf16.msra.mxu0 %v1913
    %3181 = vmatprep.subr.bf16.mxu0 %v1918
    %3182 = vmatpush1.bf16.msra.mxu0 %v1917
    %3183 = vmatprep.subr.bf16.mxu0 %v1922
    %3184 = vmatpush1.bf16.msra.mxu0 %v1921
    %3185 = vmatprep.subr.bf16.mxu0 %v1926
    %3186 = vmatpush1.bf16.msra.mxu0 %v1925
    %3187 = vmatprep.subr.bf16.mxu0 %v1930
    %3188 = vmatpush1.bf16.msra.mxu0 %v1929
    %3189 = vmatprep.subr.bf16.mxu0 %v1934
    %3190 = vmatpush1.bf16.msra.mxu0 %v1933
    %3191 = vmatprep.subr.bf16.mxu0 %v1938
    %3192 = vmatpush1.bf16.msra.mxu0 %v1937
    %3193 = vmatprep.subr.bf16.mxu0 %v1942
    %3194 = vmatpush1.bf16.msra.mxu0 %v1941
    %3195 = vmatprep.mubr.bf16.mxu0 %v856
    %3196 = vmatmul.mubr.bf16.gmra.mrb[0].mxu0 %v855
    %v3197 = vpop.f32.mrb[0].mxu0
    %v3198 = vadd.f32 %v462, %v3197
    %v3199 = vpop.f32.mrb[0].mxu0
    %v3200 = vadd.f32 %v466, %v3199
    %v3201 = vpop.f32.mrb[0].mxu0
    %v3202 = vadd.f32 %v462, %v3201
    %v3203 = vpop.f32.mrb[0].mxu0
    %v3204 = vadd.f32 %v466, %v3203
    %3205 = vmatprep.mubr.bf16.mxu0 %v864
    %3206 = vmatmul.mubr.bf16.gmra.mrb[0].mxu0 %v863
    %v3207 = vpop.f32.mrb[0].mxu0
    %v3208 = vadd.f32 %v462, %v3207
    %v3209 = vpop.f32.mrb[0].mxu0
    %v3210 = vadd.f32 %v466, %v3209
    %v3211 = vpop.f32.mrb[0].mxu0
    %v3212 = vadd.f32 %v462, %v3211
    %v3213 = vpop.f32.mrb[0].mxu0
    %v3214 = vadd.f32 %v466, %v3213
    %3215 = vmatprep.mubr.bf16.mxu0 %v872
    %3216 = vmatmul.mubr.bf16.gmra.mrb[0].mxu0 %v871
    %v3217 = vpop.f32.mrb[0].mxu0
    %v3218 = vadd.f32 %v462, %v3217
    %v3219 = vpop.f32.mrb[0].mxu0
    %v3220 = vadd.f32 %v466, %v3219
    %v3221 = vpop.f32.mrb[0].mxu0
    %v3222 = vadd.f32 %v462, %v3221
    %v3223 = vpop.f32.mrb[0].mxu0
    %v3224 = vadd.f32 %v466, %v3223
    %3225 = vmatprep.mubr.bf16.mxu0 %v880
    %3226 = vmatmul.mubr.bf16.gmra.mrb[0].mxu0 %v879
    %v3227 = vpop.f32.mrb[0].mxu0
    %v3228 = vadd.f32 %v462, %v3227
    %v3229 = vpop.f32.mrb[0].mxu0
    %v3230 = vadd.f32 %v466, %v3229
    %v3231 = vpop.f32.mrb[0].mxu0
    %v3232 = vadd.f32 %v462, %v3231
    %v3233 = vpop.f32.mrb[0].mxu0
    %v3234 = vadd.f32 %v466, %v3233
    %3235 = vmatprep.mubr.bf16.mxu0 %v888
    %3236 = vmatmul.mubr.bf16.gmra.mrb[0].mxu0 %v887
    %v3237 = vpop.f32.mrb[0].mxu0
    %v3238 = vadd.f32 %v462, %v3237
    %v3239 = vpop.f32.mrb[0].mxu0
    %v3240 = vadd.f32 %v466, %v3239
    %v3241 = vpop.f32.mrb[0].mxu0
    %v3242 = vadd.f32 %v462, %v3241
    %v3243 = vpop.f32.mrb[0].mxu0
    %v3244 = vadd.f32 %v466, %v3243
    %3245 = vmatprep.mubr.bf16.mxu0 %v896
    %3246 = vmatmul.mubr.bf16.gmra.mrb[0].mxu0 %v895
    %v3247 = vpop.f32.mrb[0].mxu0
    %v3248 = vadd.f32 %v462, %v3247
    %v3249 = vpop.f32.mrb[0].mxu0
    %v3250 = vadd.f32 %v466, %v3249
    %v3251 = vpop.f32.mrb[0].mxu0
    %v3252 = vadd.f32 %v462, %v3251
    %v3253 = vpop.f32.mrb[0].mxu0
    %v3254 = vadd.f32 %v466, %v3253
    %3255 = vmatprep.mubr.bf16.mxu0 %v904
    %3256 = vmatmul.mubr.bf16.gmra.mrb[0].mxu0 %v903
    %v3257 = vpop.f32.mrb[0].mxu0
    %v3258 = vadd.f32 %v462, %v3257
    %v3259 = vpop.f32.mrb[0].mxu0
    %v3260 = vadd.f32 %v466, %v3259
    %v3261 = vpop.f32.mrb[0].mxu0
    %v3262 = vadd.f32 %v462, %v3261
    %v3263 = vpop.f32.mrb[0].mxu0
    %v3264 = vadd.f32 %v466, %v3263
    %3265 = vmatprep.mubr.bf16.mxu0 %v912
    %3266 = vmatmul.mubr.bf16.gmra.mrb[0].mxu0 %v911
    %v3267 = vpop.f32.mrb[0].mxu0
    %v3268 = vadd.f32 %v462, %v3267
    %v3269 = vpop.f32.mrb[0].mxu0
    %v3270 = vadd.f32 %v466, %v3269
    %v3271 = vpop.f32.mrb[0].mxu0
    %v3272 = vadd.f32 %v462, %v3271
    %v3273 = vpop.f32.mrb[0].mxu0
    %v3274 = vadd.f32 %v466, %v3273
    %3275 = vmatprep.mubr.bf16.mxu0 %v920
    %3276 = vmatmul.mubr.bf16.gmra.mrb[0].mxu0 %v919
    %v3277 = vpop.f32.mrb[0].mxu0
    %v3278 = vadd.f32 %v462, %v3277
    %v3279 = vpop.f32.mrb[0].mxu0
    %v3280 = vadd.f32 %v466, %v3279
    %v3281 = vpop.f32.mrb[0].mxu0
    %v3282 = vadd.f32 %v462, %v3281
    %v3283 = vpop.f32.mrb[0].mxu0
    %v3284 = vadd.f32 %v466, %v3283
    %3285 = vmatprep.mubr.bf16.mxu0 %v928
    %3286 = vmatmul.mubr.bf16.gmra.mrb[0].mxu0 %v927
    %v3287 = vpop.f32.mrb[0].mxu0
    %v3288 = vadd.f32 %v462, %v3287
    %v3289 = vpop.f32.mrb[0].mxu0
    %v3290 = vadd.f32 %v466, %v3289
    %v3291 = vpop.f32.mrb[0].mxu0
    %v3292 = vadd.f32 %v462, %v3291
    %v3293 = vpop.f32.mrb[0].mxu0
    %v3294 = vadd.f32 %v466, %v3293
    %3295 = vmatprep.mubr.bf16.mxu0 %v936
    %3296 = vmatmul.mubr.bf16.gmra.mrb[0].mxu0 %v935
    %v3297 = vpop.f32.mrb[0].mxu0
    %v3298 = vadd.f32 %v462, %v3297
    %v3299 = vpop.f32.mrb[0].mxu0
    %v3300 = vadd.f32 %v466, %v3299
    %v3301 = vpop.f32.mrb[0].mxu0
    %v3302 = vadd.f32 %v462, %v3301
    %v3303 = vpop.f32.mrb[0].mxu0
    %v3304 = vadd.f32 %v466, %v3303
    %3305 = vmatprep.mubr.bf16.mxu0 %v944
    %3306 = vmatmul.mubr.bf16.gmra.mrb[0].mxu0 %v943
    %v3307 = vpop.f32.mrb[0].mxu0
    %v3308 = vadd.f32 %v462, %v3307
    %v3309 = vpop.f32.mrb[0].mxu0
    %v3310 = vadd.f32 %v466, %v3309
    %v3311 = vpop.f32.mrb[0].mxu0
    %v3312 = vadd.f32 %v462, %v3311
    %v3313 = vpop.f32.mrb[0].mxu0
    %v3314 = vadd.f32 %v466, %v3313
    %3315 = vmatprep.mubr.bf16.mxu0 %v952
    %3316 = vmatmul.mubr.bf16.gmra.mrb[0].mxu0 %v951
    %v3317 = vpop.f32.mrb[0].mxu0
    %v3318 = vadd.f32 %v462, %v3317
    %v3319 = vpop.f32.mrb[0].mxu0
    %v3320 = vadd.f32 %v466, %v3319
    %v3321 = vpop.f32.mrb[0].mxu0
    %v3322 = vadd.f32 %v462, %v3321
    %v3323 = vpop.f32.mrb[0].mxu0
    %v3324 = vadd.f32 %v466, %v3323
    %3325 = vmatprep.mubr.bf16.mxu0 %v960
    %3326 = vmatmul.mubr.bf16.gmra.mrb[0].mxu0 %v959
    %v3327 = vpop.f32.mrb[0].mxu0
    %v3328 = vadd.f32 %v462, %v3327
    %v3329 = vpop.f32.mrb[0].mxu0
    %v3330 = vadd.f32 %v466, %v3329
    %v3331 = vpop.f32.mrb[0].mxu0
    %v3332 = vadd.f32 %v462, %v3331
    %v3333 = vpop.f32.mrb[0].mxu0
    %v3334 = vadd.f32 %v466, %v3333
    %3335 = vmatprep.mubr.bf16.mxu0 %v968
    %3336 = vmatmul.mubr.bf16.gmra.mrb[0].mxu0 %v967
    %v3337 = vpop.f32.mrb[0].mxu0
    %v3338 = vadd.f32 %v462, %v3337
    %v3339 = vpop.f32.mrb[0].mxu0
    %v3340 = vadd.f32 %v466, %v3339
    %v3341 = vpop.f32.mrb[0].mxu0
    %v3342 = vadd.f32 %v462, %v3341
    %v3343 = vpop.f32.mrb[0].mxu0
    %v3344 = vadd.f32 %v466, %v3343
    %3345 = vmatprep.mubr.bf16.mxu0 %v976
    %3346 = vmatmul.mubr.bf16.gmra.mrb[0].mxu0 %v975
    %v3347 = vpop.f32.mrb[0].mxu0
    %v3348 = vadd.f32 %v462, %v3347
    %v3349 = vpop.f32.mrb[0].mxu0
    %v3350 = vadd.f32 %v466, %v3349
    %v3351 = vpop.f32.mrb[0].mxu0
    %v3352 = vadd.f32 %v462, %v3351
    %v3353 = vpop.f32.mrb[0].mxu0
    %v3354 = vadd.f32 %v466, %v3353
    %3355 = vdwg.mxu0
    %3356 = vmatprep.subr.bf16.mxu0 %v1946
    %3357 = vmatpush1.bf16.msra.mxu0 %v1945
    %3358 = vmatprep.subr.bf16.mxu0 %v1950
    %3359 = vmatpush1.bf16.msra.mxu0 %v1949
    %3360 = vmatprep.subr.bf16.mxu0 %v1954
    %3361 = vmatpush1.bf16.msra.mxu0 %v1953
    %3362 = vmatprep.subr.bf16.mxu0 %v1958
    %3363 = vmatpush1.bf16.msra.mxu0 %v1957
    %3364 = vmatprep.subr.bf16.mxu0 %v1962
    %3365 = vmatpush1.bf16.msra.mxu0 %v1961
    %3366 = vmatprep.subr.bf16.mxu0 %v1966
    %3367 = vmatpush1.bf16.msra.mxu0 %v1965
    %3368 = vmatprep.subr.bf16.mxu0 %v1970
    %3369 = vmatpush1.bf16.msra.mxu0 %v1969
    %3370 = vmatprep.subr.bf16.mxu0 %v1974
    %3371 = vmatpush1.bf16.msra.mxu0 %v1973
    %3372 = vmatprep.subr.bf16.mxu0 %v1978
    %3373 = vmatpush1.bf16.msra.mxu0 %v1977
    %3374 = vmatprep.subr.bf16.mxu0 %v1982
    %3375 = vmatpush1.bf16.msra.mxu0 %v1981
    %3376 = vmatprep.subr.bf16.mxu0 %v1986
    %3377 = vmatpush1.bf16.msra.mxu0 %v1985
    %3378 = vmatprep.subr.bf16.mxu0 %v1990
    %3379 = vmatpush1.bf16.msra.mxu0 %v1989
    %3380 = vmatprep.subr.bf16.mxu0 %v1994
    %3381 = vmatpush1.bf16.msra.mxu0 %v1993
    %3382 = vmatprep.subr.bf16.mxu0 %v1998
    %3383 = vmatpush1.bf16.msra.mxu0 %v1997
    %3384 = vmatprep.subr.bf16.mxu0 %v2002
    %3385 = vmatpush1.bf16.msra.mxu0 %v2001
    %3386 = vmatprep.subr.bf16.mxu0 %v2006
    %3387 = vmatpush1.bf16.msra.mxu0 %v2005
    %3388 = vmatprep.mubr.bf16.mxu0 %v858
    %3389 = vmatmul.mubr.bf16.gmra.mrb[0].mxu0 %v857
    %v3390 = vpop.f32.mrb[0].mxu0
    %v3391 = vadd.f32 %v3198, %v3390
    %v3392 = vpop.f32.mrb[0].mxu0
    %v3393 = vadd.f32 %v3200, %v3392
    %v3394 = vpop.f32.mrb[0].mxu0
    %v3395 = vadd.f32 %v3202, %v3394
    %v3396 = vpop.f32.mrb[0].mxu0
    %v3397 = vadd.f32 %v3204, %v3396
    %3398 = vmatprep.mubr.bf16.mxu0 %v866
    %3399 = vmatmul.mubr.bf16.gmra.mrb[0].mxu0 %v865
    %v3400 = vpop.f32.mrb[0].mxu0
    %v3401 = vadd.f32 %v3208, %v3400
    %v3402 = vpop.f32.mrb[0].mxu0
    %v3403 = vadd.f32 %v3210, %v3402
    %v3404 = vpop.f32.mrb[0].mxu0
    %v3405 = vadd.f32 %v3212, %v3404
    %v3406 = vpop.f32.mrb[0].mxu0
    %v3407 = vadd.f32 %v3214, %v3406
    %3408 = vmatprep.mubr.bf16.mxu0 %v874
    %3409 = vmatmul.mubr.bf16.gmra.mrb[0].mxu0 %v873
    %v3410 = vpop.f32.mrb[0].mxu0
    %v3411 = vadd.f32 %v3218, %v3410
    %v3412 = vpop.f32.mrb[0].mxu0
    %v3413 = vadd.f32 %v3220, %v3412
    %v3414 = vpop.f32.mrb[0].mxu0
    %v3415 = vadd.f32 %v3222, %v3414
    %v3416 = vpop.f32.mrb[0].mxu0
    %v3417 = vadd.f32 %v3224, %v3416
    %3418 = vmatprep.mubr.bf16.mxu0 %v882
    %3419 = vmatmul.mubr.bf16.gmra.mrb[0].mxu0 %v881
    %v3420 = vpop.f32.mrb[0].mxu0
    %v3421 = vadd.f32 %v3228, %v3420
    %v3422 = vpop.f32.mrb[0].mxu0
    %v3423 = vadd.f32 %v3230, %v3422
    %v3424 = vpop.f32.mrb[0].mxu0
    %v3425 = vadd.f32 %v3232, %v3424
    %v3426 = vpop.f32.mrb[0].mxu0
    %v3427 = vadd.f32 %v3234, %v3426
    %3428 = vmatprep.mubr.bf16.mxu0 %v890
    %3429 = vmatmul.mubr.bf16.gmra.mrb[0].mxu0 %v889
    %v3430 = vpop.f32.mrb[0].mxu0
    %v3431 = vadd.f32 %v3238, %v3430
    %v3432 = vpop.f32.mrb[0].mxu0
    %v3433 = vadd.f32 %v3240, %v3432
    %v3434 = vpop.f32.mrb[0].mxu0
    %v3435 = vadd.f32 %v3242, %v3434
    %v3436 = vpop.f32.mrb[0].mxu0
    %v3437 = vadd.f32 %v3244, %v3436
    %3438 = vmatprep.mubr.bf16.mxu0 %v898
    %3439 = vmatmul.mubr.bf16.gmra.mrb[0].mxu0 %v897
    %v3440 = vpop.f32.mrb[0].mxu0
    %v3441 = vadd.f32 %v3248, %v3440
    %v3442 = vpop.f32.mrb[0].mxu0
    %v3443 = vadd.f32 %v3250, %v3442
    %v3444 = vpop.f32.mrb[0].mxu0
    %v3445 = vadd.f32 %v3252, %v3444
    %v3446 = vpop.f32.mrb[0].mxu0
    %v3447 = vadd.f32 %v3254, %v3446
    %3448 = vmatprep.mubr.bf16.mxu0 %v906
    %3449 = vmatmul.mubr.bf16.gmra.mrb[0].mxu0 %v905
    %v3450 = vpop.f32.mrb[0].mxu0
    %v3451 = vadd.f32 %v3258, %v3450
    %v3452 = vpop.f32.mrb[0].mxu0
    %v3453 = vadd.f32 %v3260, %v3452
    %v3454 = vpop.f32.mrb[0].mxu0
    %v3455 = vadd.f32 %v3262, %v3454
    %v3456 = vpop.f32.mrb[0].mxu0
    %v3457 = vadd.f32 %v3264, %v3456
    %3458 = vmatprep.mubr.bf16.mxu0 %v914
    %3459 = vmatmul.mubr.bf16.gmra.mrb[0].mxu0 %v913
    %v3460 = vpop.f32.mrb[0].mxu0
    %v3461 = vadd.f32 %v3268, %v3460
    %v3462 = vpop.f32.mrb[0].mxu0
    %v3463 = vadd.f32 %v3270, %v3462
    %v3464 = vpop.f32.mrb[0].mxu0
    %v3465 = vadd.f32 %v3272, %v3464
    %v3466 = vpop.f32.mrb[0].mxu0
    %v3467 = vadd.f32 %v3274, %v3466
    %3468 = vmatprep.mubr.bf16.mxu0 %v922
    %3469 = vmatmul.mubr.bf16.gmra.mrb[0].mxu0 %v921
    %v3470 = vpop.f32.mrb[0].mxu0
    %v3471 = vadd.f32 %v3278, %v3470
    %v3472 = vpop.f32.mrb[0].mxu0
    %v3473 = vadd.f32 %v3280, %v3472
    %v3474 = vpop.f32.mrb[0].mxu0
    %v3475 = vadd.f32 %v3282, %v3474
    %v3476 = vpop.f32.mrb[0].mxu0
    %v3477 = vadd.f32 %v3284, %v3476
    %3478 = vmatprep.mubr.bf16.mxu0 %v930
    %3479 = vmatmul.mubr.bf16.gmra.mrb[0].mxu0 %v929
    %v3480 = vpop.f32.mrb[0].mxu0
    %v3481 = vadd.f32 %v3288, %v3480
    %v3482 = vpop.f32.mrb[0].mxu0
    %v3483 = vadd.f32 %v3290, %v3482
    %v3484 = vpop.f32.mrb[0].mxu0
    %v3485 = vadd.f32 %v3292, %v3484
    %v3486 = vpop.f32.mrb[0].mxu0
    %v3487 = vadd.f32 %v3294, %v3486
    %3488 = vmatprep.mubr.bf16.mxu0 %v938
    %3489 = vmatmul.mubr.bf16.gmra.mrb[0].mxu0 %v937
    %v3490 = vpop.f32.mrb[0].mxu0
    %v3491 = vadd.f32 %v3298, %v3490
    %v3492 = vpop.f32.mrb[0].mxu0
    %v3493 = vadd.f32 %v3300, %v3492
    %v3494 = vpop.f32.mrb[0].mxu0
    %v3495 = vadd.f32 %v3302, %v3494
    %v3496 = vpop.f32.mrb[0].mxu0
    %v3497 = vadd.f32 %v3304, %v3496
    %3498 = vmatprep.mubr.bf16.mxu0 %v946
    %3499 = vmatmul.mubr.bf16.gmra.mrb[0].mxu0 %v945
    %v3500 = vpop.f32.mrb[0].mxu0
    %v3501 = vadd.f32 %v3308, %v3500
    %v3502 = vpop.f32.mrb[0].mxu0
    %v3503 = vadd.f32 %v3310, %v3502
    %v3504 = vpop.f32.mrb[0].mxu0
    %v3505 = vadd.f32 %v3312, %v3504
    %v3506 = vpop.f32.mrb[0].mxu0
    %v3507 = vadd.f32 %v3314, %v3506
    %3508 = vmatprep.mubr.bf16.mxu0 %v954
    %3509 = vmatmul.mubr.bf16.gmra.mrb[0].mxu0 %v953
    %v3510 = vpop.f32.mrb[0].mxu0
    %v3511 = vadd.f32 %v3318, %v3510
    %v3512 = vpop.f32.mrb[0].mxu0
    %v3513 = vadd.f32 %v3320, %v3512
    %v3514 = vpop.f32.mrb[0].mxu0
    %v3515 = vadd.f32 %v3322, %v3514
    %v3516 = vpop.f32.mrb[0].mxu0
    %v3517 = vadd.f32 %v3324, %v3516
    %3518 = vmatprep.mubr.bf16.mxu0 %v962
    %3519 = vmatmul.mubr.bf16.gmra.mrb[0].mxu0 %v961
    %v3520 = vpop.f32.mrb[0].mxu0
    %v3521 = vadd.f32 %v3328, %v3520
    %v3522 = vpop.f32.mrb[0].mxu0
    %v3523 = vadd.f32 %v3330, %v3522
    %v3524 = vpop.f32.mrb[0].mxu0
    %v3525 = vadd.f32 %v3332, %v3524
    %v3526 = vpop.f32.mrb[0].mxu0
    %v3527 = vadd.f32 %v3334, %v3526
    %3528 = vmatprep.mubr.bf16.mxu0 %v970
    %3529 = vmatmul.mubr.bf16.gmra.mrb[0].mxu0 %v969
    %v3530 = vpop.f32.mrb[0].mxu0
    %v3531 = vadd.f32 %v3338, %v3530
    %v3532 = vpop.f32.mrb[0].mxu0
    %v3533 = vadd.f32 %v3340, %v3532
    %v3534 = vpop.f32.mrb[0].mxu0
    %v3535 = vadd.f32 %v3342, %v3534
    %v3536 = vpop.f32.mrb[0].mxu0
    %v3537 = vadd.f32 %v3344, %v3536
    %3538 = vmatprep.mubr.bf16.mxu0 %v978
    %3539 = vmatmul.mubr.bf16.gmra.mrb[0].mxu0 %v977
    %v3540 = vpop.f32.mrb[0].mxu0
    %v3541 = vadd.f32 %v3348, %v3540
    %v3542 = vpop.f32.mrb[0].mxu0
    %v3543 = vadd.f32 %v3350, %v3542
    %v3544 = vpop.f32.mrb[0].mxu0
    %v3545 = vadd.f32 %v3352, %v3544
    %v3546 = vpop.f32.mrb[0].mxu0
    %v3547 = vadd.f32 %v3354, %v3546
    %3548 = vdwg.mxu0
    %3549 = vmatprep.subr.bf16.mxu0 %v2010
    %3550 = vmatpush1.bf16.msra.mxu0 %v2009
    %3551 = vmatprep.subr.bf16.mxu0 %v2014
    %3552 = vmatpush1.bf16.msra.mxu0 %v2013
    %3553 = vmatprep.subr.bf16.mxu0 %v2018
    %3554 = vmatpush1.bf16.msra.mxu0 %v2017
    %3555 = vmatprep.subr.bf16.mxu0 %v2022
    %3556 = vmatpush1.bf16.msra.mxu0 %v2021
    %3557 = vmatprep.subr.bf16.mxu0 %v2026
    %3558 = vmatpush1.bf16.msra.mxu0 %v2025
    %3559 = vmatprep.subr.bf16.mxu0 %v2030
    %3560 = vmatpush1.bf16.msra.mxu0 %v2029
    %3561 = vmatprep.subr.bf16.mxu0 %v2034
    %3562 = vmatpush1.bf16.msra.mxu0 %v2033
    %3563 = vmatprep.subr.bf16.mxu0 %v2038
    %3564 = vmatpush1.bf16.msra.mxu0 %v2037
    %3565 = vmatprep.subr.bf16.mxu0 %v2042
    %3566 = vmatpush1.bf16.msra.mxu0 %v2041
    %3567 = vmatprep.subr.bf16.mxu0 %v2046
    %3568 = vmatpush1.bf16.msra.mxu0 %v2045
    %3569 = vmatprep.subr.bf16.mxu0 %v2050
    %3570 = vmatpush1.bf16.msra.mxu0 %v2049
    %3571 = vmatprep.subr.bf16.mxu0 %v2054
    %3572 = vmatpush1.bf16.msra.mxu0 %v2053
    %3573 = vmatprep.subr.bf16.mxu0 %v2058
    %3574 = vmatpush1.bf16.msra.mxu0 %v2057
    %3575 = vmatprep.subr.bf16.mxu0 %v2062
    %3576 = vmatpush1.bf16.msra.mxu0 %v2061
    %3577 = vmatprep.subr.bf16.mxu0 %v2066
    %3578 = vmatpush1.bf16.msra.mxu0 %v2065
    %3579 = vmatprep.subr.bf16.mxu0 %v2070
    %3580 = vmatpush1.bf16.msra.mxu0 %v2069
    %3581 = vmatprep.mubr.bf16.mxu0 %v860
    %3582 = vmatmul.mubr.bf16.gmra.mrb[0].mxu0 %v859
    %v3583 = vpop.f32.mrb[0].mxu0
    %v3584 = vadd.f32 %v3391, %v3583
    %v3585 = vpop.f32.mrb[0].mxu0
    %v3586 = vadd.f32 %v3393, %v3585
    %v3587 = vpop.f32.mrb[0].mxu0
    %v3588 = vadd.f32 %v3395, %v3587
    %v3589 = vpop.f32.mrb[0].mxu0
    %v3590 = vadd.f32 %v3397, %v3589
    %3591 = vmatprep.mubr.bf16.mxu0 %v868
    %3592 = vmatmul.mubr.bf16.gmra.mrb[0].mxu0 %v867
    %v3593 = vpop.f32.mrb[0].mxu0
    %v3594 = vadd.f32 %v3401, %v3593
    %v3595 = vpop.f32.mrb[0].mxu0
    %v3596 = vadd.f32 %v3403, %v3595
    %v3597 = vpop.f32.mrb[0].mxu0
    %v3598 = vadd.f32 %v3405, %v3597
    %v3599 = vpop.f32.mrb[0].mxu0
    %v3600 = vadd.f32 %v3407, %v3599
    %3601 = vmatprep.mubr.bf16.mxu0 %v876
    %3602 = vmatmul.mubr.bf16.gmra.mrb[0].mxu0 %v875
    %v3603 = vpop.f32.mrb[0].mxu0
    %v3604 = vadd.f32 %v3411, %v3603
    %v3605 = vpop.f32.mrb[0].mxu0
    %v3606 = vadd.f32 %v3413, %v3605
    %v3607 = vpop.f32.mrb[0].mxu0
    %v3608 = vadd.f32 %v3415, %v3607
    %v3609 = vpop.f32.mrb[0].mxu0
    %v3610 = vadd.f32 %v3417, %v3609
    %3611 = vmatprep.mubr.bf16.mxu0 %v884
    %3612 = vmatmul.mubr.bf16.gmra.mrb[0].mxu0 %v883
    %v3613 = vpop.f32.mrb[0].mxu0
    %v3614 = vadd.f32 %v3421, %v3613
    %v3615 = vpop.f32.mrb[0].mxu0
    %v3616 = vadd.f32 %v3423, %v3615
    %v3617 = vpop.f32.mrb[0].mxu0
    %v3618 = vadd.f32 %v3425, %v3617
    %v3619 = vpop.f32.mrb[0].mxu0
    %v3620 = vadd.f32 %v3427, %v3619
    %3621 = vmatprep.mubr.bf16.mxu0 %v892
    %3622 = vmatmul.mubr.bf16.gmra.mrb[0].mxu0 %v891
    %v3623 = vpop.f32.mrb[0].mxu0
    %v3624 = vadd.f32 %v3431, %v3623
    %v3625 = vpop.f32.mrb[0].mxu0
    %v3626 = vadd.f32 %v3433, %v3625
    %v3627 = vpop.f32.mrb[0].mxu0
    %v3628 = vadd.f32 %v3435, %v3627
    %v3629 = vpop.f32.mrb[0].mxu0
    %v3630 = vadd.f32 %v3437, %v3629
    %3631 = vmatprep.mubr.bf16.mxu0 %v900
    %3632 = vmatmul.mubr.bf16.gmra.mrb[0].mxu0 %v899
    %v3633 = vpop.f32.mrb[0].mxu0
    %v3634 = vadd.f32 %v3441, %v3633
    %v3635 = vpop.f32.mrb[0].mxu0
    %v3636 = vadd.f32 %v3443, %v3635
    %v3637 = vpop.f32.mrb[0].mxu0
    %v3638 = vadd.f32 %v3445, %v3637
    %v3639 = vpop.f32.mrb[0].mxu0
    %v3640 = vadd.f32 %v3447, %v3639
    %3641 = vmatprep.mubr.bf16.mxu0 %v908
    %3642 = vmatmul.mubr.bf16.gmra.mrb[0].mxu0 %v907
    %v3643 = vpop.f32.mrb[0].mxu0
    %v3644 = vadd.f32 %v3451, %v3643
    %v3645 = vpop.f32.mrb[0].mxu0
    %v3646 = vadd.f32 %v3453, %v3645
    %v3647 = vpop.f32.mrb[0].mxu0
    %v3648 = vadd.f32 %v3455, %v3647
    %v3649 = vpop.f32.mrb[0].mxu0
    %v3650 = vadd.f32 %v3457, %v3649
    %3651 = vmatprep.mubr.bf16.mxu0 %v916
    %3652 = vmatmul.mubr.bf16.gmra.mrb[0].mxu0 %v915
    %v3653 = vpop.f32.mrb[0].mxu0
    %v3654 = vadd.f32 %v3461, %v3653
    %v3655 = vpop.f32.mrb[0].mxu0
    %v3656 = vadd.f32 %v3463, %v3655
    %v3657 = vpop.f32.mrb[0].mxu0
    %v3658 = vadd.f32 %v3465, %v3657
    %v3659 = vpop.f32.mrb[0].mxu0
    %v3660 = vadd.f32 %v3467, %v3659
    %3661 = vmatprep.mubr.bf16.mxu0 %v924
    %3662 = vmatmul.mubr.bf16.gmra.mrb[0].mxu0 %v923
    %v3663 = vpop.f32.mrb[0].mxu0
    %v3664 = vadd.f32 %v3471, %v3663
    %v3665 = vpop.f32.mrb[0].mxu0
    %v3666 = vadd.f32 %v3473, %v3665
    %v3667 = vpop.f32.mrb[0].mxu0
    %v3668 = vadd.f32 %v3475, %v3667
    %v3669 = vpop.f32.mrb[0].mxu0
    %v3670 = vadd.f32 %v3477, %v3669
    %3671 = vmatprep.mubr.bf16.mxu0 %v932
    %3672 = vmatmul.mubr.bf16.gmra.mrb[0].mxu0 %v931
    %v3673 = vpop.f32.mrb[0].mxu0
    %v3674 = vadd.f32 %v3481, %v3673
    %v3675 = vpop.f32.mrb[0].mxu0
    %v3676 = vadd.f32 %v3483, %v3675
    %v3677 = vpop.f32.mrb[0].mxu0
    %v3678 = vadd.f32 %v3485, %v3677
    %v3679 = vpop.f32.mrb[0].mxu0
    %v3680 = vadd.f32 %v3487, %v3679
    %3681 = vmatprep.mubr.bf16.mxu0 %v940
    %3682 = vmatmul.mubr.bf16.gmra.mrb[0].mxu0 %v939
    %v3683 = vpop.f32.mrb[0].mxu0
    %v3684 = vadd.f32 %v3491, %v3683
    %v3685 = vpop.f32.mrb[0].mxu0
    %v3686 = vadd.f32 %v3493, %v3685
    %v3687 = vpop.f32.mrb[0].mxu0
    %v3688 = vadd.f32 %v3495, %v3687
    %v3689 = vpop.f32.mrb[0].mxu0
    %v3690 = vadd.f32 %v3497, %v3689
    %3691 = vmatprep.mubr.bf16.mxu0 %v948
    %3692 = vmatmul.mubr.bf16.gmra.mrb[0].mxu0 %v947
    %v3693 = vpop.f32.mrb[0].mxu0
    %v3694 = vadd.f32 %v3501, %v3693
    %v3695 = vpop.f32.mrb[0].mxu0
    %v3696 = vadd.f32 %v3503, %v3695
    %v3697 = vpop.f32.mrb[0].mxu0
    %v3698 = vadd.f32 %v3505, %v3697
    %v3699 = vpop.f32.mrb[0].mxu0
    %v3700 = vadd.f32 %v3507, %v3699
    %3701 = vmatprep.mubr.bf16.mxu0 %v956
    %3702 = vmatmul.mubr.bf16.gmra.mrb[0].mxu0 %v955
    %v3703 = vpop.f32.mrb[0].mxu0
    %v3704 = vadd.f32 %v3511, %v3703
    %v3705 = vpop.f32.mrb[0].mxu0
    %v3706 = vadd.f32 %v3513, %v3705
    %v3707 = vpop.f32.mrb[0].mxu0
    %v3708 = vadd.f32 %v3515, %v3707
    %v3709 = vpop.f32.mrb[0].mxu0
    %v3710 = vadd.f32 %v3517, %v3709
    %3711 = vmatprep.mubr.bf16.mxu0 %v964
    %3712 = vmatmul.mubr.bf16.gmra.mrb[0].mxu0 %v963
    %v3713 = vpop.f32.mrb[0].mxu0
    %v3714 = vadd.f32 %v3521, %v3713
    %v3715 = vpop.f32.mrb[0].mxu0
    %v3716 = vadd.f32 %v3523, %v3715
    %v3717 = vpop.f32.mrb[0].mxu0
    %v3718 = vadd.f32 %v3525, %v3717
    %v3719 = vpop.f32.mrb[0].mxu0
    %v3720 = vadd.f32 %v3527, %v3719
    %3721 = vmatprep.mubr.bf16.mxu0 %v972
    %3722 = vmatmul.mubr.bf16.gmra.mrb[0].mxu0 %v971
    %v3723 = vpop.f32.mrb[0].mxu0
    %v3724 = vadd.f32 %v3531, %v3723
    %v3725 = vpop.f32.mrb[0].mxu0
    %v3726 = vadd.f32 %v3533, %v3725
    %v3727 = vpop.f32.mrb[0].mxu0
    %v3728 = vadd.f32 %v3535, %v3727
    %v3729 = vpop.f32.mrb[0].mxu0
    %v3730 = vadd.f32 %v3537, %v3729
    %3731 = vmatprep.mubr.bf16.mxu0 %v980
    %3732 = vmatmul.mubr.bf16.gmra.mrb[0].mxu0 %v979
    %v3733 = vpop.f32.mrb[0].mxu0
    %v3734 = vadd.f32 %v3541, %v3733
    %v3735 = vpop.f32.mrb[0].mxu0
    %v3736 = vadd.f32 %v3543, %v3735
    %v3737 = vpop.f32.mrb[0].mxu0
    %v3738 = vadd.f32 %v3545, %v3737
    %v3739 = vpop.f32.mrb[0].mxu0
    %v3740 = vadd.f32 %v3547, %v3739
    %3741 = vdwg.mxu0
    %3742 = vmatprep.subr.bf16.mxu0 %v2074
    %3743 = vmatpush1.bf16.msra.mxu0 %v2073
    %3744 = vmatprep.subr.bf16.mxu0 %v2078
    %3745 = vmatpush1.bf16.msra.mxu0 %v2077
    %3746 = vmatprep.subr.bf16.mxu0 %v2082
    %3747 = vmatpush1.bf16.msra.mxu0 %v2081
    %3748 = vmatprep.subr.bf16.mxu0 %v2086
    %3749 = vmatpush1.bf16.msra.mxu0 %v2085
    %3750 = vmatprep.subr.bf16.mxu0 %v2090
    %3751 = vmatpush1.bf16.msra.mxu0 %v2089
    %3752 = vmatprep.subr.bf16.mxu0 %v2094
    %3753 = vmatpush1.bf16.msra.mxu0 %v2093
    %3754 = vmatprep.subr.bf16.mxu0 %v2098
    %3755 = vmatpush1.bf16.msra.mxu0 %v2097
    %3756 = vmatprep.subr.bf16.mxu0 %v2102
    %3757 = vmatpush1.bf16.msra.mxu0 %v2101
    %3758 = vmatprep.subr.bf16.mxu0 %v2106
    %3759 = vmatpush1.bf16.msra.mxu0 %v2105
    %3760 = vmatprep.subr.bf16.mxu0 %v2110
    %3761 = vmatpush1.bf16.msra.mxu0 %v2109
    %3762 = vmatprep.subr.bf16.mxu0 %v2114
    %3763 = vmatpush1.bf16.msra.mxu0 %v2113
    %3764 = vmatprep.subr.bf16.mxu0 %v2118
    %3765 = vmatpush1.bf16.msra.mxu0 %v2117
    %3766 = vmatprep.subr.bf16.mxu0 %v2122
    %3767 = vmatpush1.bf16.msra.mxu0 %v2121
    %3768 = vmatprep.subr.bf16.mxu0 %v2126
    %3769 = vmatpush1.bf16.msra.mxu0 %v2125
    %3770 = vmatprep.subr.bf16.mxu0 %v2130
    %3771 = vmatpush1.bf16.msra.mxu0 %v2129
    %3772 = vmatprep.subr.bf16.mxu0 %v2134
    %3773 = vmatpush1.bf16.msra.mxu0 %v2133
    %3774 = vmatprep.mubr.bf16.mxu0 %v862
    %3775 = vmatmul.mubr.bf16.gmra.mrb[0].mxu0 %v861
    %v3776 = vpop.f32.mrb[0].mxu0
    %v3777 = vadd.f32 %v3584, %v3776
    %v3778 = vpop.f32.mrb[0].mxu0
    %v3779 = vadd.f32 %v3586, %v3778
    %v3780 = vpop.f32.mrb[0].mxu0
    %v3781 = vadd.f32 %v3588, %v3780
    %v3782 = vpop.f32.mrb[0].mxu0
    %v3783 = vadd.f32 %v3590, %v3782
    %3784 = vmatprep.mubr.bf16.mxu0 %v870
    %3785 = vmatmul.mubr.bf16.gmra.mrb[0].mxu0 %v869
    %v3786 = vpop.f32.mrb[0].mxu0
    %v3787 = vadd.f32 %v3594, %v3786
    %v3788 = vpop.f32.mrb[0].mxu0
    %v3789 = vadd.f32 %v3596, %v3788
    %v3790 = vpop.f32.mrb[0].mxu0
    %v3791 = vadd.f32 %v3598, %v3790
    %v3792 = vpop.f32.mrb[0].mxu0
    %v3793 = vadd.f32 %v3600, %v3792
    %3794 = vmatprep.mubr.bf16.mxu0 %v878
    %3795 = vmatmul.mubr.bf16.gmra.mrb[0].mxu0 %v877
    %v3796 = vpop.f32.mrb[0].mxu0
    %v3797 = vadd.f32 %v3604, %v3796
    %v3798 = vpop.f32.mrb[0].mxu0
    %v3799 = vadd.f32 %v3606, %v3798
    %v3800 = vpop.f32.mrb[0].mxu0
    %v3801 = vadd.f32 %v3608, %v3800
    %v3802 = vpop.f32.mrb[0].mxu0
    %v3803 = vadd.f32 %v3610, %v3802
    %3804 = vmatprep.mubr.bf16.mxu0 %v886
    %3805 = vmatmul.mubr.bf16.gmra.mrb[0].mxu0 %v885
    %v3806 = vpop.f32.mrb[0].mxu0
    %v3807 = vadd.f32 %v3614, %v3806
    %v3808 = vpop.f32.mrb[0].mxu0
    %v3809 = vadd.f32 %v3616, %v3808
    %v3810 = vpop.f32.mrb[0].mxu0
    %v3811 = vadd.f32 %v3618, %v3810
    %v3812 = vpop.f32.mrb[0].mxu0
    %v3813 = vadd.f32 %v3620, %v3812
    %3814 = vmatprep.mubr.bf16.mxu0 %v894
    %3815 = vmatmul.mubr.bf16.gmra.mrb[0].mxu0 %v893
    %v3816 = vpop.f32.mrb[0].mxu0
    %v3817 = vadd.f32 %v3624, %v3816
    %v3818 = vpop.f32.mrb[0].mxu0
    %v3819 = vadd.f32 %v3626, %v3818
    %v3820 = vpop.f32.mrb[0].mxu0
    %v3821 = vadd.f32 %v3628, %v3820
    %v3822 = vpop.f32.mrb[0].mxu0
    %v3823 = vadd.f32 %v3630, %v3822
    %3824 = vmatprep.mubr.bf16.mxu0 %v902
    %3825 = vmatmul.mubr.bf16.gmra.mrb[0].mxu0 %v901
    %v3826 = vpop.f32.mrb[0].mxu0
    %v3827 = vadd.f32 %v3634, %v3826
    %v3828 = vpop.f32.mrb[0].mxu0
    %v3829 = vadd.f32 %v3636, %v3828
    %v3830 = vpop.f32.mrb[0].mxu0
    %v3831 = vadd.f32 %v3638, %v3830
    %v3832 = vpop.f32.mrb[0].mxu0
    %v3833 = vadd.f32 %v3640, %v3832
    %3834 = vmatprep.mubr.bf16.mxu0 %v910
    %3835 = vmatmul.mubr.bf16.gmra.mrb[0].mxu0 %v909
    %v3836 = vpop.f32.mrb[0].mxu0
    %v3837 = vadd.f32 %v3644, %v3836
    %v3838 = vpop.f32.mrb[0].mxu0
    %v3839 = vadd.f32 %v3646, %v3838
    %v3840 = vpop.f32.mrb[0].mxu0
    %v3841 = vadd.f32 %v3648, %v3840
    %v3842 = vpop.f32.mrb[0].mxu0
    %v3843 = vadd.f32 %v3650, %v3842
    %3844 = vmatprep.mubr.bf16.mxu0 %v918
    %3845 = vmatmul.mubr.bf16.gmra.mrb[0].mxu0 %v917
    %v3846 = vpop.f32.mrb[0].mxu0
    %v3847 = vadd.f32 %v3654, %v3846
    %v3848 = vpop.f32.mrb[0].mxu0
    %v3849 = vadd.f32 %v3656, %v3848
    %v3850 = vpop.f32.mrb[0].mxu0
    %v3851 = vadd.f32 %v3658, %v3850
    %v3852 = vpop.f32.mrb[0].mxu0
    %v3853 = vadd.f32 %v3660, %v3852
    %3854 = vmatprep.mubr.bf16.mxu0 %v926
    %3855 = vmatmul.mubr.bf16.gmra.mrb[0].mxu0 %v925
    %v3856 = vpop.f32.mrb[0].mxu0
    %v3857 = vadd.f32 %v3664, %v3856
    %v3858 = vpop.f32.mrb[0].mxu0
    %v3859 = vadd.f32 %v3666, %v3858
    %v3860 = vpop.f32.mrb[0].mxu0
    %v3861 = vadd.f32 %v3668, %v3860
    %v3862 = vpop.f32.mrb[0].mxu0
    %v3863 = vadd.f32 %v3670, %v3862
    %3864 = vmatprep.mubr.bf16.mxu0 %v934
    %3865 = vmatmul.mubr.bf16.gmra.mrb[0].mxu0 %v933
    %v3866 = vpop.f32.mrb[0].mxu0
    %v3867 = vadd.f32 %v3674, %v3866
    %v3868 = vpop.f32.mrb[0].mxu0
    %v3869 = vadd.f32 %v3676, %v3868
    %v3870 = vpop.f32.mrb[0].mxu0
    %v3871 = vadd.f32 %v3678, %v3870
    %v3872 = vpop.f32.mrb[0].mxu0
    %v3873 = vadd.f32 %v3680, %v3872
    %3874 = vmatprep.mubr.bf16.mxu0 %v942
    %3875 = vmatmul.mubr.bf16.gmra.mrb[0].mxu0 %v941
    %v3876 = vpop.f32.mrb[0].mxu0
    %v3877 = vadd.f32 %v3684, %v3876
    %v3878 = vpop.f32.mrb[0].mxu0
    %v3879 = vadd.f32 %v3686, %v3878
    %v3880 = vpop.f32.mrb[0].mxu0
    %v3881 = vadd.f32 %v3688, %v3880
    %v3882 = vpop.f32.mrb[0].mxu0
    %v3883 = vadd.f32 %v3690, %v3882
    %3884 = vmatprep.mubr.bf16.mxu0 %v950
    %3885 = vmatmul.mubr.bf16.gmra.mrb[0].mxu0 %v949
    %v3886 = vpop.f32.mrb[0].mxu0
    %v3887 = vadd.f32 %v3694, %v3886
    %v3888 = vpop.f32.mrb[0].mxu0
    %v3889 = vadd.f32 %v3696, %v3888
    %v3890 = vpop.f32.mrb[0].mxu0
    %v3891 = vadd.f32 %v3698, %v3890
    %v3892 = vpop.f32.mrb[0].mxu0
    %v3893 = vadd.f32 %v3700, %v3892
    %3894 = vmatprep.mubr.bf16.mxu0 %v958
    %3895 = vmatmul.mubr.bf16.gmra.mrb[0].mxu0 %v957
    %v3896 = vpop.f32.mrb[0].mxu0
    %v3897 = vadd.f32 %v3704, %v3896
    %v3898 = vpop.f32.mrb[0].mxu0
    %v3899 = vadd.f32 %v3706, %v3898
    %v3900 = vpop.f32.mrb[0].mxu0
    %v3901 = vadd.f32 %v3708, %v3900
    %v3902 = vpop.f32.mrb[0].mxu0
    %v3903 = vadd.f32 %v3710, %v3902
    %3904 = vmatprep.mubr.bf16.mxu0 %v966
    %3905 = vmatmul.mubr.bf16.gmra.mrb[0].mxu0 %v965
    %v3906 = vpop.f32.mrb[0].mxu0
    %v3907 = vadd.f32 %v3714, %v3906
    %v3908 = vpop.f32.mrb[0].mxu0
    %v3909 = vadd.f32 %v3716, %v3908
    %v3910 = vpop.f32.mrb[0].mxu0
    %v3911 = vadd.f32 %v3718, %v3910
    %v3912 = vpop.f32.mrb[0].mxu0
    %v3913 = vadd.f32 %v3720, %v3912
    %3914 = vmatprep.mubr.bf16.mxu0 %v974
    %3915 = vmatmul.mubr.bf16.gmra.mrb[0].mxu0 %v973
    %v3916 = vpop.f32.mrb[0].mxu0
    %v3917 = vadd.f32 %v3724, %v3916
    %v3918 = vpop.f32.mrb[0].mxu0
    %v3919 = vadd.f32 %v3726, %v3918
    %v3920 = vpop.f32.mrb[0].mxu0
    %v3921 = vadd.f32 %v3728, %v3920
    %v3922 = vpop.f32.mrb[0].mxu0
    %v3923 = vadd.f32 %v3730, %v3922
    %3924 = vmatprep.mubr.bf16.mxu0 %v982
    %3925 = vmatmul.mubr.bf16.gmra.mrb[0].mxu0 %v981
    %v3926 = vpop.f32.mrb[0].mxu0
    %v3927 = vadd.f32 %v3734, %v3926
    %v3928 = vpop.f32.mrb[0].mxu0
    %v3929 = vadd.f32 %v3736, %v3928
    %v3930 = vpop.f32.mrb[0].mxu0
    %v3931 = vadd.f32 %v3738, %v3930
    %v3932 = vpop.f32.mrb[0].mxu0
    %v3933 = vadd.f32 %v3740, %v3932
    %3934 = vdwg.mxu0
    %3935 = vst [vmem:[#allocation7] sm:$0xff] %v3005
    %3936 = vst [vmem:[#allocation7 + $0x8] sm:$0xff] %v3007
    %3937 = vst [vmem:[#allocation7 + $0x10] sm:$0xff] %v3777
    %3938 = vst [vmem:[#allocation7 + $0x18] sm:$0xff] %v3779
    %3939 = vst [vmem:[#allocation7 + $0x20] sm:$0xff] %v3009
    %3940 = vst [vmem:[#allocation7 + $0x28] sm:$0xff] %v3011
    %3941 = vst [vmem:[#allocation7 + $0x30] sm:$0xff] %v3781
    %3942 = vst [vmem:[#allocation7 + $0x38] sm:$0xff] %v3783
    %3943 = vst [vmem:[#allocation7 + $0x40] sm:$0xff] %v3015
    %3944 = vst [vmem:[#allocation7 + $0x48] sm:$0xff] %v3017
    %3945 = vst [vmem:[#allocation7 + $0x50] sm:$0xff] %v3787
    %3946 = vst [vmem:[#allocation7 + $0x58] sm:$0xff] %v3789
    %3947 = vst [vmem:[#allocation7 + $0x60] sm:$0xff] %v3019
    %3948 = vst [vmem:[#allocation7 + $0x68] sm:$0xff] %v3021
    %3949 = vst [vmem:[#allocation7 + $0x70] sm:$0xff] %v3791
    %3950 = vst [vmem:[#allocation7 + $0x78] sm:$0xff] %v3793
    %3951 = vst [vmem:[#allocation7 + $0x80] sm:$0xff] %v3025
    %3952 = vst [vmem:[#allocation7 + $0x88] sm:$0xff] %v3027
    %3953 = vst [vmem:[#allocation7 + $0x90] sm:$0xff] %v3797
    %3954 = vst [vmem:[#allocation7 + $0x98] sm:$0xff] %v3799
    %3955 = vst [vmem:[#allocation7 + $0xa0] sm:$0xff] %v3029
    %3956 = vst [vmem:[#allocation7 + $0xa8] sm:$0xff] %v3031
    %3957 = vst [vmem:[#allocation7 + $0xb0] sm:$0xff] %v3801
    %3958 = vst [vmem:[#allocation7 + $0xb8] sm:$0xff] %v3803
    %3959 = vst [vmem:[#allocation7 + $0xc0] sm:$0xff] %v3035
    %3960 = vst [vmem:[#allocation7 + $0xc8] sm:$0xff] %v3037
    %3961 = vst [vmem:[#allocation7 + $0xd0] sm:$0xff] %v3807
    %3962 = vst [vmem:[#allocation7 + $0xd8] sm:$0xff] %v3809
    %3963 = vst [vmem:[#allocation7 + $0xe0] sm:$0xff] %v3039
    %3964 = vst [vmem:[#allocation7 + $0xe8] sm:$0xff] %v3041
    %3965 = vst [vmem:[#allocation7 + $0xf0] sm:$0xff] %v3811
    %3966 = vst [vmem:[#allocation7 + $0xf8] sm:$0xff] %v3813
    %3967 = vst [vmem:[#allocation7 + $0x100] sm:$0xff] %v3045
    %3968 = vst [vmem:[#allocation7 + $0x108] sm:$0xff] %v3047
    %3969 = vst [vmem:[#allocation7 + $0x110] sm:$0xff] %v3817
    %3970 = vst [vmem:[#allocation7 + $0x118] sm:$0xff] %v3819
    %3971 = vst [vmem:[#allocation7 + $0x120] sm:$0xff] %v3049
    %3972 = vst [vmem:[#allocation7 + $0x128] sm:$0xff] %v3051
    %3973 = vst [vmem:[#allocation7 + $0x130] sm:$0xff] %v3821
    %3974 = vst [vmem:[#allocation7 + $0x138] sm:$0xff] %v3823
    %3975 = vst [vmem:[#allocation7 + $0x140] sm:$0xff] %v3055
    %3976 = vst [vmem:[#allocation7 + $0x148] sm:$0xff] %v3057
    %3977 = vst [vmem:[#allocation7 + $0x150] sm:$0xff] %v3827
    %3978 = vst [vmem:[#allocation7 + $0x158] sm:$0xff] %v3829
    %3979 = vst [vmem:[#allocation7 + $0x160] sm:$0xff] %v3059
    %3980 = vst [vmem:[#allocation7 + $0x168] sm:$0xff] %v3061
    %3981 = vst [vmem:[#allocation7 + $0x170] sm:$0xff] %v3831
    %3982 = vst [vmem:[#allocation7 + $0x178] sm:$0xff] %v3833
    %3983 = vst [vmem:[#allocation7 + $0x180] sm:$0xff] %v3065
    %3984 = vst [vmem:[#allocation7 + $0x188] sm:$0xff] %v3067
    %3985 = vst [vmem:[#allocation7 + $0x190] sm:$0xff] %v3837
    %3986 = vst [vmem:[#allocation7 + $0x198] sm:$0xff] %v3839
    %3987 = vst [vmem:[#allocation7 + $0x1a0] sm:$0xff] %v3069
    %3988 = vst [vmem:[#allocation7 + $0x1a8] sm:$0xff] %v3071
    %3989 = vst [vmem:[#allocation7 + $0x1b0] sm:$0xff] %v3841
    %3990 = vst [vmem:[#allocation7 + $0x1b8] sm:$0xff] %v3843
    %3991 = vst [vmem:[#allocation7 + $0x1c0] sm:$0xff] %v3075
    %3992 = vst [vmem:[#allocation7 + $0x1c8] sm:$0xff] %v3077
    %3993 = vst [vmem:[#allocation7 + $0x1d0] sm:$0xff] %v3847
    %3994 = vst [vmem:[#allocation7 + $0x1d8] sm:$0xff] %v3849
    %3995 = vst [vmem:[#allocation7 + $0x1e0] sm:$0xff] %v3079
    %3996 = vst [vmem:[#allocation7 + $0x1e8] sm:$0xff] %v3081
    %3997 = vst [vmem:[#allocation7 + $0x1f0] sm:$0xff] %v3851
    %3998 = vst [vmem:[#allocation7 + $0x1f8] sm:$0xff] %v3853
    %3999 = vst [vmem:[#allocation7 + $0x200] sm:$0xff] %v3085
    %4000 = vst [vmem:[#allocation7 + $0x208] sm:$0xff] %v3087
    %4001 = vst [vmem:[#allocation7 + $0x210] sm:$0xff] %v3857
    %4002 = vst [vmem:[#allocation7 + $0x218] sm:$0xff] %v3859
    %4003 = vst [vmem:[#allocation7 + $0x220] sm:$0xff] %v3089
    %4004 = vst [vmem:[#allocation7 + $0x228] sm:$0xff] %v3091
    %4005 = vst [vmem:[#allocation7 + $0x230] sm:$0xff] %v3861
    %4006 = vst [vmem:[#allocation7 + $0x238] sm:$0xff] %v3863
    %4007 = vst [vmem:[#allocation7 + $0x240] sm:$0xff] %v3095
    %4008 = vst [vmem:[#allocation7 + $0x248] sm:$0xff] %v3097
    %4009 = vst [vmem:[#allocation7 + $0x250] sm:$0xff] %v3867
    %4010 = vst [vmem:[#allocation7 + $0x258] sm:$0xff] %v3869
    %4011 = vst [vmem:[#allocation7 + $0x260] sm:$0xff] %v3099
    %4012 = vst [vmem:[#allocation7 + $0x268] sm:$0xff] %v3101
    %4013 = vst [vmem:[#allocation7 + $0x270] sm:$0xff] %v3871
    %4014 = vst [vmem:[#allocation7 + $0x278] sm:$0xff] %v3873
    %4015 = vst [vmem:[#allocation7 + $0x280] sm:$0xff] %v3105
    %4016 = vst [vmem:[#allocation7 + $0x288] sm:$0xff] %v3107
    %4017 = vst [vmem:[#allocation7 + $0x290] sm:$0xff] %v3877
    %4018 = vst [vmem:[#allocation7 + $0x298] sm:$0xff] %v3879
    %4019 = vst [vmem:[#allocation7 + $0x2a0] sm:$0xff] %v3109
    %4020 = vst [vmem:[#allocation7 + $0x2a8] sm:$0xff] %v3111
    %4021 = vst [vmem:[#allocation7 + $0x2b0] sm:$0xff] %v3881
    %4022 = vst [vmem:[#allocation7 + $0x2b8] sm:$0xff] %v3883
    %4023 = vst [vmem:[#allocation7 + $0x2c0] sm:$0xff] %v3115
    %4024 = vst [vmem:[#allocation7 + $0x2c8] sm:$0xff] %v3117
    %4025 = vst [vmem:[#allocation7 + $0x2d0] sm:$0xff] %v3887
    %4026 = vst [vmem:[#allocation7 + $0x2d8] sm:$0xff] %v3889
    %4027 = vst [vmem:[#allocation7 + $0x2e0] sm:$0xff] %v3119
    %4028 = vst [vmem:[#allocation7 + $0x2e8] sm:$0xff] %v3121
    %4029 = vst [vmem:[#allocation7 + $0x2f0] sm:$0xff] %v3891
    %4030 = vst [vmem:[#allocation7 + $0x2f8] sm:$0xff] %v3893
    %4031 = vst [vmem:[#allocation7 + $0x300] sm:$0xff] %v3125
    %4032 = vst [vmem:[#allocation7 + $0x308] sm:$0xff] %v3127
    %4033 = vst [vmem:[#allocation7 + $0x310] sm:$0xff] %v3897
    %4034 = vst [vmem:[#allocation7 + $0x318] sm:$0xff] %v3899
    %4035 = vst [vmem:[#allocation7 + $0x320] sm:$0xff] %v3129
    %4036 = vst [vmem:[#allocation7 + $0x328] sm:$0xff] %v3131
    %4037 = vst [vmem:[#allocation7 + $0x330] sm:$0xff] %v3901
    %4038 = vst [vmem:[#allocation7 + $0x338] sm:$0xff] %v3903
    %4039 = vst [vmem:[#allocation7 + $0x340] sm:$0xff] %v3135
    %4040 = vst [vmem:[#allocation7 + $0x348] sm:$0xff] %v3137
    %4041 = vst [vmem:[#allocation7 + $0x350] sm:$0xff] %v3907
    %4042 = vst [vmem:[#allocation7 + $0x358] sm:$0xff] %v3909
    %4043 = vst [vmem:[#allocation7 + $0x360] sm:$0xff] %v3139
    %4044 = vst [vmem:[#allocation7 + $0x368] sm:$0xff] %v3141
    %4045 = vst [vmem:[#allocation7 + $0x370] sm:$0xff] %v3911
    %4046 = vst [vmem:[#allocation7 + $0x378] sm:$0xff] %v3913
    %4047 = vst [vmem:[#allocation7 + $0x380] sm:$0xff] %v3145
    %4048 = vst [vmem:[#allocation7 + $0x388] sm:$0xff] %v3147
    %4049 = vst [vmem:[#allocation7 + $0x390] sm:$0xff] %v3917
    %4050 = vst [vmem:[#allocation7 + $0x398] sm:$0xff] %v3919
    %4051 = vst [vmem:[#allocation7 + $0x3a0] sm:$0xff] %v3149
    %4052 = vst [vmem:[#allocation7 + $0x3a8] sm:$0xff] %v3151
    %4053 = vst [vmem:[#allocation7 + $0x3b0] sm:$0xff] %v3921
    %4054 = vst [vmem:[#allocation7 + $0x3b8] sm:$0xff] %v3923
    %4055 = vst [vmem:[#allocation7 + $0x3c0] sm:$0xff] %v3155
    %4056 = vst [vmem:[#allocation7 + $0x3c8] sm:$0xff] %v3157
    %4057 = vst [vmem:[#allocation7 + $0x3d0] sm:$0xff] %v3927
    %4058 = vst [vmem:[#allocation7 + $0x3d8] sm:$0xff] %v3929
    %4059 = vst [vmem:[#allocation7 + $0x3e0] sm:$0xff] %v3159
    %4060 = vst [vmem:[#allocation7 + $0x3e8] sm:$0xff] %v3161
    %4061 = vst [vmem:[#allocation7 + $0x3f0] sm:$0xff] %v3931
    %4062 = vst [vmem:[#allocation7 + $0x3f8] sm:$0xff] %v3933
    %v4063 = vxor.u32 %v3005, 2147483648
    %v4064 = vxor.u32 %v3007, 2147483648
    %v4065 = vxor.u32 %v3777, 2147483648
    %v4066 = vxor.u32 %v3779, 2147483648
    %v4067 = vxor.u32 %v3009, 2147483648
    %v4068 = vxor.u32 %v3011, 2147483648
    %v4069 = vxor.u32 %v3781, 2147483648
    %v4070 = vxor.u32 %v3783, 2147483648
    %v4071 = vxor.u32 %v3015, 2147483648
    %v4072 = vxor.u32 %v3017, 2147483648
    %v4073 = vxor.u32 %v3787, 2147483648
    %v4074 = vxor.u32 %v3789, 2147483648
    %v4075 = vxor.u32 %v3019, 2147483648
    %v4076 = vxor.u32 %v3021, 2147483648
    %v4077 = vxor.u32 %v3791, 2147483648
    %v4078 = vxor.u32 %v3793, 2147483648
    %v4079 = vxor.u32 %v3025, 2147483648
    %v4080 = vxor.u32 %v3027, 2147483648
    %v4081 = vxor.u32 %v3797, 2147483648
    %v4082 = vxor.u32 %v3799, 2147483648
    %v4083 = vxor.u32 %v3029, 2147483648
    %v4084 = vxor.u32 %v3031, 2147483648
    %v4085 = vxor.u32 %v3801, 2147483648
    %v4086 = vxor.u32 %v3803, 2147483648
    %v4087 = vxor.u32 %v3035, 2147483648
    %v4088 = vxor.u32 %v3037, 2147483648
    %v4089 = vxor.u32 %v3807, 2147483648
    %v4090 = vxor.u32 %v3809, 2147483648
    %v4091 = vxor.u32 %v3039, 2147483648
    %v4092 = vxor.u32 %v3041, 2147483648
    %v4093 = vxor.u32 %v3811, 2147483648
    %v4094 = vxor.u32 %v3813, 2147483648
    %v4095 = vxor.u32 %v3045, 2147483648
    %v4096 = vxor.u32 %v3047, 2147483648
    %v4097 = vxor.u32 %v3817, 2147483648
    %v4098 = vxor.u32 %v3819, 2147483648
    %v4099 = vxor.u32 %v3049, 2147483648
    %v4100 = vxor.u32 %v3051, 2147483648
    %v4101 = vxor.u32 %v3821, 2147483648
    %v4102 = vxor.u32 %v3823, 2147483648
    %v4103 = vxor.u32 %v3055, 2147483648
    %v4104 = vxor.u32 %v3057, 2147483648
    %v4105 = vxor.u32 %v3827, 2147483648
    %v4106 = vxor.u32 %v3829, 2147483648
    %v4107 = vxor.u32 %v3059, 2147483648
    %v4108 = vxor.u32 %v3061, 2147483648
    %v4109 = vxor.u32 %v3831, 2147483648
    %v4110 = vxor.u32 %v3833, 2147483648
    %v4111 = vxor.u32 %v3065, 2147483648
    %v4112 = vxor.u32 %v3067, 2147483648
    %v4113 = vxor.u32 %v3837, 2147483648
    %v4114 = vxor.u32 %v3839, 2147483648
    %v4115 = vxor.u32 %v3069, 2147483648
    %v4116 = vxor.u32 %v3071, 2147483648
    %v4117 = vxor.u32 %v3841, 2147483648
    %v4118 = vxor.u32 %v3843, 2147483648
    %v4119 = vxor.u32 %v3075, 2147483648
    %v4120 = vxor.u32 %v3077, 2147483648
    %v4121 = vxor.u32 %v3847, 2147483648
    %v4122 = vxor.u32 %v3849, 2147483648
    %v4123 = vxor.u32 %v3079, 2147483648
    %v4124 = vxor.u32 %v3081, 2147483648
    %v4125 = vxor.u32 %v3851, 2147483648
    %v4126 = vxor.u32 %v3853, 2147483648
    %v4127 = vxor.u32 %v3085, 2147483648
    %v4128 = vxor.u32 %v3087, 2147483648
    %v4129 = vxor.u32 %v3857, 2147483648
    %v4130 = vxor.u32 %v3859, 2147483648
    %v4131 = vxor.u32 %v3089, 2147483648
    %v4132 = vxor.u32 %v3091, 2147483648
    %v4133 = vxor.u32 %v3861, 2147483648
    %v4134 = vxor.u32 %v3863, 2147483648
    %v4135 = vxor.u32 %v3095, 2147483648
    %v4136 = vxor.u32 %v3097, 2147483648
    %v4137 = vxor.u32 %v3867, 2147483648
    %v4138 = vxor.u32 %v3869, 2147483648
    %v4139 = vxor.u32 %v3099, 2147483648
    %v4140 = vxor.u32 %v3101, 2147483648
    %v4141 = vxor.u32 %v3871, 2147483648
    %v4142 = vxor.u32 %v3873, 2147483648
    %v4143 = vxor.u32 %v3105, 2147483648
    %v4144 = vxor.u32 %v3107, 2147483648
    %v4145 = vxor.u32 %v3877, 2147483648
    %v4146 = vxor.u32 %v3879, 2147483648
    %v4147 = vxor.u32 %v3109, 2147483648
    %v4148 = vxor.u32 %v3111, 2147483648
    %v4149 = vxor.u32 %v3881, 2147483648
    %v4150 = vxor.u32 %v3883, 2147483648
    %v4151 = vxor.u32 %v3115, 2147483648
    %v4152 = vxor.u32 %v3117, 2147483648
    %v4153 = vxor.u32 %v3887, 2147483648
    %v4154 = vxor.u32 %v3889, 2147483648
    %v4155 = vxor.u32 %v3119, 2147483648
    %v4156 = vxor.u32 %v3121, 2147483648
    %v4157 = vxor.u32 %v3891, 2147483648
    %v4158 = vxor.u32 %v3893, 2147483648
    %v4159 = vxor.u32 %v3125, 2147483648
    %v4160 = vxor.u32 %v3127, 2147483648
    %v4161 = vxor.u32 %v3897, 2147483648
    %v4162 = vxor.u32 %v3899, 2147483648
    %v4163 = vxor.u32 %v3129, 2147483648
    %v4164 = vxor.u32 %v3131, 2147483648
    %v4165 = vxor.u32 %v3901, 2147483648
    %v4166 = vxor.u32 %v3903, 2147483648
    %v4167 = vxor.u32 %v3135, 2147483648
    %v4168 = vxor.u32 %v3137, 2147483648
    %v4169 = vxor.u32 %v3907, 2147483648
    %v4170 = vxor.u32 %v3909, 2147483648
    %v4171 = vxor.u32 %v3139, 2147483648
    %v4172 = vxor.u32 %v3141, 2147483648
    %v4173 = vxor.u32 %v3911, 2147483648
    %v4174 = vxor.u32 %v3913, 2147483648
    %v4175 = vxor.u32 %v3145, 2147483648
    %v4176 = vxor.u32 %v3147, 2147483648
    %v4177 = vxor.u32 %v3917, 2147483648
    %v4178 = vxor.u32 %v3919, 2147483648
    %v4179 = vxor.u32 %v3149, 2147483648
    %v4180 = vxor.u32 %v3151, 2147483648
    %v4181 = vxor.u32 %v3921, 2147483648
    %v4182 = vxor.u32 %v3923, 2147483648
    %v4183 = vxor.u32 %v3155, 2147483648
    %v4184 = vxor.u32 %v3157, 2147483648
    %v4185 = vxor.u32 %v3927, 2147483648
    %v4186 = vxor.u32 %v3929, 2147483648
    %v4187 = vxor.u32 %v3159, 2147483648
    %v4188 = vxor.u32 %v3161, 2147483648
    %v4189 = vxor.u32 %v3931, 2147483648
    %v4190 = vxor.u32 %v3933, 2147483648
    %v4191 = vmul.f32 %v4063, 1.442695
    %v4192 = vpow.pop %v4191
    %v4193 = vmul.f32 %v4064, 1.442695
    %v4194 = vpow.pop %v4193
    %v4195 = vmul.f32 %v4065, 1.442695
    %v4196 = vpow.pop %v4195
    %v4197 = vmul.f32 %v4066, 1.442695
    %v4198 = vpow.pop %v4197
    %v4199 = vmul.f32 %v4067, 1.442695
    %v4200 = vpow.pop %v4199
    %v4201 = vmul.f32 %v4068, 1.442695
    %v4202 = vpow.pop %v4201
    %v4203 = vmul.f32 %v4069, 1.442695
    %v4204 = vpow.pop %v4203
    %v4205 = vmul.f32 %v4070, 1.442695
    %v4206 = vpow.pop %v4205
    %v4207 = vmul.f32 %v4071, 1.442695
    %v4208 = vpow.pop %v4207
    %v4209 = vmul.f32 %v4072, 1.442695
    %v4210 = vpow.pop %v4209
    %v4211 = vmul.f32 %v4073, 1.442695
    %v4212 = vpow.pop %v4211
    %v4213 = vmul.f32 %v4074, 1.442695
    %v4214 = vpow.pop %v4213
    %v4215 = vmul.f32 %v4075, 1.442695
    %v4216 = vpow.pop %v4215
    %v4217 = vmul.f32 %v4076, 1.442695
    %v4218 = vpow.pop %v4217
    %v4219 = vmul.f32 %v4077, 1.442695
    %v4220 = vpow.pop %v4219
    %v4221 = vmul.f32 %v4078, 1.442695
    %v4222 = vpow.pop %v4221
    %v4223 = vmul.f32 %v4079, 1.442695
    %v4224 = vpow.pop %v4223
    %v4225 = vmul.f32 %v4080, 1.442695
    %v4226 = vpow.pop %v4225
    %v4227 = vmul.f32 %v4081, 1.442695
    %v4228 = vpow.pop %v4227
    %v4229 = vmul.f32 %v4082, 1.442695
    %v4230 = vpow.pop %v4229
    %v4231 = vmul.f32 %v4083, 1.442695
    %v4232 = vpow.pop %v4231
    %v4233 = vmul.f32 %v4084, 1.442695
    %v4234 = vpow.pop %v4233
    %v4235 = vmul.f32 %v4085, 1.442695
    %v4236 = vpow.pop %v4235
    %v4237 = vmul.f32 %v4086, 1.442695
    %v4238 = vpow.pop %v4237
    %v4239 = vmul.f32 %v4087, 1.442695
    %v4240 = vpow.pop %v4239
    %v4241 = vmul.f32 %v4088, 1.442695
    %v4242 = vpow.pop %v4241
    %v4243 = vmul.f32 %v4089, 1.442695
    %v4244 = vpow.pop %v4243
    %v4245 = vmul.f32 %v4090, 1.442695
    %v4246 = vpow.pop %v4245
    %v4247 = vmul.f32 %v4091, 1.442695
    %v4248 = vpow.pop %v4247
    %v4249 = vmul.f32 %v4092, 1.442695
    %v4250 = vpow.pop %v4249
    %v4251 = vmul.f32 %v4093, 1.442695
    %v4252 = vpow.pop %v4251
    %v4253 = vmul.f32 %v4094, 1.442695
    %v4254 = vpow.pop %v4253
    %v4255 = vmul.f32 %v4095, 1.442695
    %v4256 = vpow.pop %v4255
    %v4257 = vmul.f32 %v4096, 1.442695
    %v4258 = vpow.pop %v4257
    %v4259 = vmul.f32 %v4097, 1.442695
    %v4260 = vpow.pop %v4259
    %v4261 = vmul.f32 %v4098, 1.442695
    %v4262 = vpow.pop %v4261
    %v4263 = vmul.f32 %v4099, 1.442695
    %v4264 = vpow.pop %v4263
    %v4265 = vmul.f32 %v4100, 1.442695
    %v4266 = vpow.pop %v4265
    %v4267 = vmul.f32 %v4101, 1.442695
    %v4268 = vpow.pop %v4267
    %v4269 = vmul.f32 %v4102, 1.442695
    %v4270 = vpow.pop %v4269
    %v4271 = vmul.f32 %v4103, 1.442695
    %v4272 = vpow.pop %v4271
    %v4273 = vmul.f32 %v4104, 1.442695
    %v4274 = vpow.pop %v4273
    %v4275 = vmul.f32 %v4105, 1.442695
    %v4276 = vpow.pop %v4275
    %v4277 = vmul.f32 %v4106, 1.442695
    %v4278 = vpow.pop %v4277
    %v4279 = vmul.f32 %v4107, 1.442695
    %v4280 = vpow.pop %v4279
    %v4281 = vmul.f32 %v4108, 1.442695
    %v4282 = vpow.pop %v4281
    %v4283 = vmul.f32 %v4109, 1.442695
    %v4284 = vpow.pop %v4283
    %v4285 = vmul.f32 %v4110, 1.442695
    %v4286 = vpow.pop %v4285
    %v4287 = vmul.f32 %v4111, 1.442695
    %v4288 = vpow.pop %v4287
    %v4289 = vmul.f32 %v4112, 1.442695
    %v4290 = vpow.pop %v4289
    %v4291 = vmul.f32 %v4113, 1.442695
    %v4292 = vpow.pop %v4291
    %v4293 = vmul.f32 %v4114, 1.442695
    %v4294 = vpow.pop %v4293
    %v4295 = vmul.f32 %v4115, 1.442695
    %v4296 = vpow.pop %v4295
    %v4297 = vmul.f32 %v4116, 1.442695
    %v4298 = vpow.pop %v4297
    %v4299 = vmul.f32 %v4117, 1.442695
    %v4300 = vpow.pop %v4299
    %v4301 = vmul.f32 %v4118, 1.442695
    %v4302 = vpow.pop %v4301
    %v4303 = vmul.f32 %v4119, 1.442695
    %v4304 = vpow.pop %v4303
    %v4305 = vmul.f32 %v4120, 1.442695
    %v4306 = vpow.pop %v4305
    %v4307 = vmul.f32 %v4121, 1.442695
    %v4308 = vpow.pop %v4307
    %v4309 = vmul.f32 %v4122, 1.442695
    %v4310 = vpow.pop %v4309
    %v4311 = vmul.f32 %v4123, 1.442695
    %v4312 = vpow.pop %v4311
    %v4313 = vmul.f32 %v4124, 1.442695
    %v4314 = vpow.pop %v4313
    %v4315 = vmul.f32 %v4125, 1.442695
    %v4316 = vpow.pop %v4315
    %v4317 = vmul.f32 %v4126, 1.442695
    %v4318 = vpow.pop %v4317
    %v4319 = vmul.f32 %v4127, 1.442695
    %v4320 = vpow.pop %v4319
    %v4321 = vmul.f32 %v4128, 1.442695
    %v4322 = vpow.pop %v4321
    %v4323 = vmul.f32 %v4129, 1.442695
    %v4324 = vpow.pop %v4323
    %v4325 = vmul.f32 %v4130, 1.442695
    %v4326 = vpow.pop %v4325
    %v4327 = vmul.f32 %v4131, 1.442695
    %v4328 = vpow.pop %v4327
    %v4329 = vmul.f32 %v4132, 1.442695
    %v4330 = vpow.pop %v4329
    %v4331 = vmul.f32 %v4133, 1.442695
    %v4332 = vpow.pop %v4331
    %v4333 = vmul.f32 %v4134, 1.442695
    %v4334 = vpow.pop %v4333
    %v4335 = vmul.f32 %v4135, 1.442695
    %v4336 = vpow.pop %v4335
    %v4337 = vmul.f32 %v4136, 1.442695
    %v4338 = vpow.pop %v4337
    %v4339 = vmul.f32 %v4137, 1.442695
    %v4340 = vpow.pop %v4339
    %v4341 = vmul.f32 %v4138, 1.442695
    %v4342 = vpow.pop %v4341
    %v4343 = vmul.f32 %v4139, 1.442695
    %v4344 = vpow.pop %v4343
    %v4345 = vmul.f32 %v4140, 1.442695
    %v4346 = vpow.pop %v4345
    %v4347 = vmul.f32 %v4141, 1.442695
    %v4348 = vpow.pop %v4347
    %v4349 = vmul.f32 %v4142, 1.442695
    %v4350 = vpow.pop %v4349
    %v4351 = vmul.f32 %v4143, 1.442695
    %v4352 = vpow.pop %v4351
    %v4353 = vmul.f32 %v4144, 1.442695
    %v4354 = vpow.pop %v4353
    %v4355 = vmul.f32 %v4145, 1.442695
    %v4356 = vpow.pop %v4355
    %v4357 = vmul.f32 %v4146, 1.442695
    %v4358 = vpow.pop %v4357
    %v4359 = vmul.f32 %v4147, 1.442695
    %v4360 = vpow.pop %v4359
    %v4361 = vmul.f32 %v4148, 1.442695
    %v4362 = vpow.pop %v4361
    %v4363 = vmul.f32 %v4149, 1.442695
    %v4364 = vpow.pop %v4363
    %v4365 = vmul.f32 %v4150, 1.442695
    %v4366 = vpow.pop %v4365
    %v4367 = vmul.f32 %v4151, 1.442695
    %v4368 = vpow.pop %v4367
    %v4369 = vmul.f32 %v4152, 1.442695
    %v4370 = vpow.pop %v4369
    %v4371 = vmul.f32 %v4153, 1.442695
    %v4372 = vpow.pop %v4371
    %v4373 = vmul.f32 %v4154, 1.442695
    %v4374 = vpow.pop %v4373
    %v4375 = vmul.f32 %v4155, 1.442695
    %v4376 = vpow.pop %v4375
    %v4377 = vmul.f32 %v4156, 1.442695
    %v4378 = vpow.pop %v4377
    %v4379 = vmul.f32 %v4157, 1.442695
    %v4380 = vpow.pop %v4379
    %v4381 = vmul.f32 %v4158, 1.442695
    %v4382 = vpow.pop %v4381
    %v4383 = vmul.f32 %v4159, 1.442695
    %v4384 = vpow.pop %v4383
    %v4385 = vmul.f32 %v4160, 1.442695
    %v4386 = vpow.pop %v4385
    %v4387 = vmul.f32 %v4161, 1.442695
    %v4388 = vpow.pop %v4387
    %v4389 = vmul.f32 %v4162, 1.442695
    %v4390 = vpow.pop %v4389
    %v4391 = vmul.f32 %v4163, 1.442695
    %v4392 = vpow.pop %v4391
    %v4393 = vmul.f32 %v4164, 1.442695
    %v4394 = vpow.pop %v4393
    %v4395 = vmul.f32 %v4165, 1.442695
    %v4396 = vpow.pop %v4395
    %v4397 = vmul.f32 %v4166, 1.442695
    %v4398 = vpow.pop %v4397
    %v4399 = vmul.f32 %v4167, 1.442695
    %v4400 = vpow.pop %v4399
    %v4401 = vmul.f32 %v4168, 1.442695
    %v4402 = vpow.pop %v4401
    %v4403 = vmul.f32 %v4169, 1.442695
    %v4404 = vpow.pop %v4403
    %v4405 = vmul.f32 %v4170, 1.442695
    %v4406 = vpow.pop %v4405
    %v4407 = vmul.f32 %v4171, 1.442695
    %v4408 = vpow.pop %v4407
    %v4409 = vmul.f32 %v4172, 1.442695
    %v4410 = vpow.pop %v4409
    %v4411 = vmul.f32 %v4173, 1.442695
    %v4412 = vpow.pop %v4411
    %v4413 = vmul.f32 %v4174, 1.442695
    %v4414 = vpow.pop %v4413
    %v4415 = vmul.f32 %v4175, 1.442695
    %v4416 = vpow.pop %v4415
    %v4417 = vmul.f32 %v4176, 1.442695
    %v4418 = vpow.pop %v4417
    %v4419 = vmul.f32 %v4177, 1.442695
    %v4420 = vpow.pop %v4419
    %v4421 = vmul.f32 %v4178, 1.442695
    %v4422 = vpow.pop %v4421
    %v4423 = vmul.f32 %v4179, 1.442695
    %v4424 = vpow.pop %v4423
    %v4425 = vmul.f32 %v4180, 1.442695
    %v4426 = vpow.pop %v4425
    %v4427 = vmul.f32 %v4181, 1.442695
    %v4428 = vpow.pop %v4427
    %v4429 = vmul.f32 %v4182, 1.442695
    %v4430 = vpow.pop %v4429
    %v4431 = vmul.f32 %v4183, 1.442695
    %v4432 = vpow.pop %v4431
    %v4433 = vmul.f32 %v4184, 1.442695
    %v4434 = vpow.pop %v4433
    %v4435 = vmul.f32 %v4185, 1.442695
    %v4436 = vpow.pop %v4435
    %v4437 = vmul.f32 %v4186, 1.442695
    %v4438 = vpow.pop %v4437
    %v4439 = vmul.f32 %v4187, 1.442695
    %v4440 = vpow.pop %v4439
    %v4441 = vmul.f32 %v4188, 1.442695
    %v4442 = vpow.pop %v4441
    %v4443 = vmul.f32 %v4189, 1.442695
    %v4444 = vpow.pop %v4443
    %v4445 = vmul.f32 %v4190, 1.442695
    %v4446 = vpow.pop %v4445
    %v4447 = vadd.f32 %v4192, 1.0
    %v4448 = vadd.f32 %v4194, 1.0
    %v4449 = vadd.f32 %v4196, 1.0
    %v4450 = vadd.f32 %v4198, 1.0
    %v4451 = vadd.f32 %v4200, 1.0
    %v4452 = vadd.f32 %v4202, 1.0
    %v4453 = vadd.f32 %v4204, 1.0
    %v4454 = vadd.f32 %v4206, 1.0
    %v4455 = vadd.f32 %v4208, 1.0
    %v4456 = vadd.f32 %v4210, 1.0
    %v4457 = vadd.f32 %v4212, 1.0
    %v4458 = vadd.f32 %v4214, 1.0
    %v4459 = vadd.f32 %v4216, 1.0
    %v4460 = vadd.f32 %v4218, 1.0
    %v4461 = vadd.f32 %v4220, 1.0
    %v4462 = vadd.f32 %v4222, 1.0
    %v4463 = vadd.f32 %v4224, 1.0
    %v4464 = vadd.f32 %v4226, 1.0
    %v4465 = vadd.f32 %v4228, 1.0
    %v4466 = vadd.f32 %v4230, 1.0
    %v4467 = vadd.f32 %v4232, 1.0
    %v4468 = vadd.f32 %v4234, 1.0
    %v4469 = vadd.f32 %v4236, 1.0
    %v4470 = vadd.f32 %v4238, 1.0
    %v4471 = vadd.f32 %v4240, 1.0
    %v4472 = vadd.f32 %v4242, 1.0
    %v4473 = vadd.f32 %v4244, 1.0
    %v4474 = vadd.f32 %v4246, 1.0
    %v4475 = vadd.f32 %v4248, 1.0
    %v4476 = vadd.f32 %v4250, 1.0
    %v4477 = vadd.f32 %v4252, 1.0
    %v4478 = vadd.f32 %v4254, 1.0
    %v4479 = vadd.f32 %v4256, 1.0
    %v4480 = vadd.f32 %v4258, 1.0
    %v4481 = vadd.f32 %v4260, 1.0
    %v4482 = vadd.f32 %v4262, 1.0
    %v4483 = vadd.f32 %v4264, 1.0
    %v4484 = vadd.f32 %v4266, 1.0
    %v4485 = vadd.f32 %v4268, 1.0
    %v4486 = vadd.f32 %v4270, 1.0
    %v4487 = vadd.f32 %v4272, 1.0
    %v4488 = vadd.f32 %v4274, 1.0
    %v4489 = vadd.f32 %v4276, 1.0
    %v4490 = vadd.f32 %v4278, 1.0
    %v4491 = vadd.f32 %v4280, 1.0
    %v4492 = vadd.f32 %v4282, 1.0
    %v4493 = vadd.f32 %v4284, 1.0
    %v4494 = vadd.f32 %v4286, 1.0
    %v4495 = vadd.f32 %v4288, 1.0
    %v4496 = vadd.f32 %v4290, 1.0
    %v4497 = vadd.f32 %v4292, 1.0
    %v4498 = vadd.f32 %v4294, 1.0
    %v4499 = vadd.f32 %v4296, 1.0
    %v4500 = vadd.f32 %v4298, 1.0
    %v4501 = vadd.f32 %v4300, 1.0
    %v4502 = vadd.f32 %v4302, 1.0
    %v4503 = vadd.f32 %v4304, 1.0
    %v4504 = vadd.f32 %v4306, 1.0
    %v4505 = vadd.f32 %v4308, 1.0
    %v4506 = vadd.f32 %v4310, 1.0
    %v4507 = vadd.f32 %v4312, 1.0
    %v4508 = vadd.f32 %v4314, 1.0
    %v4509 = vadd.f32 %v4316, 1.0
    %v4510 = vadd.f32 %v4318, 1.0
    %v4511 = vadd.f32 %v4320, 1.0
    %v4512 = vadd.f32 %v4322, 1.0
    %v4513 = vadd.f32 %v4324, 1.0
    %v4514 = vadd.f32 %v4326, 1.0
    %v4515 = vadd.f32 %v4328, 1.0
    %v4516 = vadd.f32 %v4330, 1.0
    %v4517 = vadd.f32 %v4332, 1.0
    %v4518 = vadd.f32 %v4334, 1.0
    %v4519 = vadd.f32 %v4336, 1.0
    %v4520 = vadd.f32 %v4338, 1.0
    %v4521 = vadd.f32 %v4340, 1.0
    %v4522 = vadd.f32 %v4342, 1.0
    %v4523 = vadd.f32 %v4344, 1.0
    %v4524 = vadd.f32 %v4346, 1.0
    %v4525 = vadd.f32 %v4348, 1.0
    %v4526 = vadd.f32 %v4350, 1.0
    %v4527 = vadd.f32 %v4352, 1.0
    %v4528 = vadd.f32 %v4354, 1.0
    %v4529 = vadd.f32 %v4356, 1.0
    %v4530 = vadd.f32 %v4358, 1.0
    %v4531 = vadd.f32 %v4360, 1.0
    %v4532 = vadd.f32 %v4362, 1.0
    %v4533 = vadd.f32 %v4364, 1.0
    %v4534 = vadd.f32 %v4366, 1.0
    %v4535 = vadd.f32 %v4368, 1.0
    %v4536 = vadd.f32 %v4370, 1.0
    %v4537 = vadd.f32 %v4372, 1.0
    %v4538 = vadd.f32 %v4374, 1.0
    %v4539 = vadd.f32 %v4376, 1.0
    %v4540 = vadd.f32 %v4378, 1.0
    %v4541 = vadd.f32 %v4380, 1.0
    %v4542 = vadd.f32 %v4382, 1.0
    %v4543 = vadd.f32 %v4384, 1.0
    %v4544 = vadd.f32 %v4386, 1.0
    %v4545 = vadd.f32 %v4388, 1.0
    %v4546 = vadd.f32 %v4390, 1.0
    %v4547 = vadd.f32 %v4392, 1.0
    %v4548 = vadd.f32 %v4394, 1.0
    %v4549 = vadd.f32 %v4396, 1.0
    %v4550 = vadd.f32 %v4398, 1.0
    %v4551 = vadd.f32 %v4400, 1.0
    %v4552 = vadd.f32 %v4402, 1.0
    %v4553 = vadd.f32 %v4404, 1.0
    %v4554 = vadd.f32 %v4406, 1.0
    %v4555 = vadd.f32 %v4408, 1.0
    %v4556 = vadd.f32 %v4410, 1.0
    %v4557 = vadd.f32 %v4412, 1.0
    %v4558 = vadd.f32 %v4414, 1.0
    %v4559 = vadd.f32 %v4416, 1.0
    %v4560 = vadd.f32 %v4418, 1.0
    %v4561 = vadd.f32 %v4420, 1.0
    %v4562 = vadd.f32 %v4422, 1.0
    %v4563 = vadd.f32 %v4424, 1.0
    %v4564 = vadd.f32 %v4426, 1.0
    %v4565 = vadd.f32 %v4428, 1.0
    %v4566 = vadd.f32 %v4430, 1.0
    %v4567 = vadd.f32 %v4432, 1.0
    %v4568 = vadd.f32 %v4434, 1.0
    %v4569 = vadd.f32 %v4436, 1.0
    %v4570 = vadd.f32 %v4438, 1.0
    %v4571 = vadd.f32 %v4440, 1.0
    %v4572 = vadd.f32 %v4442, 1.0
    %v4573 = vadd.f32 %v4444, 1.0
    %v4574 = vadd.f32 %v4446, 1.0
    %v4575 = vrcp.pop %v4447
    %v4576 = vmul.f32 1.0, %v4575
    %v4577 = vrcp.pop %v4448
    %v4578 = vmul.f32 1.0, %v4577
    %v4579 = vrcp.pop %v4449
    %v4580 = vmul.f32 1.0, %v4579
    %v4581 = vrcp.pop %v4450
    %v4582 = vmul.f32 1.0, %v4581
    %v4583 = vrcp.pop %v4451
    %v4584 = vmul.f32 1.0, %v4583
    %v4585 = vrcp.pop %v4452
    %v4586 = vmul.f32 1.0, %v4585
    %v4587 = vrcp.pop %v4453
    %v4588 = vmul.f32 1.0, %v4587
    %v4589 = vrcp.pop %v4454
    %v4590 = vmul.f32 1.0, %v4589
    %v4591 = vrcp.pop %v4455
    %v4592 = vmul.f32 1.0, %v4591
    %v4593 = vrcp.pop %v4456
    %v4594 = vmul.f32 1.0, %v4593
    %v4595 = vrcp.pop %v4457
    %v4596 = vmul.f32 1.0, %v4595
    %v4597 = vrcp.pop %v4458
    %v4598 = vmul.f32 1.0, %v4597
    %v4599 = vrcp.pop %v4459
    %v4600 = vmul.f32 1.0, %v4599
    %v4601 = vrcp.pop %v4460
    %v4602 = vmul.f32 1.0, %v4601
    %v4603 = vrcp.pop %v4461
    %v4604 = vmul.f32 1.0, %v4603
    %v4605 = vrcp.pop %v4462
    %v4606 = vmul.f32 1.0, %v4605
    %v4607 = vrcp.pop %v4463
    %v4608 = vmul.f32 1.0, %v4607
    %v4609 = vrcp.pop %v4464
    %v4610 = vmul.f32 1.0, %v4609
    %v4611 = vrcp.pop %v4465
    %v4612 = vmul.f32 1.0, %v4611
    %v4613 = vrcp.pop %v4466
    %v4614 = vmul.f32 1.0, %v4613
    %v4615 = vrcp.pop %v4467
    %v4616 = vmul.f32 1.0, %v4615
    %v4617 = vrcp.pop %v4468
    %v4618 = vmul.f32 1.0, %v4617
    %v4619 = vrcp.pop %v4469
    %v4620 = vmul.f32 1.0, %v4619
    %v4621 = vrcp.pop %v4470
    %v4622 = vmul.f32 1.0, %v4621
    %v4623 = vrcp.pop %v4471
    %v4624 = vmul.f32 1.0, %v4623
    %v4625 = vrcp.pop %v4472
    %v4626 = vmul.f32 1.0, %v4625
    %v4627 = vrcp.pop %v4473
    %v4628 = vmul.f32 1.0, %v4627
    %v4629 = vrcp.pop %v4474
    %v4630 = vmul.f32 1.0, %v4629
    %v4631 = vrcp.pop %v4475
    %v4632 = vmul.f32 1.0, %v4631
    %v4633 = vrcp.pop %v4476
    %v4634 = vmul.f32 1.0, %v4633
    %v4635 = vrcp.pop %v4477
    %v4636 = vmul.f32 1.0, %v4635
    %v4637 = vrcp.pop %v4478
    %v4638 = vmul.f32 1.0, %v4637
    %v4639 = vrcp.pop %v4479
    %v4640 = vmul.f32 1.0, %v4639
    %v4641 = vrcp.pop %v4480
    %v4642 = vmul.f32 1.0, %v4641
    %v4643 = vrcp.pop %v4481
    %v4644 = vmul.f32 1.0, %v4643
    %v4645 = vrcp.pop %v4482
    %v4646 = vmul.f32 1.0, %v4645
    %v4647 = vrcp.pop %v4483
    %v4648 = vmul.f32 1.0, %v4647
    %v4649 = vrcp.pop %v4484
    %v4650 = vmul.f32 1.0, %v4649
    %v4651 = vrcp.pop %v4485
    %v4652 = vmul.f32 1.0, %v4651
    %v4653 = vrcp.pop %v4486
    %v4654 = vmul.f32 1.0, %v4653
    %v4655 = vrcp.pop %v4487
    %v4656 = vmul.f32 1.0, %v4655
    %v4657 = vrcp.pop %v4488
    %v4658 = vmul.f32 1.0, %v4657
    %v4659 = vrcp.pop %v4489
    %v4660 = vmul.f32 1.0, %v4659
    %v4661 = vrcp.pop %v4490
    %v4662 = vmul.f32 1.0, %v4661
    %v4663 = vrcp.pop %v4491
    %v4664 = vmul.f32 1.0, %v4663
    %v4665 = vrcp.pop %v4492
    %v4666 = vmul.f32 1.0, %v4665
    %v4667 = vrcp.pop %v4493
    %v4668 = vmul.f32 1.0, %v4667
    %v4669 = vrcp.pop %v4494
    %v4670 = vmul.f32 1.0, %v4669
    %v4671 = vrcp.pop %v4495
    %v4672 = vmul.f32 1.0, %v4671
    %v4673 = vrcp.pop %v4496
    %v4674 = vmul.f32 1.0, %v4673
    %v4675 = vrcp.pop %v4497
    %v4676 = vmul.f32 1.0, %v4675
    %v4677 = vrcp.pop %v4498
    %v4678 = vmul.f32 1.0, %v4677
    %v4679 = vrcp.pop %v4499
    %v4680 = vmul.f32 1.0, %v4679
    %v4681 = vrcp.pop %v4500
    %v4682 = vmul.f32 1.0, %v4681
    %v4683 = vrcp.pop %v4501
    %v4684 = vmul.f32 1.0, %v4683
    %v4685 = vrcp.pop %v4502
    %v4686 = vmul.f32 1.0, %v4685
    %v4687 = vrcp.pop %v4503
    %v4688 = vmul.f32 1.0, %v4687
    %v4689 = vrcp.pop %v4504
    %v4690 = vmul.f32 1.0, %v4689
    %v4691 = vrcp.pop %v4505
    %v4692 = vmul.f32 1.0, %v4691
    %v4693 = vrcp.pop %v4506
    %v4694 = vmul.f32 1.0, %v4693
    %v4695 = vrcp.pop %v4507
    %v4696 = vmul.f32 1.0, %v4695
    %v4697 = vrcp.pop %v4508
    %v4698 = vmul.f32 1.0, %v4697
    %v4699 = vrcp.pop %v4509
    %v4700 = vmul.f32 1.0, %v4699
    %v4701 = vrcp.pop %v4510
    %v4702 = vmul.f32 1.0, %v4701
    %v4703 = vrcp.pop %v4511
    %v4704 = vmul.f32 1.0, %v4703
    %v4705 = vrcp.pop %v4512
    %v4706 = vmul.f32 1.0, %v4705
    %v4707 = vrcp.pop %v4513
    %v4708 = vmul.f32 1.0, %v4707
    %v4709 = vrcp.pop %v4514
    %v4710 = vmul.f32 1.0, %v4709
    %v4711 = vrcp.pop %v4515
    %v4712 = vmul.f32 1.0, %v4711
    %v4713 = vrcp.pop %v4516
    %v4714 = vmul.f32 1.0, %v4713
    %v4715 = vrcp.pop %v4517
    %v4716 = vmul.f32 1.0, %v4715
    %v4717 = vrcp.pop %v4518
    %v4718 = vmul.f32 1.0, %v4717
    %v4719 = vrcp.pop %v4519
    %v4720 = vmul.f32 1.0, %v4719
    %v4721 = vrcp.pop %v4520
    %v4722 = vmul.f32 1.0, %v4721
    %v4723 = vrcp.pop %v4521
    %v4724 = vmul.f32 1.0, %v4723
    %v4725 = vrcp.pop %v4522
    %v4726 = vmul.f32 1.0, %v4725
    %v4727 = vrcp.pop %v4523
    %v4728 = vmul.f32 1.0, %v4727
    %v4729 = vrcp.pop %v4524
    %v4730 = vmul.f32 1.0, %v4729
    %v4731 = vrcp.pop %v4525
    %v4732 = vmul.f32 1.0, %v4731
    %v4733 = vrcp.pop %v4526
    %v4734 = vmul.f32 1.0, %v4733
    %v4735 = vrcp.pop %v4527
    %v4736 = vmul.f32 1.0, %v4735
    %v4737 = vrcp.pop %v4528
    %v4738 = vmul.f32 1.0, %v4737
    %v4739 = vrcp.pop %v4529
    %v4740 = vmul.f32 1.0, %v4739
    %v4741 = vrcp.pop %v4530
    %v4742 = vmul.f32 1.0, %v4741
    %v4743 = vrcp.pop %v4531
    %v4744 = vmul.f32 1.0, %v4743
    %v4745 = vrcp.pop %v4532
    %v4746 = vmul.f32 1.0, %v4745
    %v4747 = vrcp.pop %v4533
    %v4748 = vmul.f32 1.0, %v4747
    %v4749 = vrcp.pop %v4534
    %v4750 = vmul.f32 1.0, %v4749
    %v4751 = vrcp.pop %v4535
    %v4752 = vmul.f32 1.0, %v4751
    %v4753 = vrcp.pop %v4536
    %v4754 = vmul.f32 1.0, %v4753
    %v4755 = vrcp.pop %v4537
    %v4756 = vmul.f32 1.0, %v4755
    %v4757 = vrcp.pop %v4538
    %v4758 = vmul.f32 1.0, %v4757
    %v4759 = vrcp.pop %v4539
    %v4760 = vmul.f32 1.0, %v4759
    %v4761 = vrcp.pop %v4540
    %v4762 = vmul.f32 1.0, %v4761
    %v4763 = vrcp.pop %v4541
    %v4764 = vmul.f32 1.0, %v4763
    %v4765 = vrcp.pop %v4542
    %v4766 = vmul.f32 1.0, %v4765
    %v4767 = vrcp.pop %v4543
    %v4768 = vmul.f32 1.0, %v4767
    %v4769 = vrcp.pop %v4544
    %v4770 = vmul.f32 1.0, %v4769
    %v4771 = vrcp.pop %v4545
    %v4772 = vmul.f32 1.0, %v4771
    %v4773 = vrcp.pop %v4546
    %v4774 = vmul.f32 1.0, %v4773
    %v4775 = vrcp.pop %v4547
    %v4776 = vmul.f32 1.0, %v4775
    %v4777 = vrcp.pop %v4548
    %v4778 = vmul.f32 1.0, %v4777
    %v4779 = vrcp.pop %v4549
    %v4780 = vmul.f32 1.0, %v4779
    %v4781 = vrcp.pop %v4550
    %v4782 = vmul.f32 1.0, %v4781
    %v4783 = vrcp.pop %v4551
    %v4784 = vmul.f32 1.0, %v4783
    %v4785 = vrcp.pop %v4552
    %v4786 = vmul.f32 1.0, %v4785
    %v4787 = vrcp.pop %v4553
    %v4788 = vmul.f32 1.0, %v4787
    %v4789 = vrcp.pop %v4554
    %v4790 = vmul.f32 1.0, %v4789
    %v4791 = vrcp.pop %v4555
    %v4792 = vmul.f32 1.0, %v4791
    %v4793 = vrcp.pop %v4556
    %v4794 = vmul.f32 1.0, %v4793
    %v4795 = vrcp.pop %v4557
    %v4796 = vmul.f32 1.0, %v4795
    %v4797 = vrcp.pop %v4558
    %v4798 = vmul.f32 1.0, %v4797
    %v4799 = vrcp.pop %v4559
    %v4800 = vmul.f32 1.0, %v4799
    %v4801 = vrcp.pop %v4560
    %v4802 = vmul.f32 1.0, %v4801
    %v4803 = vrcp.pop %v4561
    %v4804 = vmul.f32 1.0, %v4803
    %v4805 = vrcp.pop %v4562
    %v4806 = vmul.f32 1.0, %v4805
    %v4807 = vrcp.pop %v4563
    %v4808 = vmul.f32 1.0, %v4807
    %v4809 = vrcp.pop %v4564
    %v4810 = vmul.f32 1.0, %v4809
    %v4811 = vrcp.pop %v4565
    %v4812 = vmul.f32 1.0, %v4811
    %v4813 = vrcp.pop %v4566
    %v4814 = vmul.f32 1.0, %v4813
    %v4815 = vrcp.pop %v4567
    %v4816 = vmul.f32 1.0, %v4815
    %v4817 = vrcp.pop %v4568
    %v4818 = vmul.f32 1.0, %v4817
    %v4819 = vrcp.pop %v4569
    %v4820 = vmul.f32 1.0, %v4819
    %v4821 = vrcp.pop %v4570
    %v4822 = vmul.f32 1.0, %v4821
    %v4823 = vrcp.pop %v4571
    %v4824 = vmul.f32 1.0, %v4823
    %v4825 = vrcp.pop %v4572
    %v4826 = vmul.f32 1.0, %v4825
    %v4827 = vrcp.pop %v4573
    %v4828 = vmul.f32 1.0, %v4827
    %v4829 = vrcp.pop %v4574
    %v4830 = vmul.f32 1.0, %v4829
    %4831 = vst [vmem:[#allocation8] sm:$0xff] %v4576
    %4832 = vst [vmem:[#allocation8 + $0x8] sm:$0xff] %v4578
    %4833 = vst [vmem:[#allocation8 + $0x10] sm:$0xff] %v4580
    %4834 = vst [vmem:[#allocation8 + $0x18] sm:$0xff] %v4582
    %4835 = vst [vmem:[#allocation8 + $0x20] sm:$0xff] %v4584
    %4836 = vst [vmem:[#allocation8 + $0x28] sm:$0xff] %v4586
    %4837 = vst [vmem:[#allocation8 + $0x30] sm:$0xff] %v4588
    %4838 = vst [vmem:[#allocation8 + $0x38] sm:$0xff] %v4590
    %4839 = vst [vmem:[#allocation8 + $0x40] sm:$0xff] %v4592
    %4840 = vst [vmem:[#allocation8 + $0x48] sm:$0xff] %v4594
    %4841 = vst [vmem:[#allocation8 + $0x50] sm:$0xff] %v4596
    %4842 = vst [vmem:[#allocation8 + $0x58] sm:$0xff] %v4598
    %4843 = vst [vmem:[#allocation8 + $0x60] sm:$0xff] %v4600
    %4844 = vst [vmem:[#allocation8 + $0x68] sm:$0xff] %v4602
    %4845 = vst [vmem:[#allocation8 + $0x70] sm:$0xff] %v4604
    %4846 = vst [vmem:[#allocation8 + $0x78] sm:$0xff] %v4606
    %4847 = vst [vmem:[#allocation8 + $0x80] sm:$0xff] %v4608
    %4848 = vst [vmem:[#allocation8 + $0x88] sm:$0xff] %v4610
    %4849 = vst [vmem:[#allocation8 + $0x90] sm:$0xff] %v4612
    %4850 = vst [vmem:[#allocation8 + $0x98] sm:$0xff] %v4614
    %4851 = vst [vmem:[#allocation8 + $0xa0] sm:$0xff] %v4616
    %4852 = vst [vmem:[#allocation8 + $0xa8] sm:$0xff] %v4618
    %4853 = vst [vmem:[#allocation8 + $0xb0] sm:$0xff] %v4620
    %4854 = vst [vmem:[#allocation8 + $0xb8] sm:$0xff] %v4622
    %4855 = vst [vmem:[#allocation8 + $0xc0] sm:$0xff] %v4624
    %4856 = vst [vmem:[#allocation8 + $0xc8] sm:$0xff] %v4626
    %4857 = vst [vmem:[#allocation8 + $0xd0] sm:$0xff] %v4628
    %4858 = vst [vmem:[#allocation8 + $0xd8] sm:$0xff] %v4630
    %4859 = vst [vmem:[#allocation8 + $0xe0] sm:$0xff] %v4632
    %4860 = vst [vmem:[#allocation8 + $0xe8] sm:$0xff] %v4634
    %4861 = vst [vmem:[#allocation8 + $0xf0] sm:$0xff] %v4636
    %4862 = vst [vmem:[#allocation8 + $0xf8] sm:$0xff] %v4638
    %4863 = vst [vmem:[#allocation8 + $0x100] sm:$0xff] %v4640
    %4864 = vst [vmem:[#allocation8 + $0x108] sm:$0xff] %v4642
    %4865 = vst [vmem:[#allocation8 + $0x110] sm:$0xff] %v4644
    %4866 = vst [vmem:[#allocation8 + $0x118] sm:$0xff] %v4646
    %4867 = vst [vmem:[#allocation8 + $0x120] sm:$0xff] %v4648
    %4868 = vst [vmem:[#allocation8 + $0x128] sm:$0xff] %v4650
    %4869 = vst [vmem:[#allocation8 + $0x130] sm:$0xff] %v4652
    %4870 = vst [vmem:[#allocation8 + $0x138] sm:$0xff] %v4654
    %4871 = vst [vmem:[#allocation8 + $0x140] sm:$0xff] %v4656
    %4872 = vst [vmem:[#allocation8 + $0x148] sm:$0xff] %v4658
    %4873 = vst [vmem:[#allocation8 + $0x150] sm:$0xff] %v4660
    %4874 = vst [vmem:[#allocation8 + $0x158] sm:$0xff] %v4662
    %4875 = vst [vmem:[#allocation8 + $0x160] sm:$0xff] %v4664
    %4876 = vst [vmem:[#allocation8 + $0x168] sm:$0xff] %v4666
    %4877 = vst [vmem:[#allocation8 + $0x170] sm:$0xff] %v4668
    %4878 = vst [vmem:[#allocation8 + $0x178] sm:$0xff] %v4670
    %4879 = vst [vmem:[#allocation8 + $0x180] sm:$0xff] %v4672
    %4880 = vst [vmem:[#allocation8 + $0x188] sm:$0xff] %v4674
    %4881 = vst [vmem:[#allocation8 + $0x190] sm:$0xff] %v4676
    %4882 = vst [vmem:[#allocation8 + $0x198] sm:$0xff] %v4678
    %4883 = vst [vmem:[#allocation8 + $0x1a0] sm:$0xff] %v4680
    %4884 = vst [vmem:[#allocation8 + $0x1a8] sm:$0xff] %v4682
    %4885 = vst [vmem:[#allocation8 + $0x1b0] sm:$0xff] %v4684
    %4886 = vst [vmem:[#allocation8 + $0x1b8] sm:$0xff] %v4686
    %4887 = vst [vmem:[#allocation8 + $0x1c0] sm:$0xff] %v4688
    %4888 = vst [vmem:[#allocation8 + $0x1c8] sm:$0xff] %v4690
    %4889 = vst [vmem:[#allocation8 + $0x1d0] sm:$0xff] %v4692
    %4890 = vst [vmem:[#allocation8 + $0x1d8] sm:$0xff] %v4694
    %4891 = vst [vmem:[#allocation8 + $0x1e0] sm:$0xff] %v4696
    %4892 = vst [vmem:[#allocation8 + $0x1e8] sm:$0xff] %v4698
    %4893 = vst [vmem:[#allocation8 + $0x1f0] sm:$0xff] %v4700
    %4894 = vst [vmem:[#allocation8 + $0x1f8] sm:$0xff] %v4702
    %4895 = vst [vmem:[#allocation8 + $0x200] sm:$0xff] %v4704
    %4896 = vst [vmem:[#allocation8 + $0x208] sm:$0xff] %v4706
    %4897 = vst [vmem:[#allocation8 + $0x210] sm:$0xff] %v4708
    %4898 = vst [vmem:[#allocation8 + $0x218] sm:$0xff] %v4710
    %4899 = vst [vmem:[#allocation8 + $0x220] sm:$0xff] %v4712
    %4900 = vst [vmem:[#allocation8 + $0x228] sm:$0xff] %v4714
    %4901 = vst [vmem:[#allocation8 + $0x230] sm:$0xff] %v4716
    %4902 = vst [vmem:[#allocation8 + $0x238] sm:$0xff] %v4718
    %4903 = vst [vmem:[#allocation8 + $0x240] sm:$0xff] %v4720
    %4904 = vst [vmem:[#allocation8 + $0x248] sm:$0xff] %v4722
    %4905 = vst [vmem:[#allocation8 + $0x250] sm:$0xff] %v4724
    %4906 = vst [vmem:[#allocation8 + $0x258] sm:$0xff] %v4726
    %4907 = vst [vmem:[#allocation8 + $0x260] sm:$0xff] %v4728
    %4908 = vst [vmem:[#allocation8 + $0x268] sm:$0xff] %v4730
    %4909 = vst [vmem:[#allocation8 + $0x270] sm:$0xff] %v4732
    %4910 = vst [vmem:[#allocation8 + $0x278] sm:$0xff] %v4734
    %4911 = vst [vmem:[#allocation8 + $0x280] sm:$0xff] %v4736
    %4912 = vst [vmem:[#allocation8 + $0x288] sm:$0xff] %v4738
    %4913 = vst [vmem:[#allocation8 + $0x290] sm:$0xff] %v4740
    %4914 = vst [vmem:[#allocation8 + $0x298] sm:$0xff] %v4742
    %4915 = vst [vmem:[#allocation8 + $0x2a0] sm:$0xff] %v4744
    %4916 = vst [vmem:[#allocation8 + $0x2a8] sm:$0xff] %v4746
    %4917 = vst [vmem:[#allocation8 + $0x2b0] sm:$0xff] %v4748
    %4918 = vst [vmem:[#allocation8 + $0x2b8] sm:$0xff] %v4750
    %4919 = vst [vmem:[#allocation8 + $0x2c0] sm:$0xff] %v4752
    %4920 = vst [vmem:[#allocation8 + $0x2c8] sm:$0xff] %v4754
    %4921 = vst [vmem:[#allocation8 + $0x2d0] sm:$0xff] %v4756
    %4922 = vst [vmem:[#allocation8 + $0x2d8] sm:$0xff] %v4758
    %4923 = vst [vmem:[#allocation8 + $0x2e0] sm:$0xff] %v4760
    %4924 = vst [vmem:[#allocation8 + $0x2e8] sm:$0xff] %v4762
    %4925 = vst [vmem:[#allocation8 + $0x2f0] sm:$0xff] %v4764
    %4926 = vst [vmem:[#allocation8 + $0x2f8] sm:$0xff] %v4766
    %4927 = vst [vmem:[#allocation8 + $0x300] sm:$0xff] %v4768
    %4928 = vst [vmem:[#allocation8 + $0x308] sm:$0xff] %v4770
    %4929 = vst [vmem:[#allocation8 + $0x310] sm:$0xff] %v4772
    %4930 = vst [vmem:[#allocation8 + $0x318] sm:$0xff] %v4774
    %4931 = vst [vmem:[#allocation8 + $0x320] sm:$0xff] %v4776
    %4932 = vst [vmem:[#allocation8 + $0x328] sm:$0xff] %v4778
    %4933 = vst [vmem:[#allocation8 + $0x330] sm:$0xff] %v4780
    %4934 = vst [vmem:[#allocation8 + $0x338] sm:$0xff] %v4782
    %4935 = vst [vmem:[#allocation8 + $0x340] sm:$0xff] %v4784
    %4936 = vst [vmem:[#allocation8 + $0x348] sm:$0xff] %v4786
    %4937 = vst [vmem:[#allocation8 + $0x350] sm:$0xff] %v4788
    %4938 = vst [vmem:[#allocation8 + $0x358] sm:$0xff] %v4790
    %4939 = vst [vmem:[#allocation8 + $0x360] sm:$0xff] %v4792
    %4940 = vst [vmem:[#allocation8 + $0x368] sm:$0xff] %v4794
    %4941 = vst [vmem:[#allocation8 + $0x370] sm:$0xff] %v4796
    %4942 = vst [vmem:[#allocation8 + $0x378] sm:$0xff] %v4798
    %4943 = vst [vmem:[#allocation8 + $0x380] sm:$0xff] %v4800
    %4944 = vst [vmem:[#allocation8 + $0x388] sm:$0xff] %v4802
    %4945 = vst [vmem:[#allocation8 + $0x390] sm:$0xff] %v4804
    %4946 = vst [vmem:[#allocation8 + $0x398] sm:$0xff] %v4806
    %4947 = vst [vmem:[#allocation8 + $0x3a0] sm:$0xff] %v4808
    %4948 = vst [vmem:[#allocation8 + $0x3a8] sm:$0xff] %v4810
    %4949 = vst [vmem:[#allocation8 + $0x3b0] sm:$0xff] %v4812
    %4950 = vst [vmem:[#allocation8 + $0x3b8] sm:$0xff] %v4814
    %4951 = vst [vmem:[#allocation8 + $0x3c0] sm:$0xff] %v4816
    %4952 = vst [vmem:[#allocation8 + $0x3c8] sm:$0xff] %v4818
    %4953 = vst [vmem:[#allocation8 + $0x3d0] sm:$0xff] %v4820
    %4954 = vst [vmem:[#allocation8 + $0x3d8] sm:$0xff] %v4822
    %4955 = vst [vmem:[#allocation8 + $0x3e0] sm:$0xff] %v4824
    %4956 = vst [vmem:[#allocation8 + $0x3e8] sm:$0xff] %v4826
    %4957 = vst [vmem:[#allocation8 + $0x3f0] sm:$0xff] %v4828
    %4958 = vst [vmem:[#allocation8 + $0x3f8] sm:$0xff] %v4830
    %v4959 = vld [vmem:[%s3] sm:$0xff]
    %v4960 = vld [vmem:[%s3 + $0x8] sm:$0xff]
    %v4961 = vld [vmem:[%s3 + $0x10] sm:$0xff]
    %v4962 = vld [vmem:[%s3 + $0x18] sm:$0xff]
    %v4963 = vld [vmem:[%s3 + $0x20] sm:$0xff]
    %v4964 = vld [vmem:[%s3 + $0x28] sm:$0xff]
    %v4965 = vld [vmem:[%s3 + $0x30] sm:$0xff]
    %v4966 = vld [vmem:[%s3 + $0x38] sm:$0xff]
    %v4967 = vld [vmem:[%s3 + $0x40] sm:$0xff]
    %v4968 = vld [vmem:[%s3 + $0x48] sm:$0xff]
    %v4969 = vld [vmem:[%s3 + $0x50] sm:$0xff]
    %v4970 = vld [vmem:[%s3 + $0x58] sm:$0xff]
    %v4971 = vld [vmem:[%s3 + $0x60] sm:$0xff]
    %v4972 = vld [vmem:[%s3 + $0x68] sm:$0xff]
    %v4973 = vld [vmem:[%s3 + $0x70] sm:$0xff]
    %v4974 = vld [vmem:[%s3 + $0x78] sm:$0xff]
    %v4975 = vld [vmem:[%s3 + $0x80] sm:$0xff]
    %v4976 = vld [vmem:[%s3 + $0x88] sm:$0xff]
    %v4977 = vld [vmem:[%s3 + $0x90] sm:$0xff]
    %v4978 = vld [vmem:[%s3 + $0x98] sm:$0xff]
    %v4979 = vld [vmem:[%s3 + $0xa0] sm:$0xff]
    %v4980 = vld [vmem:[%s3 + $0xa8] sm:$0xff]
    %v4981 = vld [vmem:[%s3 + $0xb0] sm:$0xff]
    %v4982 = vld [vmem:[%s3 + $0xb8] sm:$0xff]
    %v4983 = vld [vmem:[%s3 + $0xc0] sm:$0xff]
    %v4984 = vld [vmem:[%s3 + $0xc8] sm:$0xff]
    %v4985 = vld [vmem:[%s3 + $0xd0] sm:$0xff]
    %v4986 = vld [vmem:[%s3 + $0xd8] sm:$0xff]
    %v4987 = vld [vmem:[%s3 + $0xe0] sm:$0xff]
    %v4988 = vld [vmem:[%s3 + $0xe8] sm:$0xff]
    %v4989 = vld [vmem:[%s3 + $0xf0] sm:$0xff]
    %v4990 = vld [vmem:[%s3 + $0xf8] sm:$0xff]
    %v4991 = vld [vmem:[%s3 + $0x100] sm:$0xff]
    %v4992 = vld [vmem:[%s3 + $0x108] sm:$0xff]
    %v4993 = vld [vmem:[%s3 + $0x110] sm:$0xff]
    %v4994 = vld [vmem:[%s3 + $0x118] sm:$0xff]
    %v4995 = vld [vmem:[%s3 + $0x120] sm:$0xff]
    %v4996 = vld [vmem:[%s3 + $0x128] sm:$0xff]
    %v4997 = vld [vmem:[%s3 + $0x130] sm:$0xff]
    %v4998 = vld [vmem:[%s3 + $0x138] sm:$0xff]
    %v4999 = vld [vmem:[%s3 + $0x140] sm:$0xff]
    %v5000 = vld [vmem:[%s3 + $0x148] sm:$0xff]
    %v5001 = vld [vmem:[%s3 + $0x150] sm:$0xff]
    %v5002 = vld [vmem:[%s3 + $0x158] sm:$0xff]
    %v5003 = vld [vmem:[%s3 + $0x160] sm:$0xff]
    %v5004 = vld [vmem:[%s3 + $0x168] sm:$0xff]
    %v5005 = vld [vmem:[%s3 + $0x170] sm:$0xff]
    %v5006 = vld [vmem:[%s3 + $0x178] sm:$0xff]
    %v5007 = vld [vmem:[%s3 + $0x180] sm:$0xff]
    %v5008 = vld [vmem:[%s3 + $0x188] sm:$0xff]
    %v5009 = vld [vmem:[%s3 + $0x190] sm:$0xff]
    %v5010 = vld [vmem:[%s3 + $0x198] sm:$0xff]
    %v5011 = vld [vmem:[%s3 + $0x1a0] sm:$0xff]
    %v5012 = vld [vmem:[%s3 + $0x1a8] sm:$0xff]
    %v5013 = vld [vmem:[%s3 + $0x1b0] sm:$0xff]
    %v5014 = vld [vmem:[%s3 + $0x1b8] sm:$0xff]
    %v5015 = vld [vmem:[%s3 + $0x1c0] sm:$0xff]
    %v5016 = vld [vmem:[%s3 + $0x1c8] sm:$0xff]
    %v5017 = vld [vmem:[%s3 + $0x1d0] sm:$0xff]
    %v5018 = vld [vmem:[%s3 + $0x1d8] sm:$0xff]
    %v5019 = vld [vmem:[%s3 + $0x1e0] sm:$0xff]
    %v5020 = vld [vmem:[%s3 + $0x1e8] sm:$0xff]
    %v5021 = vld [vmem:[%s3 + $0x1f0] sm:$0xff]
    %v5022 = vld [vmem:[%s3 + $0x1f8] sm:$0xff]
    %v5023 = vld [vmem:[%s4] sm:$0x1]
    %v5025 = vlaneseq
    %v5026 = vshrl.u32 %v5025, 7
    %v5027 = vsub.s32 0, %v5026
    %v5028 = vrot.slane %v5023, %v5027
    %5030 = vmatprep.subr.mxu0 0.0
    %5031 = vmatpush1.msra.mxu0 %v4959
    %5032 = vmatprep.subr.mxu0 0.0
    %5033 = vmatpush1.msra.mxu0 %v4960
    %5034 = vmatprep.subr.mxu0 0.0
    %5035 = vmatpush1.msra.mxu0 %v4961
    %5036 = vmatprep.subr.mxu0 0.0
    %5037 = vmatpush1.msra.mxu0 %v4962
    %5038 = vmatprep.subr.mxu0 0.0
    %5039 = vmatpush1.msra.mxu0 %v4963
    %5040 = vmatprep.subr.mxu0 0.0
    %5041 = vmatpush1.msra.mxu0 %v4964
    %5042 = vmatprep.subr.mxu0 0.0
    %5043 = vmatpush1.msra.mxu0 %v4965
    %5044 = vmatprep.subr.mxu0 0.0
    %5045 = vmatpush1.msra.mxu0 %v4966
    %5046 = vmatprep.subr.mxu0 0.0
    %5047 = vmatpush1.msra.mxu0 %v4967
    %5048 = vmatprep.subr.mxu0 0.0
    %5049 = vmatpush1.msra.mxu0 %v4968
    %5050 = vmatprep.subr.mxu0 0.0
    %5051 = vmatpush1.msra.mxu0 %v4969
    %5052 = vmatprep.subr.mxu0 0.0
    %5053 = vmatpush1.msra.mxu0 %v4970
    %5054 = vmatprep.subr.mxu0 0.0
    %5055 = vmatpush1.msra.mxu0 %v4971
    %5056 = vmatprep.subr.mxu0 0.0
    %5057 = vmatpush1.msra.mxu0 %v4972
    %5058 = vmatprep.subr.mxu0 0.0
    %5059 = vmatpush1.msra.mxu0 %v4973
    %5060 = vmatprep.subr.mxu0 0.0
    %5061 = vmatpush1.msra.mxu0 %v4974
    %5062 = vmatprep.subr.mxu0 0.0
    %5063 = vmatpush1.msra.mxu0 %v4975
    %5064 = vmatprep.subr.mxu0 0.0
    %5065 = vmatpush1.msra.mxu0 %v4976
    %5066 = vmatprep.subr.mxu0 0.0
    %5067 = vmatpush1.msra.mxu0 %v4977
    %5068 = vmatprep.subr.mxu0 0.0
    %5069 = vmatpush1.msra.mxu0 %v4978
    %5070 = vmatprep.subr.mxu0 0.0
    %5071 = vmatpush1.msra.mxu0 %v4979
    %5072 = vmatprep.subr.mxu0 0.0
    %5073 = vmatpush1.msra.mxu0 %v4980
    %5074 = vmatprep.subr.mxu0 0.0
    %5075 = vmatpush1.msra.mxu0 %v4981
    %5076 = vmatprep.subr.mxu0 0.0
    %5077 = vmatpush1.msra.mxu0 %v4982
    %5078 = vmatprep.subr.mxu0 0.0
    %5079 = vmatpush1.msra.mxu0 %v4983
    %5080 = vmatprep.subr.mxu0 0.0
    %5081 = vmatpush1.msra.mxu0 %v4984
    %5082 = vmatprep.subr.mxu0 0.0
    %5083 = vmatpush1.msra.mxu0 %v4985
    %5084 = vmatprep.subr.mxu0 0.0
    %5085 = vmatpush1.msra.mxu0 %v4986
    %5086 = vmatprep.subr.mxu0 0.0
    %5087 = vmatpush1.msra.mxu0 %v4987
    %5088 = vmatprep.subr.mxu0 0.0
    %5089 = vmatpush1.msra.mxu0 %v4988
    %5090 = vmatprep.subr.mxu0 0.0
    %5091 = vmatpush1.msra.mxu0 %v4989
    %5092 = vmatprep.subr.mxu0 0.0
    %5093 = vmatpush1.msra.mxu0 %v4990
    %5094 = vmatprep.mubr.f32.mxu0 %v3007
    %5095 = vmatmul.mubr.f32.gmra.mrb[0].mxu0 %v3005
    %v5096 = vpop.f32.mrb[0].mxu0
    %v5097 = vadd.f32 %v5028, %v5096
    %v5098 = vpop.f32.mrb[0].mxu0
    %5099 = vmatprep.mubr.f32.mxu0 %v3011
    %5100 = vmatmul.mubr.f32.gmra.mrb[0].mxu0 %v3009
    %v5101 = vpop.f32.mrb[0].mxu0
    %v5102 = vadd.f32 %v5028, %v5101
    %v5103 = vpop.f32.mrb[0].mxu0
    %5104 = vmatprep.mubr.f32.mxu0 %v3017
    %5105 = vmatmul.mubr.f32.gmra.mrb[0].mxu0 %v3015
    %v5106 = vpop.f32.mrb[0].mxu0
    %v5107 = vadd.f32 %v5028, %v5106
    %v5108 = vpop.f32.mrb[0].mxu0
    %5109 = vmatprep.mubr.f32.mxu0 %v3021
    %5110 = vmatmul.mubr.f32.gmra.mrb[0].mxu0 %v3019
    %v5111 = vpop.f32.mrb[0].mxu0
    %v5112 = vadd.f32 %v5028, %v5111
    %v5113 = vpop.f32.mrb[0].mxu0
    %5114 = vmatprep.mubr.f32.mxu0 %v3027
    %5115 = vmatmul.mubr.f32.gmra.mrb[0].mxu0 %v3025
    %v5116 = vpop.f32.mrb[0].mxu0
    %v5117 = vadd.f32 %v5028, %v5116
    %v5118 = vpop.f32.mrb[0].mxu0
    %5119 = vmatprep.mubr.f32.mxu0 %v3031
    %5120 = vmatmul.mubr.f32.gmra.mrb[0].mxu0 %v3029
    %v5121 = vpop.f32.mrb[0].mxu0
    %v5122 = vadd.f32 %v5028, %v5121
    %v5123 = vpop.f32.mrb[0].mxu0
    %5124 = vmatprep.mubr.f32.mxu0 %v3037
    %5125 = vmatmul.mubr.f32.gmra.mrb[0].mxu0 %v3035
    %v5126 = vpop.f32.mrb[0].mxu0
    %v5127 = vadd.f32 %v5028, %v5126
    %v5128 = vpop.f32.mrb[0].mxu0
    %5129 = vmatprep.mubr.f32.mxu0 %v3041
    %5130 = vmatmul.mubr.f32.gmra.mrb[0].mxu0 %v3039
    %v5131 = vpop.f32.mrb[0].mxu0
    %v5132 = vadd.f32 %v5028, %v5131
    %v5133 = vpop.f32.mrb[0].mxu0
    %5134 = vmatprep.mubr.f32.mxu0 %v3047
    %5135 = vmatmul.mubr.f32.gmra.mrb[0].mxu0 %v3045
    %v5136 = vpop.f32.mrb[0].mxu0
    %v5137 = vadd.f32 %v5028, %v5136
    %v5138 = vpop.f32.mrb[0].mxu0
    %5139 = vmatprep.mubr.f32.mxu0 %v3051
    %5140 = vmatmul.mubr.f32.gmra.mrb[0].mxu0 %v3049
    %v5141 = vpop.f32.mrb[0].mxu0
    %v5142 = vadd.f32 %v5028, %v5141
    %v5143 = vpop.f32.mrb[0].mxu0
    %5144 = vmatprep.mubr.f32.mxu0 %v3057
    %5145 = vmatmul.mubr.f32.gmra.mrb[0].mxu0 %v3055
    %v5146 = vpop.f32.mrb[0].mxu0
    %v5147 = vadd.f32 %v5028, %v5146
    %v5148 = vpop.f32.mrb[0].mxu0
    %5149 = vmatprep.mubr.f32.mxu0 %v3061
    %5150 = vmatmul.mubr.f32.gmra.mrb[0].mxu0 %v3059
    %v5151 = vpop.f32.mrb[0].mxu0
    %v5152 = vadd.f32 %v5028, %v5151
    %v5153 = vpop.f32.mrb[0].mxu0
    %5154 = vmatprep.mubr.f32.mxu0 %v3067
    %5155 = vmatmul.mubr.f32.gmra.mrb[0].mxu0 %v3065
    %v5156 = vpop.f32.mrb[0].mxu0
    %v5157 = vadd.f32 %v5028, %v5156
    %v5158 = vpop.f32.mrb[0].mxu0
    %5159 = vmatprep.mubr.f32.mxu0 %v3071
    %5160 = vmatmul.mubr.f32.gmra.mrb[0].mxu0 %v3069
    %v5161 = vpop.f32.mrb[0].mxu0
    %v5162 = vadd.f32 %v5028, %v5161
    %v5163 = vpop.f32.mrb[0].mxu0
    %5164 = vmatprep.mubr.f32.mxu0 %v3077
    %5165 = vmatmul.mubr.f32.gmra.mrb[0].mxu0 %v3075
    %v5166 = vpop.f32.mrb[0].mxu0
    %v5167 = vadd.f32 %v5028, %v5166
    %v5168 = vpop.f32.mrb[0].mxu0
    %5169 = vmatprep.mubr.f32.mxu0 %v3081
    %5170 = vmatmul.mubr.f32.gmra.mrb[0].mxu0 %v3079
    %v5171 = vpop.f32.mrb[0].mxu0
    %v5172 = vadd.f32 %v5028, %v5171
    %v5173 = vpop.f32.mrb[0].mxu0
    %5174 = vmatprep.mubr.f32.mxu0 %v3087
    %5175 = vmatmul.mubr.f32.gmra.mrb[0].mxu0 %v3085
    %v5176 = vpop.f32.mrb[0].mxu0
    %v5177 = vadd.f32 %v5028, %v5176
    %v5178 = vpop.f32.mrb[0].mxu0
    %5179 = vmatprep.mubr.f32.mxu0 %v3091
    %5180 = vmatmul.mubr.f32.gmra.mrb[0].mxu0 %v3089
    %v5181 = vpop.f32.mrb[0].mxu0
    %v5182 = vadd.f32 %v5028, %v5181
    %v5183 = vpop.f32.mrb[0].mxu0
    %5184 = vmatprep.mubr.f32.mxu0 %v3097
    %5185 = vmatmul.mubr.f32.gmra.mrb[0].mxu0 %v3095
    %v5186 = vpop.f32.mrb[0].mxu0
    %v5187 = vadd.f32 %v5028, %v5186
    %v5188 = vpop.f32.mrb[0].mxu0
    %5189 = vmatprep.mubr.f32.mxu0 %v3101
    %5190 = vmatmul.mubr.f32.gmra.mrb[0].mxu0 %v3099
    %v5191 = vpop.f32.mrb[0].mxu0
    %v5192 = vadd.f32 %v5028, %v5191
    %v5193 = vpop.f32.mrb[0].mxu0
    %5194 = vmatprep.mubr.f32.mxu0 %v3107
    %5195 = vmatmul.mubr.f32.gmra.mrb[0].mxu0 %v3105
    %v5196 = vpop.f32.mrb[0].mxu0
    %v5197 = vadd.f32 %v5028, %v5196
    %v5198 = vpop.f32.mrb[0].mxu0
    %5199 = vmatprep.mubr.f32.mxu0 %v3111
    %5200 = vmatmul.mubr.f32.gmra.mrb[0].mxu0 %v3109
    %v5201 = vpop.f32.mrb[0].mxu0
    %v5202 = vadd.f32 %v5028, %v5201
    %v5203 = vpop.f32.mrb[0].mxu0
    %5204 = vmatprep.mubr.f32.mxu0 %v3117
    %5205 = vmatmul.mubr.f32.gmra.mrb[0].mxu0 %v3115
    %v5206 = vpop.f32.mrb[0].mxu0
    %v5207 = vadd.f32 %v5028, %v5206
    %v5208 = vpop.f32.mrb[0].mxu0
    %5209 = vmatprep.mubr.f32.mxu0 %v3121
    %5210 = vmatmul.mubr.f32.gmra.mrb[0].mxu0 %v3119
    %v5211 = vpop.f32.mrb[0].mxu0
    %v5212 = vadd.f32 %v5028, %v5211
    %v5213 = vpop.f32.mrb[0].mxu0
    %5214 = vmatprep.mubr.f32.mxu0 %v3127
    %5215 = vmatmul.mubr.f32.gmra.mrb[0].mxu0 %v3125
    %v5216 = vpop.f32.mrb[0].mxu0
    %v5217 = vadd.f32 %v5028, %v5216
    %v5218 = vpop.f32.mrb[0].mxu0
    %5219 = vmatprep.mubr.f32.mxu0 %v3131
    %5220 = vmatmul.mubr.f32.gmra.mrb[0].mxu0 %v3129
    %v5221 = vpop.f32.mrb[0].mxu0
    %v5222 = vadd.f32 %v5028, %v5221
    %v5223 = vpop.f32.mrb[0].mxu0
    %5224 = vmatprep.mubr.f32.mxu0 %v3137
    %5225 = vmatmul.mubr.f32.gmra.mrb[0].mxu0 %v3135
    %v5226 = vpop.f32.mrb[0].mxu0
    %v5227 = vadd.f32 %v5028, %v5226
    %v5228 = vpop.f32.mrb[0].mxu0
    %5229 = vmatprep.mubr.f32.mxu0 %v3141
    %5230 = vmatmul.mubr.f32.gmra.mrb[0].mxu0 %v3139
    %v5231 = vpop.f32.mrb[0].mxu0
    %v5232 = vadd.f32 %v5028, %v5231
    %v5233 = vpop.f32.mrb[0].mxu0
    %5234 = vmatprep.mubr.f32.mxu0 %v3147
    %5235 = vmatmul.mubr.f32.gmra.mrb[0].mxu0 %v3145
    %v5236 = vpop.f32.mrb[0].mxu0
    %v5237 = vadd.f32 %v5028, %v5236
    %v5238 = vpop.f32.mrb[0].mxu0
    %5239 = vmatprep.mubr.f32.mxu0 %v3151
    %5240 = vmatmul.mubr.f32.gmra.mrb[0].mxu0 %v3149
    %v5241 = vpop.f32.mrb[0].mxu0
    %v5242 = vadd.f32 %v5028, %v5241
    %v5243 = vpop.f32.mrb[0].mxu0
    %5244 = vmatprep.mubr.f32.mxu0 %v3157
    %5245 = vmatmul.mubr.f32.gmra.mrb[0].mxu0 %v3155
    %v5246 = vpop.f32.mrb[0].mxu0
    %v5247 = vadd.f32 %v5028, %v5246
    %v5248 = vpop.f32.mrb[0].mxu0
    %5249 = vmatprep.mubr.f32.mxu0 %v3161
    %5250 = vmatmul.mubr.f32.gmra.mrb[0].mxu0 %v3159
    %v5251 = vpop.f32.mrb[0].mxu0
    %v5252 = vadd.f32 %v5028, %v5251
    %v5253 = vpop.f32.mrb[0].mxu0
    %5254 = vdwg.mxu0
    %5255 = vmatprep.subr.mxu0 0.0
    %5256 = vmatpush1.msra.mxu0 %v4991
    %5257 = vmatprep.subr.mxu0 0.0
    %5258 = vmatpush1.msra.mxu0 %v4992
    %5259 = vmatprep.subr.mxu0 0.0
    %5260 = vmatpush1.msra.mxu0 %v4993
    %5261 = vmatprep.subr.mxu0 0.0
    %5262 = vmatpush1.msra.mxu0 %v4994
    %5263 = vmatprep.subr.mxu0 0.0
    %5264 = vmatpush1.msra.mxu0 %v4995
    %5265 = vmatprep.subr.mxu0 0.0
    %5266 = vmatpush1.msra.mxu0 %v4996
    %5267 = vmatprep.subr.mxu0 0.0
    %5268 = vmatpush1.msra.mxu0 %v4997
    %5269 = vmatprep.subr.mxu0 0.0
    %5270 = vmatpush1.msra.mxu0 %v4998
    %5271 = vmatprep.subr.mxu0 0.0
    %5272 = vmatpush1.msra.mxu0 %v4999
    %5273 = vmatprep.subr.mxu0 0.0
    %5274 = vmatpush1.msra.mxu0 %v5000
    %5275 = vmatprep.subr.mxu0 0.0
    %5276 = vmatpush1.msra.mxu0 %v5001
    %5277 = vmatprep.subr.mxu0 0.0
    %5278 = vmatpush1.msra.mxu0 %v5002
    %5279 = vmatprep.subr.mxu0 0.0
    %5280 = vmatpush1.msra.mxu0 %v5003
    %5281 = vmatprep.subr.mxu0 0.0
    %5282 = vmatpush1.msra.mxu0 %v5004
    %5283 = vmatprep.subr.mxu0 0.0
    %5284 = vmatpush1.msra.mxu0 %v5005
    %5285 = vmatprep.subr.mxu0 0.0
    %5286 = vmatpush1.msra.mxu0 %v5006
    %5287 = vmatprep.subr.mxu0 0.0
    %5288 = vmatpush1.msra.mxu0 %v5007
    %5289 = vmatprep.subr.mxu0 0.0
    %5290 = vmatpush1.msra.mxu0 %v5008
    %5291 = vmatprep.subr.mxu0 0.0
    %5292 = vmatpush1.msra.mxu0 %v5009
    %5293 = vmatprep.subr.mxu0 0.0
    %5294 = vmatpush1.msra.mxu0 %v5010
    %5295 = vmatprep.subr.mxu0 0.0
    %5296 = vmatpush1.msra.mxu0 %v5011
    %5297 = vmatprep.subr.mxu0 0.0
    %5298 = vmatpush1.msra.mxu0 %v5012
    %5299 = vmatprep.subr.mxu0 0.0
    %5300 = vmatpush1.msra.mxu0 %v5013
    %5301 = vmatprep.subr.mxu0 0.0
    %5302 = vmatpush1.msra.mxu0 %v5014
    %5303 = vmatprep.subr.mxu0 0.0
    %5304 = vmatpush1.msra.mxu0 %v5015
    %5305 = vmatprep.subr.mxu0 0.0
    %5306 = vmatpush1.msra.mxu0 %v5016
    %5307 = vmatprep.subr.mxu0 0.0
    %5308 = vmatpush1.msra.mxu0 %v5017
    %5309 = vmatprep.subr.mxu0 0.0
    %5310 = vmatpush1.msra.mxu0 %v5018
    %5311 = vmatprep.subr.mxu0 0.0
    %5312 = vmatpush1.msra.mxu0 %v5019
    %5313 = vmatprep.subr.mxu0 0.0
    %5314 = vmatpush1.msra.mxu0 %v5020
    %5315 = vmatprep.subr.mxu0 0.0
    %5316 = vmatpush1.msra.mxu0 %v5021
    %5317 = vmatprep.subr.mxu0 0.0
    %5318 = vmatpush1.msra.mxu0 %v5022
    %5319 = vmatprep.mubr.f32.mxu0 %v3779
    %5320 = vmatmul.mubr.f32.gmra.mrb[0].mxu0 %v3777
    %v5321 = vpop.f32.mrb[0].mxu0
    %v5322 = vadd.f32 %v5097, %v5321
    %v5323 = vpop.f32.mrb[0].mxu0
    %5324 = vmatprep.mubr.f32.mxu0 %v3783
    %5325 = vmatmul.mubr.f32.gmra.mrb[0].mxu0 %v3781
    %v5326 = vpop.f32.mrb[0].mxu0
    %v5327 = vadd.f32 %v5102, %v5326
    %v5328 = vpop.f32.mrb[0].mxu0
    %5329 = vmatprep.mubr.f32.mxu0 %v3789
    %5330 = vmatmul.mubr.f32.gmra.mrb[0].mxu0 %v3787
    %v5331 = vpop.f32.mrb[0].mxu0
    %v5332 = vadd.f32 %v5107, %v5331
    %v5333 = vpop.f32.mrb[0].mxu0
    %5334 = vmatprep.mubr.f32.mxu0 %v3793
    %5335 = vmatmul.mubr.f32.gmra.mrb[0].mxu0 %v3791
    %v5336 = vpop.f32.mrb[0].mxu0
    %v5337 = vadd.f32 %v5112, %v5336
    %v5338 = vpop.f32.mrb[0].mxu0
    %5339 = vmatprep.mubr.f32.mxu0 %v3799
    %5340 = vmatmul.mubr.f32.gmra.mrb[0].mxu0 %v3797
    %v5341 = vpop.f32.mrb[0].mxu0
    %v5342 = vadd.f32 %v5117, %v5341
    %v5343 = vpop.f32.mrb[0].mxu0
    %5344 = vmatprep.mubr.f32.mxu0 %v3803
    %5345 = vmatmul.mubr.f32.gmra.mrb[0].mxu0 %v3801
    %v5346 = vpop.f32.mrb[0].mxu0
    %v5347 = vadd.f32 %v5122, %v5346
    %v5348 = vpop.f32.mrb[0].mxu0
    %5349 = vmatprep.mubr.f32.mxu0 %v3809
    %5350 = vmatmul.mubr.f32.gmra.mrb[0].mxu0 %v3807
    %v5351 = vpop.f32.mrb[0].mxu0
    %v5352 = vadd.f32 %v5127, %v5351
    %v5353 = vpop.f32.mrb[0].mxu0
    %5354 = vmatprep.mubr.f32.mxu0 %v3813
    %5355 = vmatmul.mubr.f32.gmra.mrb[0].mxu0 %v3811
    %v5356 = vpop.f32.mrb[0].mxu0
    %v5357 = vadd.f32 %v5132, %v5356
    %v5358 = vpop.f32.mrb[0].mxu0
    %5359 = vmatprep.mubr.f32.mxu0 %v3819
    %5360 = vmatmul.mubr.f32.gmra.mrb[0].mxu0 %v3817
    %v5361 = vpop.f32.mrb[0].mxu0
    %v5362 = vadd.f32 %v5137, %v5361
    %v5363 = vpop.f32.mrb[0].mxu0
    %5364 = vmatprep.mubr.f32.mxu0 %v3823
    %5365 = vmatmul.mubr.f32.gmra.mrb[0].mxu0 %v3821
    %v5366 = vpop.f32.mrb[0].mxu0
    %v5367 = vadd.f32 %v5142, %v5366
    %v5368 = vpop.f32.mrb[0].mxu0
    %5369 = vmatprep.mubr.f32.mxu0 %v3829
    %5370 = vmatmul.mubr.f32.gmra.mrb[0].mxu0 %v3827
    %v5371 = vpop.f32.mrb[0].mxu0
    %v5372 = vadd.f32 %v5147, %v5371
    %v5373 = vpop.f32.mrb[0].mxu0
    %5374 = vmatprep.mubr.f32.mxu0 %v3833
    %5375 = vmatmul.mubr.f32.gmra.mrb[0].mxu0 %v3831
    %v5376 = vpop.f32.mrb[0].mxu0
    %v5377 = vadd.f32 %v5152, %v5376
    %v5378 = vpop.f32.mrb[0].mxu0
    %5379 = vmatprep.mubr.f32.mxu0 %v3839
    %5380 = vmatmul.mubr.f32.gmra.mrb[0].mxu0 %v3837
    %v5381 = vpop.f32.mrb[0].mxu0
    %v5382 = vadd.f32 %v5157, %v5381
    %v5383 = vpop.f32.mrb[0].mxu0
    %5384 = vmatprep.mubr.f32.mxu0 %v3843
    %5385 = vmatmul.mubr.f32.gmra.mrb[0].mxu0 %v3841
    %v5386 = vpop.f32.mrb[0].mxu0
    %v5387 = vadd.f32 %v5162, %v5386
    %v5388 = vpop.f32.mrb[0].mxu0
    %5389 = vmatprep.mubr.f32.mxu0 %v3849
    %5390 = vmatmul.mubr.f32.gmra.mrb[0].mxu0 %v3847
    %v5391 = vpop.f32.mrb[0].mxu0
    %v5392 = vadd.f32 %v5167, %v5391
    %v5393 = vpop.f32.mrb[0].mxu0
    %5394 = vmatprep.mubr.f32.mxu0 %v3853
    %5395 = vmatmul.mubr.f32.gmra.mrb[0].mxu0 %v3851
    %v5396 = vpop.f32.mrb[0].mxu0
    %v5397 = vadd.f32 %v5172, %v5396
    %v5398 = vpop.f32.mrb[0].mxu0
    %5399 = vmatprep.mubr.f32.mxu0 %v3859
    %5400 = vmatmul.mubr.f32.gmra.mrb[0].mxu0 %v3857
    %v5401 = vpop.f32.mrb[0].mxu0
    %v5402 = vadd.f32 %v5177, %v5401
    %v5403 = vpop.f32.mrb[0].mxu0
    %5404 = vmatprep.mubr.f32.mxu0 %v3863
    %5405 = vmatmul.mubr.f32.gmra.mrb[0].mxu0 %v3861
    %v5406 = vpop.f32.mrb[0].mxu0
    %v5407 = vadd.f32 %v5182, %v5406
    %v5408 = vpop.f32.mrb[0].mxu0
    %5409 = vmatprep.mubr.f32.mxu0 %v3869
    %5410 = vmatmul.mubr.f32.gmra.mrb[0].mxu0 %v3867
    %v5411 = vpop.f32.mrb[0].mxu0
    %v5412 = vadd.f32 %v5187, %v5411
    %v5413 = vpop.f32.mrb[0].mxu0
    %5414 = vmatprep.mubr.f32.mxu0 %v3873
    %5415 = vmatmul.mubr.f32.gmra.mrb[0].mxu0 %v3871
    %v5416 = vpop.f32.mrb[0].mxu0
    %v5417 = vadd.f32 %v5192, %v5416
    %v5418 = vpop.f32.mrb[0].mxu0
    %5419 = vmatprep.mubr.f32.mxu0 %v3879
    %5420 = vmatmul.mubr.f32.gmra.mrb[0].mxu0 %v3877
    %v5421 = vpop.f32.mrb[0].mxu0
    %v5422 = vadd.f32 %v5197, %v5421
    %v5423 = vpop.f32.mrb[0].mxu0
    %5424 = vmatprep.mubr.f32.mxu0 %v3883
    %5425 = vmatmul.mubr.f32.gmra.mrb[0].mxu0 %v3881
    %v5426 = vpop.f32.mrb[0].mxu0
    %v5427 = vadd.f32 %v5202, %v5426
    %v5428 = vpop.f32.mrb[0].mxu0
    %5429 = vmatprep.mubr.f32.mxu0 %v3889
    %5430 = vmatmul.mubr.f32.gmra.mrb[0].mxu0 %v3887
    %v5431 = vpop.f32.mrb[0].mxu0
    %v5432 = vadd.f32 %v5207, %v5431
    %v5433 = vpop.f32.mrb[0].mxu0
    %5434 = vmatprep.mubr.f32.mxu0 %v3893
    %5435 = vmatmul.mubr.f32.gmra.mrb[0].mxu0 %v3891
    %v5436 = vpop.f32.mrb[0].mxu0
    %v5437 = vadd.f32 %v5212, %v5436
    %v5438 = vpop.f32.mrb[0].mxu0
    %5439 = vmatprep.mubr.f32.mxu0 %v3899
    %5440 = vmatmul.mubr.f32.gmra.mrb[0].mxu0 %v3897
    %v5441 = vpop.f32.mrb[0].mxu0
    %v5442 = vadd.f32 %v5217, %v5441
    %v5443 = vpop.f32.mrb[0].mxu0
    %5444 = vmatprep.mubr.f32.mxu0 %v3903
    %5445 = vmatmul.mubr.f32.gmra.mrb[0].mxu0 %v3901
    %v5446 = vpop.f32.mrb[0].mxu0
    %v5447 = vadd.f32 %v5222, %v5446
    %v5448 = vpop.f32.mrb[0].mxu0
    %5449 = vmatprep.mubr.f32.mxu0 %v3909
    %5450 = vmatmul.mubr.f32.gmra.mrb[0].mxu0 %v3907
    %v5451 = vpop.f32.mrb[0].mxu0
    %v5452 = vadd.f32 %v5227, %v5451
    %v5453 = vpop.f32.mrb[0].mxu0
    %5454 = vmatprep.mubr.f32.mxu0 %v3913
    %5455 = vmatmul.mubr.f32.gmra.mrb[0].mxu0 %v3911
    %v5456 = vpop.f32.mrb[0].mxu0
    %v5457 = vadd.f32 %v5232, %v5456
    %v5458 = vpop.f32.mrb[0].mxu0
    %5459 = vmatprep.mubr.f32.mxu0 %v3919
    %5460 = vmatmul.mubr.f32.gmra.mrb[0].mxu0 %v3917
    %v5461 = vpop.f32.mrb[0].mxu0
    %v5462 = vadd.f32 %v5237, %v5461
    %v5463 = vpop.f32.mrb[0].mxu0
    %5464 = vmatprep.mubr.f32.mxu0 %v3923
    %5465 = vmatmul.mubr.f32.gmra.mrb[0].mxu0 %v3921
    %v5466 = vpop.f32.mrb[0].mxu0
    %v5467 = vadd.f32 %v5242, %v5466
    %v5468 = vpop.f32.mrb[0].mxu0
    %5469 = vmatprep.mubr.f32.mxu0 %v3929
    %5470 = vmatmul.mubr.f32.gmra.mrb[0].mxu0 %v3927
    %v5471 = vpop.f32.mrb[0].mxu0
    %v5472 = vadd.f32 %v5247, %v5471
    %v5473 = vpop.f32.mrb[0].mxu0
    %5474 = vmatprep.mubr.f32.mxu0 %v3933
    %5475 = vmatmul.mubr.f32.gmra.mrb[0].mxu0 %v3931
    %v5476 = vpop.f32.mrb[0].mxu0
    %v5477 = vadd.f32 %v5252, %v5476
    %v5478 = vpop.f32.mrb[0].mxu0
    %5479 = vdwg.mxu0
    %v5480 = vmax.f32 %v5322, 0.0
    %v5481 = vmax.f32 %v5327, 0.0
    %v5482 = vmax.f32 %v5332, 0.0
    %v5483 = vmax.f32 %v5337, 0.0
    %v5484 = vmax.f32 %v5342, 0.0
    %v5485 = vmax.f32 %v5347, 0.0
    %v5486 = vmax.f32 %v5352, 0.0
    %v5487 = vmax.f32 %v5357, 0.0
    %v5488 = vmax.f32 %v5362, 0.0
    %v5489 = vmax.f32 %v5367, 0.0
    %v5490 = vmax.f32 %v5372, 0.0
    %v5491 = vmax.f32 %v5377, 0.0
    %v5492 = vmax.f32 %v5382, 0.0
    %v5493 = vmax.f32 %v5387, 0.0
    %v5494 = vmax.f32 %v5392, 0.0
    %v5495 = vmax.f32 %v5397, 0.0
    %v5496 = vmax.f32 %v5402, 0.0
    %v5497 = vmax.f32 %v5407, 0.0
    %v5498 = vmax.f32 %v5412, 0.0
    %v5499 = vmax.f32 %v5417, 0.0
    %v5500 = vmax.f32 %v5422, 0.0
    %v5501 = vmax.f32 %v5427, 0.0
    %v5502 = vmax.f32 %v5432, 0.0
    %v5503 = vmax.f32 %v5437, 0.0
    %v5504 = vmax.f32 %v5442, 0.0
    %v5505 = vmax.f32 %v5447, 0.0
    %v5506 = vmax.f32 %v5452, 0.0
    %v5507 = vmax.f32 %v5457, 0.0
    %v5508 = vmax.f32 %v5462, 0.0
    %v5509 = vmax.f32 %v5467, 0.0
    %v5510 = vmax.f32 %v5472, 0.0
    %v5511 = vmax.f32 %v5477, 0.0
    %v5512 = vld [vmem:[%s5] sm:$0xff]
    %v5513 = vld [vmem:[%s5 + $0x8] sm:$0xff]
    %v5514 = vld [vmem:[%s5 + $0x10] sm:$0xff]
    %v5515 = vld [vmem:[%s5 + $0x18] sm:$0xff]
    %v5516 = vld [vmem:[%s5 + $0x20] sm:$0xff]
    %v5517 = vld [vmem:[%s5 + $0x28] sm:$0xff]
    %v5518 = vld [vmem:[%s5 + $0x30] sm:$0xff]
    %v5519 = vld [vmem:[%s5 + $0x38] sm:$0xff]
    %v5520 = vld [vmem:[%s5 + $0x40] sm:$0xff]
    %v5521 = vld [vmem:[%s6] sm:$0x1]
    %v5523 = vlaneseq
    %v5524 = vshrl.u32 %v5523, 7
    %v5525 = vsub.s32 0, %v5524
    %v5526 = vrot.slane %v5521, %v5525
    %vm5528 = vcmask 588800
    %v5530 = vsel %vm5528, %v5480, 0
    %v5533 = vsel %vm5528, %v5481, 0
    %v5536 = vsel %vm5528, %v5482, 0
    %v5539 = vsel %vm5528, %v5483, 0
    %v5542 = vsel %vm5528, %v5484, 0
    %v5545 = vsel %vm5528, %v5485, 0
    %v5548 = vsel %vm5528, %v5486, 0
    %v5551 = vsel %vm5528, %v5487, 0
    %v5554 = vsel %vm5528, %v5488, 0
    %v5557 = vsel %vm5528, %v5489, 0
    %v5560 = vsel %vm5528, %v5490, 0
    %v5563 = vsel %vm5528, %v5491, 0
    %v5566 = vsel %vm5528, %v5492, 0
    %v5569 = vsel %vm5528, %v5493, 0
    %v5572 = vsel %vm5528, %v5494, 0
    %v5575 = vsel %vm5528, %v5495, 0
    %v5578 = vsel %vm5528, %v5496, 0
    %v5581 = vsel %vm5528, %v5497, 0
    %v5584 = vsel %vm5528, %v5498, 0
    %v5587 = vsel %vm5528, %v5499, 0
    %v5590 = vsel %vm5528, %v5500, 0
    %v5593 = vsel %vm5528, %v5501, 0
    %v5596 = vsel %vm5528, %v5502, 0
    %v5599 = vsel %vm5528, %v5503, 0
    %v5602 = vsel %vm5528, %v5504, 0
    %v5605 = vsel %vm5528, %v5505, 0
    %v5608 = vsel %vm5528, %v5506, 0
    %v5611 = vsel %vm5528, %v5507, 0
    %v5614 = vsel %vm5528, %v5508, 0
    %v5617 = vsel %vm5528, %v5509, 0
    %v5620 = vsel %vm5528, %v5510, 0
    %v5623 = vsel %vm5528, %v5511, 0
    %5625 = vmatprep.subr.mxu0 0.0
    %5626 = vmatpush1.msra.mxu0 %v5512
    %5627 = vmatprep.subr.mxu0 0.0
    %5628 = vmatpush1.msra.mxu0 %v5513
    %5629 = vmatprep.subr.mxu0 0.0
    %5630 = vmatpush1.msra.mxu0 %v5514
    %5631 = vmatprep.subr.mxu0 0.0
    %5632 = vmatpush1.msra.mxu0 %v5515
    %5633 = vmatprep.subr.mxu0 0.0
    %5634 = vmatpush1.msra.mxu0 %v5516
    %5635 = vmatprep.subr.mxu0 0.0
    %5636 = vmatpush1.msra.mxu0 %v5517
    %5637 = vmatprep.subr.mxu0 0.0
    %5638 = vmatpush1.msra.mxu0 %v5518
    %5639 = vmatprep.subr.mxu0 0.0
    %5640 = vmatpush1.msra.mxu0 %v5519
    %5641 = vmatprep.subr.mxu0 0.0
    %5642 = vmatpush1.msra.mxu0 %v5520
    %5643 = vmatprep.subr.mxu0 0.0
    %5644 = vmatpush1.msra.mxu0 0.0
    %5645 = vmatprep.subr.mxu0 0.0
    %5646 = vmatpush1.msra.mxu0 0.0
    %5647 = vmatprep.subr.mxu0 0.0
    %5648 = vmatpush1.msra.mxu0 0.0
    %5649 = vmatprep.subr.mxu0 0.0
    %5650 = vmatpush1.msra.mxu0 0.0
    %5651 = vmatprep.subr.mxu0 0.0
    %5652 = vmatpush1.msra.mxu0 0.0
    %5653 = vmatprep.subr.mxu0 0.0
    %5654 = vmatpush1.msra.mxu0 0.0
    %5655 = vmatprep.subr.mxu0 0.0
    %5656 = vmatpush1.msra.mxu0 0.0
    %5657 = vmatprep.subr.mxu0 0.0
    %5658 = vmatpush1.msra.mxu0 0.0
    %5659 = vmatprep.subr.mxu0 0.0
    %5660 = vmatpush1.msra.mxu0 0.0
    %5661 = vmatprep.subr.mxu0 0.0
    %5662 = vmatpush1.msra.mxu0 0.0
    %5663 = vmatprep.subr.mxu0 0.0
    %5664 = vmatpush1.msra.mxu0 0.0
    %5665 = vmatprep.subr.mxu0 0.0
    %5666 = vmatpush1.msra.mxu0 0.0
    %5667 = vmatprep.subr.mxu0 0.0
    %5668 = vmatpush1.msra.mxu0 0.0
    %5669 = vmatprep.subr.mxu0 0.0
    %5670 = vmatpush1.msra.mxu0 0.0
    %5671 = vmatprep.subr.mxu0 0.0
    %5672 = vmatpush1.msra.mxu0 0.0
    %5673 = vmatprep.subr.mxu0 0.0
    %5674 = vmatpush1.msra.mxu0 0.0
    %5675 = vmatprep.subr.mxu0 0.0
    %5676 = vmatpush1.msra.mxu0 0.0
    %5677 = vmatprep.subr.mxu0 0.0
    %5678 = vmatpush1.msra.mxu0 0.0
    %5679 = vmatprep.subr.mxu0 0.0
    %5680 = vmatpush1.msra.mxu0 0.0
    %5681 = vmatprep.subr.mxu0 0.0
    %5682 = vmatpush1.msra.mxu0 0.0
    %5683 = vmatprep.subr.mxu0 0.0
    %5684 = vmatpush1.msra.mxu0 0.0
    %5685 = vmatprep.subr.mxu0 0.0
    %5686 = vmatpush1.msra.mxu0 0.0
    %5687 = vmatprep.subr.mxu0 0.0
    %5688 = vmatpush1.msra.mxu0 0.0
    %5689 = vmatprep.mubr.f32.mxu0 0.0
    %5690 = vmatmul.mubr.f32.gmra.mrb[0].mxu0 %v5530
    %v5691 = vpop.f32.mrb[0].mxu0
    %v5692 = vadd.f32 %v5526, %v5691
    %v5693 = vpop.f32.mrb[0].mxu0
    %5694 = vmatprep.mubr.f32.mxu0 0.0
    %5695 = vmatmul.mubr.f32.gmra.mrb[0].mxu0 %v5533
    %v5696 = vpop.f32.mrb[0].mxu0
    %v5697 = vadd.f32 %v5526, %v5696
    %v5698 = vpop.f32.mrb[0].mxu0
    %5699 = vmatprep.mubr.f32.mxu0 0.0
    %5700 = vmatmul.mubr.f32.gmra.mrb[0].mxu0 %v5536
    %v5701 = vpop.f32.mrb[0].mxu0
    %v5702 = vadd.f32 %v5526, %v5701
    %v5703 = vpop.f32.mrb[0].mxu0
    %5704 = vmatprep.mubr.f32.mxu0 0.0
    %5705 = vmatmul.mubr.f32.gmra.mrb[0].mxu0 %v5539
    %v5706 = vpop.f32.mrb[0].mxu0
    %v5707 = vadd.f32 %v5526, %v5706
    %v5708 = vpop.f32.mrb[0].mxu0
    %5709 = vmatprep.mubr.f32.mxu0 0.0
    %5710 = vmatmul.mubr.f32.gmra.mrb[0].mxu0 %v5542
    %v5711 = vpop.f32.mrb[0].mxu0
    %v5712 = vadd.f32 %v5526, %v5711
    %v5713 = vpop.f32.mrb[0].mxu0
    %5714 = vmatprep.mubr.f32.mxu0 0.0
    %5715 = vmatmul.mubr.f32.gmra.mrb[0].mxu0 %v5545
    %v5716 = vpop.f32.mrb[0].mxu0
    %v5717 = vadd.f32 %v5526, %v5716
    %v5718 = vpop.f32.mrb[0].mxu0
    %5719 = vmatprep.mubr.f32.mxu0 0.0
    %5720 = vmatmul.mubr.f32.gmra.mrb[0].mxu0 %v5548
    %v5721 = vpop.f32.mrb[0].mxu0
    %v5722 = vadd.f32 %v5526, %v5721
    %v5723 = vpop.f32.mrb[0].mxu0
    %5724 = vmatprep.mubr.f32.mxu0 0.0
    %5725 = vmatmul.mubr.f32.gmra.mrb[0].mxu0 %v5551
    %v5726 = vpop.f32.mrb[0].mxu0
    %v5727 = vadd.f32 %v5526, %v5726
    %v5728 = vpop.f32.mrb[0].mxu0
    %5729 = vmatprep.mubr.f32.mxu0 0.0
    %5730 = vmatmul.mubr.f32.gmra.mrb[0].mxu0 %v5554
    %v5731 = vpop.f32.mrb[0].mxu0
    %v5732 = vadd.f32 %v5526, %v5731
    %v5733 = vpop.f32.mrb[0].mxu0
    %5734 = vmatprep.mubr.f32.mxu0 0.0
    %5735 = vmatmul.mubr.f32.gmra.mrb[0].mxu0 %v5557
    %v5736 = vpop.f32.mrb[0].mxu0
    %v5737 = vadd.f32 %v5526, %v5736
    %v5738 = vpop.f32.mrb[0].mxu0
    %5739 = vmatprep.mubr.f32.mxu0 0.0
    %5740 = vmatmul.mubr.f32.gmra.mrb[0].mxu0 %v5560
    %v5741 = vpop.f32.mrb[0].mxu0
    %v5742 = vadd.f32 %v5526, %v5741
    %v5743 = vpop.f32.mrb[0].mxu0
    %5744 = vmatprep.mubr.f32.mxu0 0.0
    %5745 = vmatmul.mubr.f32.gmra.mrb[0].mxu0 %v5563
    %v5746 = vpop.f32.mrb[0].mxu0
    %v5747 = vadd.f32 %v5526, %v5746
    %v5748 = vpop.f32.mrb[0].mxu0
    %5749 = vmatprep.mubr.f32.mxu0 0.0
    %5750 = vmatmul.mubr.f32.gmra.mrb[0].mxu0 %v5566
    %v5751 = vpop.f32.mrb[0].mxu0
    %v5752 = vadd.f32 %v5526, %v5751
    %v5753 = vpop.f32.mrb[0].mxu0
    %5754 = vmatprep.mubr.f32.mxu0 0.0
    %5755 = vmatmul.mubr.f32.gmra.mrb[0].mxu0 %v5569
    %v5756 = vpop.f32.mrb[0].mxu0
    %v5757 = vadd.f32 %v5526, %v5756
    %v5758 = vpop.f32.mrb[0].mxu0
    %5759 = vmatprep.mubr.f32.mxu0 0.0
    %5760 = vmatmul.mubr.f32.gmra.mrb[0].mxu0 %v5572
    %v5761 = vpop.f32.mrb[0].mxu0
    %v5762 = vadd.f32 %v5526, %v5761
    %v5763 = vpop.f32.mrb[0].mxu0
    %5764 = vmatprep.mubr.f32.mxu0 0.0
    %5765 = vmatmul.mubr.f32.gmra.mrb[0].mxu0 %v5575
    %v5766 = vpop.f32.mrb[0].mxu0
    %v5767 = vadd.f32 %v5526, %v5766
    %v5768 = vpop.f32.mrb[0].mxu0
    %5769 = vmatprep.mubr.f32.mxu0 0.0
    %5770 = vmatmul.mubr.f32.gmra.mrb[0].mxu0 %v5578
    %v5771 = vpop.f32.mrb[0].mxu0
    %v5772 = vadd.f32 %v5526, %v5771
    %v5773 = vpop.f32.mrb[0].mxu0
    %5774 = vmatprep.mubr.f32.mxu0 0.0
    %5775 = vmatmul.mubr.f32.gmra.mrb[0].mxu0 %v5581
    %v5776 = vpop.f32.mrb[0].mxu0
    %v5777 = vadd.f32 %v5526, %v5776
    %v5778 = vpop.f32.mrb[0].mxu0
    %5779 = vmatprep.mubr.f32.mxu0 0.0
    %5780 = vmatmul.mubr.f32.gmra.mrb[0].mxu0 %v5584
    %v5781 = vpop.f32.mrb[0].mxu0
    %v5782 = vadd.f32 %v5526, %v5781
    %v5783 = vpop.f32.mrb[0].mxu0
    %5784 = vmatprep.mubr.f32.mxu0 0.0
    %5785 = vmatmul.mubr.f32.gmra.mrb[0].mxu0 %v5587
    %v5786 = vpop.f32.mrb[0].mxu0
    %v5787 = vadd.f32 %v5526, %v5786
    %v5788 = vpop.f32.mrb[0].mxu0
    %5789 = vmatprep.mubr.f32.mxu0 0.0
    %5790 = vmatmul.mubr.f32.gmra.mrb[0].mxu0 %v5590
    %v5791 = vpop.f32.mrb[0].mxu0
    %v5792 = vadd.f32 %v5526, %v5791
    %v5793 = vpop.f32.mrb[0].mxu0
    %5794 = vmatprep.mubr.f32.mxu0 0.0
    %5795 = vmatmul.mubr.f32.gmra.mrb[0].mxu0 %v5593
    %v5796 = vpop.f32.mrb[0].mxu0
    %v5797 = vadd.f32 %v5526, %v5796
    %v5798 = vpop.f32.mrb[0].mxu0
    %5799 = vmatprep.mubr.f32.mxu0 0.0
    %5800 = vmatmul.mubr.f32.gmra.mrb[0].mxu0 %v5596
    %v5801 = vpop.f32.mrb[0].mxu0
    %v5802 = vadd.f32 %v5526, %v5801
    %v5803 = vpop.f32.mrb[0].mxu0
    %5804 = vmatprep.mubr.f32.mxu0 0.0
    %5805 = vmatmul.mubr.f32.gmra.mrb[0].mxu0 %v5599
    %v5806 = vpop.f32.mrb[0].mxu0
    %v5807 = vadd.f32 %v5526, %v5806
    %v5808 = vpop.f32.mrb[0].mxu0
    %5809 = vmatprep.mubr.f32.mxu0 0.0
    %5810 = vmatmul.mubr.f32.gmra.mrb[0].mxu0 %v5602
    %v5811 = vpop.f32.mrb[0].mxu0
    %v5812 = vadd.f32 %v5526, %v5811
    %v5813 = vpop.f32.mrb[0].mxu0
    %5814 = vmatprep.mubr.f32.mxu0 0.0
    %5815 = vmatmul.mubr.f32.gmra.mrb[0].mxu0 %v5605
    %v5816 = vpop.f32.mrb[0].mxu0
    %v5817 = vadd.f32 %v5526, %v5816
    %v5818 = vpop.f32.mrb[0].mxu0
    %5819 = vmatprep.mubr.f32.mxu0 0.0
    %5820 = vmatmul.mubr.f32.gmra.mrb[0].mxu0 %v5608
    %v5821 = vpop.f32.mrb[0].mxu0
    %v5822 = vadd.f32 %v5526, %v5821
    %v5823 = vpop.f32.mrb[0].mxu0
    %5824 = vmatprep.mubr.f32.mxu0 0.0
    %5825 = vmatmul.mubr.f32.gmra.mrb[0].mxu0 %v5611
    %v5826 = vpop.f32.mrb[0].mxu0
    %v5827 = vadd.f32 %v5526, %v5826
    %v5828 = vpop.f32.mrb[0].mxu0
    %5829 = vmatprep.mubr.f32.mxu0 0.0
    %5830 = vmatmul.mubr.f32.gmra.mrb[0].mxu0 %v5614
    %v5831 = vpop.f32.mrb[0].mxu0
    %v5832 = vadd.f32 %v5526, %v5831
    %v5833 = vpop.f32.mrb[0].mxu0
    %5834 = vmatprep.mubr.f32.mxu0 0.0
    %5835 = vmatmul.mubr.f32.gmra.mrb[0].mxu0 %v5617
    %v5836 = vpop.f32.mrb[0].mxu0
    %v5837 = vadd.f32 %v5526, %v5836
    %v5838 = vpop.f32.mrb[0].mxu0
    %5839 = vmatprep.mubr.f32.mxu0 0.0
    %5840 = vmatmul.mubr.f32.gmra.mrb[0].mxu0 %v5620
    %v5841 = vpop.f32.mrb[0].mxu0
    %v5842 = vadd.f32 %v5526, %v5841
    %v5843 = vpop.f32.mrb[0].mxu0
    %5844 = vmatprep.mubr.f32.mxu0 0.0
    %5845 = vmatmul.mubr.f32.gmra.mrb[0].mxu0 %v5623
    %v5846 = vpop.f32.mrb[0].mxu0
    %v5847 = vadd.f32 %v5526, %v5846
    %v5848 = vpop.f32.mrb[0].mxu0
    %5849 = vdwg.mxu0
    %v5850 = vmax.f32 %v5692, 0.0
    %v5851 = vmax.f32 %v5697, 0.0
    %v5852 = vmax.f32 %v5702, 0.0
    %v5853 = vmax.f32 %v5707, 0.0
    %v5854 = vmax.f32 %v5712, 0.0
    %v5855 = vmax.f32 %v5717, 0.0
    %v5856 = vmax.f32 %v5722, 0.0
    %v5857 = vmax.f32 %v5727, 0.0
    %v5858 = vmax.f32 %v5732, 0.0
    %v5859 = vmax.f32 %v5737, 0.0
    %v5860 = vmax.f32 %v5742, 0.0
    %v5861 = vmax.f32 %v5747, 0.0
    %v5862 = vmax.f32 %v5752, 0.0
    %v5863 = vmax.f32 %v5757, 0.0
    %v5864 = vmax.f32 %v5762, 0.0
    %v5865 = vmax.f32 %v5767, 0.0
    %v5866 = vmax.f32 %v5772, 0.0
    %v5867 = vmax.f32 %v5777, 0.0
    %v5868 = vmax.f32 %v5782, 0.0
    %v5869 = vmax.f32 %v5787, 0.0
    %v5870 = vmax.f32 %v5792, 0.0
    %v5871 = vmax.f32 %v5797, 0.0
    %v5872 = vmax.f32 %v5802, 0.0
    %v5873 = vmax.f32 %v5807, 0.0
    %v5874 = vmax.f32 %v5812, 0.0
    %v5875 = vmax.f32 %v5817, 0.0
    %v5876 = vmax.f32 %v5822, 0.0
    %v5877 = vmax.f32 %v5827, 0.0
    %v5878 = vmax.f32 %v5832, 0.0
    %v5879 = vmax.f32 %v5837, 0.0
    %v5880 = vmax.f32 %v5842, 0.0
    %v5881 = vmax.f32 %v5847, 0.0
    %v5882 = vld [vmem:[%s7] sm:$0x3f]
    %v5883 = vld [vmem:[%s8] sm:$0x1]
    %v5885 = vlaneseq
    %v5886 = vshrl.u32 %v5885, 7
    %v5887 = vsub.s32 0, %v5886
    %v5888 = vrot.slane %v5883, %v5887
    %vm5890 = vcmask 48128
    %v5892 = vsel %vm5890, %v5850, 0
    %v5895 = vsel %vm5890, %v5851, 0
    %v5898 = vsel %vm5890, %v5852, 0
    %v5901 = vsel %vm5890, %v5853, 0
    %v5904 = vsel %vm5890, %v5854, 0
    %v5907 = vsel %vm5890, %v5855, 0
    %v5910 = vsel %vm5890, %v5856, 0
    %v5913 = vsel %vm5890, %v5857, 0
    %v5916 = vsel %vm5890, %v5858, 0
    %v5919 = vsel %vm5890, %v5859, 0
    %v5922 = vsel %vm5890, %v5860, 0
    %v5925 = vsel %vm5890, %v5861, 0
    %v5928 = vsel %vm5890, %v5862, 0
    %v5931 = vsel %vm5890, %v5863, 0
    %v5934 = vsel %vm5890, %v5864, 0
    %v5937 = vsel %vm5890, %v5865, 0
    %v5940 = vsel %vm5890, %v5866, 0
    %v5943 = vsel %vm5890, %v5867, 0
    %v5946 = vsel %vm5890, %v5868, 0
    %v5949 = vsel %vm5890, %v5869, 0
    %v5952 = vsel %vm5890, %v5870, 0
    %v5955 = vsel %vm5890, %v5871, 0
    %v5958 = vsel %vm5890, %v5872, 0
    %v5961 = vsel %vm5890, %v5873, 0
    %v5964 = vsel %vm5890, %v5874, 0
    %v5967 = vsel %vm5890, %v5875, 0
    %v5970 = vsel %vm5890, %v5876, 0
    %v5973 = vsel %vm5890, %v5877, 0
    %v5976 = vsel %vm5890, %v5878, 0
    %v5979 = vsel %vm5890, %v5879, 0
    %v5982 = vsel %vm5890, %v5880, 0
    %v5985 = vsel %vm5890, %v5881, 0
    %vm5987 = vcmask 1045504
    %v5989 = vsel %vm5987, %v5882, 0
    %5991 = vmatprep.subr.mxu0 0.0
    %5992 = vmatpush1.msra.mxu0 %v5989
    %5993 = vmatprep.subr.mxu0 0.0
    %5994 = vmatpush1.msra.mxu0 0.0
    %5995 = vmatprep.subr.mxu0 0.0
    %5996 = vmatpush1.msra.mxu0 0.0
    %5997 = vmatprep.subr.mxu0 0.0
    %5998 = vmatpush1.msra.mxu0 0.0
    %5999 = vmatprep.subr.mxu0 0.0
    %6000 = vmatpush1.msra.mxu0 0.0
    %6001 = vmatprep.subr.mxu0 0.0
    %6002 = vmatpush1.msra.mxu0 0.0
    %6003 = vmatprep.subr.mxu0 0.0
    %6004 = vmatpush1.msra.mxu0 0.0
    %6005 = vmatprep.subr.mxu0 0.0
    %6006 = vmatpush1.msra.mxu0 0.0
    %6007 = vmatprep.subr.mxu0 0.0
    %6008 = vmatpush1.msra.mxu0 0.0
    %6009 = vmatprep.subr.mxu0 0.0
    %6010 = vmatpush1.msra.mxu0 0.0
    %6011 = vmatprep.subr.mxu0 0.0
    %6012 = vmatpush1.msra.mxu0 0.0
    %6013 = vmatprep.subr.mxu0 0.0
    %6014 = vmatpush1.msra.mxu0 0.0
    %6015 = vmatprep.subr.mxu0 0.0
    %6016 = vmatpush1.msra.mxu0 0.0
    %6017 = vmatprep.subr.mxu0 0.0
    %6018 = vmatpush1.msra.mxu0 0.0
    %6019 = vmatprep.subr.mxu0 0.0
    %6020 = vmatpush1.msra.mxu0 0.0
    %6021 = vmatprep.subr.mxu0 0.0
    %6022 = vmatpush1.msra.mxu0 0.0
    %6023 = vmatprep.subr.mxu0 0.0
    %6024 = vmatpush1.msra.mxu0 0.0
    %6025 = vmatprep.subr.mxu0 0.0
    %6026 = vmatpush1.msra.mxu0 0.0
    %6027 = vmatprep.subr.mxu0 0.0
    %6028 = vmatpush1.msra.mxu0 0.0
    %6029 = vmatprep.subr.mxu0 0.0
    %6030 = vmatpush1.msra.mxu0 0.0
    %6031 = vmatprep.subr.mxu0 0.0
    %6032 = vmatpush1.msra.mxu0 0.0
    %6033 = vmatprep.subr.mxu0 0.0
    %6034 = vmatpush1.msra.mxu0 0.0
    %6035 = vmatprep.subr.mxu0 0.0
    %6036 = vmatpush1.msra.mxu0 0.0
    %6037 = vmatprep.subr.mxu0 0.0
    %6038 = vmatpush1.msra.mxu0 0.0
    %6039 = vmatprep.subr.mxu0 0.0
    %6040 = vmatpush1.msra.mxu0 0.0
    %6041 = vmatprep.subr.mxu0 0.0
    %6042 = vmatpush1.msra.mxu0 0.0
    %6043 = vmatprep.subr.mxu0 0.0
    %6044 = vmatpush1.msra.mxu0 0.0
    %6045 = vmatprep.subr.mxu0 0.0
    %6046 = vmatpush1.msra.mxu0 0.0
    %6047 = vmatprep.subr.mxu0 0.0
    %6048 = vmatpush1.msra.mxu0 0.0
    %6049 = vmatprep.subr.mxu0 0.0
    %6050 = vmatpush1.msra.mxu0 0.0
    %6051 = vmatprep.subr.mxu0 0.0
    %6052 = vmatpush1.msra.mxu0 0.0
    %6053 = vmatprep.subr.mxu0 0.0
    %6054 = vmatpush1.msra.mxu0 0.0
    %6055 = vmatprep.mubr.f32.mxu0 0.0
    %6056 = vmatmul.mubr.f32.gmra.mrb[0].mxu0 %v5892
    %v6057 = vpop.f32.mrb[0].mxu0
    %v6058 = vadd.f32 %v5888, %v6057
    %v6059 = vpop.f32.mrb[0].mxu0
    %6060 = vmatprep.mubr.f32.mxu0 0.0
    %6061 = vmatmul.mubr.f32.gmra.mrb[0].mxu0 %v5895
    %v6062 = vpop.f32.mrb[0].mxu0
    %v6063 = vadd.f32 %v5888, %v6062
    %v6064 = vpop.f32.mrb[0].mxu0
    %6065 = vmatprep.mubr.f32.mxu0 0.0
    %6066 = vmatmul.mubr.f32.gmra.mrb[0].mxu0 %v5898
    %v6067 = vpop.f32.mrb[0].mxu0
    %v6068 = vadd.f32 %v5888, %v6067
    %v6069 = vpop.f32.mrb[0].mxu0
    %6070 = vmatprep.mubr.f32.mxu0 0.0
    %6071 = vmatmul.mubr.f32.gmra.mrb[0].mxu0 %v5901
    %v6072 = vpop.f32.mrb[0].mxu0
    %v6073 = vadd.f32 %v5888, %v6072
    %v6074 = vpop.f32.mrb[0].mxu0
    %6075 = vmatprep.mubr.f32.mxu0 0.0
    %6076 = vmatmul.mubr.f32.gmra.mrb[0].mxu0 %v5904
    %v6077 = vpop.f32.mrb[0].mxu0
    %v6078 = vadd.f32 %v5888, %v6077
    %v6079 = vpop.f32.mrb[0].mxu0
    %6080 = vmatprep.mubr.f32.mxu0 0.0
    %6081 = vmatmul.mubr.f32.gmra.mrb[0].mxu0 %v5907
    %v6082 = vpop.f32.mrb[0].mxu0
    %v6083 = vadd.f32 %v5888, %v6082
    %v6084 = vpop.f32.mrb[0].mxu0
    %6085 = vmatprep.mubr.f32.mxu0 0.0
    %6086 = vmatmul.mubr.f32.gmra.mrb[0].mxu0 %v5910
    %v6087 = vpop.f32.mrb[0].mxu0
    %v6088 = vadd.f32 %v5888, %v6087
    %v6089 = vpop.f32.mrb[0].mxu0
    %6090 = vmatprep.mubr.f32.mxu0 0.0
    %6091 = vmatmul.mubr.f32.gmra.mrb[0].mxu0 %v5913
    %v6092 = vpop.f32.mrb[0].mxu0
    %v6093 = vadd.f32 %v5888, %v6092
    %v6094 = vpop.f32.mrb[0].mxu0
    %6095 = vmatprep.mubr.f32.mxu0 0.0
    %6096 = vmatmul.mubr.f32.gmra.mrb[0].mxu0 %v5916
    %v6097 = vpop.f32.mrb[0].mxu0
    %v6098 = vadd.f32 %v5888, %v6097
    %v6099 = vpop.f32.mrb[0].mxu0
    %6100 = vmatprep.mubr.f32.mxu0 0.0
    %6101 = vmatmul.mubr.f32.gmra.mrb[0].mxu0 %v5919
    %v6102 = vpop.f32.mrb[0].mxu0
    %v6103 = vadd.f32 %v5888, %v6102
    %v6104 = vpop.f32.mrb[0].mxu0
    %6105 = vmatprep.mubr.f32.mxu0 0.0
    %6106 = vmatmul.mubr.f32.gmra.mrb[0].mxu0 %v5922
    %v6107 = vpop.f32.mrb[0].mxu0
    %v6108 = vadd.f32 %v5888, %v6107
    %v6109 = vpop.f32.mrb[0].mxu0
    %6110 = vmatprep.mubr.f32.mxu0 0.0
    %6111 = vmatmul.mubr.f32.gmra.mrb[0].mxu0 %v5925
    %v6112 = vpop.f32.mrb[0].mxu0
    %v6113 = vadd.f32 %v5888, %v6112
    %v6114 = vpop.f32.mrb[0].mxu0
    %6115 = vmatprep.mubr.f32.mxu0 0.0
    %6116 = vmatmul.mubr.f32.gmra.mrb[0].mxu0 %v5928
    %v6117 = vpop.f32.mrb[0].mxu0
    %v6118 = vadd.f32 %v5888, %v6117
    %v6119 = vpop.f32.mrb[0].mxu0
    %6120 = vmatprep.mubr.f32.mxu0 0.0
    %6121 = vmatmul.mubr.f32.gmra.mrb[0].mxu0 %v5931
    %v6122 = vpop.f32.mrb[0].mxu0
    %v6123 = vadd.f32 %v5888, %v6122
    %v6124 = vpop.f32.mrb[0].mxu0
    %6125 = vmatprep.mubr.f32.mxu0 0.0
    %6126 = vmatmul.mubr.f32.gmra.mrb[0].mxu0 %v5934
    %v6127 = vpop.f32.mrb[0].mxu0
    %v6128 = vadd.f32 %v5888, %v6127
    %v6129 = vpop.f32.mrb[0].mxu0
    %6130 = vmatprep.mubr.f32.mxu0 0.0
    %6131 = vmatmul.mubr.f32.gmra.mrb[0].mxu0 %v5937
    %v6132 = vpop.f32.mrb[0].mxu0
    %v6133 = vadd.f32 %v5888, %v6132
    %v6134 = vpop.f32.mrb[0].mxu0
    %6135 = vmatprep.mubr.f32.mxu0 0.0
    %6136 = vmatmul.mubr.f32.gmra.mrb[0].mxu0 %v5940
    %v6137 = vpop.f32.mrb[0].mxu0
    %v6138 = vadd.f32 %v5888, %v6137
    %v6139 = vpop.f32.mrb[0].mxu0
    %6140 = vmatprep.mubr.f32.mxu0 0.0
    %6141 = vmatmul.mubr.f32.gmra.mrb[0].mxu0 %v5943
    %v6142 = vpop.f32.mrb[0].mxu0
    %v6143 = vadd.f32 %v5888, %v6142
    %v6144 = vpop.f32.mrb[0].mxu0
    %6145 = vmatprep.mubr.f32.mxu0 0.0
    %6146 = vmatmul.mubr.f32.gmra.mrb[0].mxu0 %v5946
    %v6147 = vpop.f32.mrb[0].mxu0
    %v6148 = vadd.f32 %v5888, %v6147
    %v6149 = vpop.f32.mrb[0].mxu0
    %6150 = vmatprep.mubr.f32.mxu0 0.0
    %6151 = vmatmul.mubr.f32.gmra.mrb[0].mxu0 %v5949
    %v6152 = vpop.f32.mrb[0].mxu0
    %v6153 = vadd.f32 %v5888, %v6152
    %v6154 = vpop.f32.mrb[0].mxu0
    %6155 = vmatprep.mubr.f32.mxu0 0.0
    %6156 = vmatmul.mubr.f32.gmra.mrb[0].mxu0 %v5952
    %v6157 = vpop.f32.mrb[0].mxu0
    %v6158 = vadd.f32 %v5888, %v6157
    %v6159 = vpop.f32.mrb[0].mxu0
    %6160 = vmatprep.mubr.f32.mxu0 0.0
    %6161 = vmatmul.mubr.f32.gmra.mrb[0].mxu0 %v5955
    %v6162 = vpop.f32.mrb[0].mxu0
    %v6163 = vadd.f32 %v5888, %v6162
    %v6164 = vpop.f32.mrb[0].mxu0
    %6165 = vmatprep.mubr.f32.mxu0 0.0
    %6166 = vmatmul.mubr.f32.gmra.mrb[0].mxu0 %v5958
    %v6167 = vpop.f32.mrb[0].mxu0
    %v6168 = vadd.f32 %v5888, %v6167
    %v6169 = vpop.f32.mrb[0].mxu0
    %6170 = vmatprep.mubr.f32.mxu0 0.0
    %6171 = vmatmul.mubr.f32.gmra.mrb[0].mxu0 %v5961
    %v6172 = vpop.f32.mrb[0].mxu0
    %v6173 = vadd.f32 %v5888, %v6172
    %v6174 = vpop.f32.mrb[0].mxu0
    %6175 = vmatprep.mubr.f32.mxu0 0.0
    %6176 = vmatmul.mubr.f32.gmra.mrb[0].mxu0 %v5964
    %v6177 = vpop.f32.mrb[0].mxu0
    %v6178 = vadd.f32 %v5888, %v6177
    %v6179 = vpop.f32.mrb[0].mxu0
    %6180 = vmatprep.mubr.f32.mxu0 0.0
    %6181 = vmatmul.mubr.f32.gmra.mrb[0].mxu0 %v5967
    %v6182 = vpop.f32.mrb[0].mxu0
    %v6183 = vadd.f32 %v5888, %v6182
    %v6184 = vpop.f32.mrb[0].mxu0
    %6185 = vmatprep.mubr.f32.mxu0 0.0
    %6186 = vmatmul.mubr.f32.gmra.mrb[0].mxu0 %v5970
    %v6187 = vpop.f32.mrb[0].mxu0
    %v6188 = vadd.f32 %v5888, %v6187
    %v6189 = vpop.f32.mrb[0].mxu0
    %6190 = vmatprep.mubr.f32.mxu0 0.0
    %6191 = vmatmul.mubr.f32.gmra.mrb[0].mxu0 %v5973
    %v6192 = vpop.f32.mrb[0].mxu0
    %v6193 = vadd.f32 %v5888, %v6192
    %v6194 = vpop.f32.mrb[0].mxu0
    %6195 = vmatprep.mubr.f32.mxu0 0.0
    %6196 = vmatmul.mubr.f32.gmra.mrb[0].mxu0 %v5976
    %v6197 = vpop.f32.mrb[0].mxu0
    %v6198 = vadd.f32 %v5888, %v6197
    %v6199 = vpop.f32.mrb[0].mxu0
    %6200 = vmatprep.mubr.f32.mxu0 0.0
    %6201 = vmatmul.mubr.f32.gmra.mrb[0].mxu0 %v5979
    %v6202 = vpop.f32.mrb[0].mxu0
    %v6203 = vadd.f32 %v5888, %v6202
    %v6204 = vpop.f32.mrb[0].mxu0
    %6205 = vmatprep.mubr.f32.mxu0 0.0
    %6206 = vmatmul.mubr.f32.gmra.mrb[0].mxu0 %v5982
    %v6207 = vpop.f32.mrb[0].mxu0
    %v6208 = vadd.f32 %v5888, %v6207
    %v6209 = vpop.f32.mrb[0].mxu0
    %6210 = vmatprep.mubr.f32.mxu0 0.0
    %6211 = vmatmul.mubr.f32.gmra.mrb[0].mxu0 %v5985
    %v6212 = vpop.f32.mrb[0].mxu0
    %v6213 = vadd.f32 %v5888, %v6212
    %v6214 = vpop.f32.mrb[0].mxu0
    %6215 = vdwg.mxu0
    %6216 = vst [vmem:[#allocation10] sm:$0xff] %v6058
    %6217 = vst [vmem:[#allocation10 + $0x8] sm:$0xff] %v6063
    %6218 = vst [vmem:[#allocation10 + $0x10] sm:$0xff] %v6068
    %6219 = vst [vmem:[#allocation10 + $0x18] sm:$0xff] %v6073
    %6220 = vst [vmem:[#allocation10 + $0x20] sm:$0xff] %v6078
    %6221 = vst [vmem:[#allocation10 + $0x28] sm:$0xff] %v6083
    %6222 = vst [vmem:[#allocation10 + $0x30] sm:$0xff] %v6088
    %6223 = vst [vmem:[#allocation10 + $0x38] sm:$0xff] %v6093
    %6224 = vst [vmem:[#allocation10 + $0x40] sm:$0xff] %v6098
    %6225 = vst [vmem:[#allocation10 + $0x48] sm:$0xff] %v6103
    %6226 = vst [vmem:[#allocation10 + $0x50] sm:$0xff] %v6108
    %6227 = vst [vmem:[#allocation10 + $0x58] sm:$0xff] %v6113
    %6228 = vst [vmem:[#allocation10 + $0x60] sm:$0xff] %v6118
    %6229 = vst [vmem:[#allocation10 + $0x68] sm:$0xff] %v6123
    %6230 = vst [vmem:[#allocation10 + $0x70] sm:$0xff] %v6128
    %6231 = vst [vmem:[#allocation10 + $0x78] sm:$0xff] %v6133
    %6232 = vst [vmem:[#allocation10 + $0x80] sm:$0xff] %v6138
    %6233 = vst [vmem:[#allocation10 + $0x88] sm:$0xff] %v6143
    %6234 = vst [vmem:[#allocation10 + $0x90] sm:$0xff] %v6148
    %6235 = vst [vmem:[#allocation10 + $0x98] sm:$0xff] %v6153
    %6236 = vst [vmem:[#allocation10 + $0xa0] sm:$0xff] %v6158
    %6237 = vst [vmem:[#allocation10 + $0xa8] sm:$0xff] %v6163
    %6238 = vst [vmem:[#allocation10 + $0xb0] sm:$0xff] %v6168
    %6239 = vst [vmem:[#allocation10 + $0xb8] sm:$0xff] %v6173
    %6240 = vst [vmem:[#allocation10 + $0xc0] sm:$0xff] %v6178
    %6241 = vst [vmem:[#allocation10 + $0xc8] sm:$0xff] %v6183
    %6242 = vst [vmem:[#allocation10 + $0xd0] sm:$0xff] %v6188
    %6243 = vst [vmem:[#allocation10 + $0xd8] sm:$0xff] %v6193
    %6244 = vst [vmem:[#allocation10 + $0xe0] sm:$0xff] %v6198
    %6245 = vst [vmem:[#allocation10 + $0xe8] sm:$0xff] %v6203
    %6246 = vst [vmem:[#allocation10 + $0xf0] sm:$0xff] %v6208
    %6247 = vst [vmem:[#allocation10 + $0xf8] sm:$0xff] %v6213
    // Predicated region
    $region46: #{tpu_custom_call.1} parent=1 // pred_check
      _
    $region47: #{tpu_custom_call.1} parent=1 // pred_check_branch
      %6249 = sbr.rel (0) target = $region49
    $region48: #{tpu_custom_call.1} parent=1 // pred_region
      %s6251 = ssub.s32 16384, 16384
      %6252 = vsyncadd [#allocation4], %s6251
      %s6253 = sshll.u32 [#allocation7], 4
      %s6254 = int_to_ptr.vmem [resolvable:$true] %s6253
      %6259 = dma.vmem_to_hbm [thread:$0]  %s6254, 16384, %s9, [#allocation4], 512, 512, 32
    $region49: #{tpu_custom_call.1} parent=1 // pred_fallthru
      _
    // Predicated region
    $region50: #{tpu_custom_call.1} parent=1 // pred_check
      _
    $region51: #{tpu_custom_call.1} parent=1 // pred_check_branch
      %6261 = sbr.rel (0) target = $region53
    $region52: #{tpu_custom_call.1} parent=1 // pred_region
      %s6263 = ssub.s32 16384, 16384
      %6264 = vsyncadd [#allocation9], %s6263
      %s6265 = sshll.u32 [#allocation8], 4
      %s6266 = int_to_ptr.vmem [resolvable:$true] %s6265
      %6271 = dma.vmem_to_hbm [thread:$0]  %s6266, 16384, %s10, [#allocation9], 512, 512, 32
    $region53: #{tpu_custom_call.1} parent=1 // pred_fallthru
      _
    // Predicated region
    $region54: #{tpu_custom_call.1} parent=1 // pred_check
      _
    $region55: #{tpu_custom_call.1} parent=1 // pred_check_branch
      %6273 = sbr.rel (0) target = $region57
    $region56: #{tpu_custom_call.1} parent=1 // pred_region
      %s6275 = ssub.s32 4096, 4096
      %6276 = vsyncadd [#allocation9], %s6275
      %s6277 = sshll.u32 [#allocation10], 4
      %s6278 = int_to_ptr.vmem [resolvable:$true] %s6277
      %6283 = dma.vmem_to_hbm [thread:$0]  %s6278, 4096, %s11, [#allocation9], 128, 128, 8
    $region57: #{tpu_custom_call.1} parent=1 // pred_fallthru
      _
    // Predicated region
    $region58: #{tpu_custom_call.1} parent=1 // pred_check
      _
    $region59: #{tpu_custom_call.1} parent=1 // pred_check_branch
      %6285 = sbr.rel (0) target = $region61
    $region60: #{tpu_custom_call.1} parent=1 // pred_region
      %6286 = dma.done [#allocation4], 16384
    $region61: #{tpu_custom_call.1} parent=1 // pred_fallthru
      _
    // Predicated region
    $region62: #{tpu_custom_call.1} parent=1 // pred_check
      _
    $region63: #{tpu_custom_call.1} parent=1 // pred_check_branch
      %6288 = sbr.rel (0) target = $region65
    $region64: #{tpu_custom_call.1} parent=1 // pred_region
      %6289 = dma.done [#allocation9], 16384
    $region65: #{tpu_custom_call.1} parent=1 // pred_fallthru
      _
    // Predicated region
    $region66: #{tpu_custom_call.1} parent=1 // pred_check
      _
    $region67: #{tpu_custom_call.1} parent=1 // pred_check_branch
      %6291 = sbr.rel (0) target = $region69
    $region68: #{tpu_custom_call.1} parent=1 // pred_region
      %6292 = dma.done [#allocation9], 4096
    $region69: #{tpu_custom_call.1} parent=1 // pred_fallthru
      _
    %6293 = vsyncpa [#allocation3], 1
    %6294 = vsyncpa [#allocation6], 1
    %6295 = vsyncpa [#allocation4], 1
    %6296 = vsyncpa [#allocation9], 1

</llo_original>
